<compile_context>
chip_gen: v6e
topology: v6e:2x2x1
jax: 0.10.0
libtpu: 0.0.40
codegen_flags: <defaults>
</compile_context>

<pallas_src>
import functools
import math

import jax
import jax.numpy as jnp
from jax import lax
from jax.experimental import pallas as pl
from jax.experimental.pallas import tpu as pltpu


# ----------------------------- helpers (traced inside the kernel) ------------------------

def _layernorm_lastdim(x, gamma=None, beta=None, eps=1e-5):
    mean = jnp.mean(x, axis=-1, keepdims=True)
    var = jnp.mean((x - mean) ** 2, axis=-1, keepdims=True)   # biased var, like PyTorch
    y = (x - mean) * lax.rsqrt(var + eps)
    if gamma is not None:
        y = y * gamma + beta
    return y


def _softmax_lastdim(x):
    x = x - jnp.max(x, axis=-1, keepdims=True)
    p = jnp.exp(x)
    return p * pl.reciprocal(jnp.sum(p, axis=-1, keepdims=True), approx=True)


# ----------------------------- fused DiscardModel kernel ---------------------------------

def discard_model_kernel(x_ref, w1_ref, b1_ref, w2_ref, b2_ref,
                         wqkvo_ref, wf1_ref, wf2_ref, vece_ref, bf1_ref,
                         wout_ref, bout_ref, o_ref, *, n_heads, n_layer):
    # ---- KoiKoiEncoderBlock front: conv1d(k=1) -> ReLU -> conv1d(k=1) -> LN over L ----
    x = x_ref[0]                                                              # (Cin, L)
    h = jnp.dot(w1_ref[...], x, preferred_element_type=jnp.float32) + b1_ref[...]   # (Fw, L)
    h = jnp.maximum(h, 0.0)
    y = jnp.dot(w2_ref[...], h, preferred_element_type=jnp.float32) + b2_ref[...]   # (E, L)
    y = _layernorm_lastdim(y)                   # F.layer_norm over L, no affine
    xe = y.T                                    # (L, E): seq-major, E on the lane axis

    E = xe.shape[1]
    Dh = E // n_heads

    # ---- nLayer post-norm TransformerEncoder layers, activations never leave the chip ----
    for i in range(n_layer):                    # static unroll (n_layer small & static)
        wqT = wqkvo_ref[4 * i + 0]              # (E, E)  (1/sqrt(Dh) folded in host-side)
        wkT = wqkvo_ref[4 * i + 1]
        wvT = wqkvo_ref[4 * i + 2]
        woT = wqkvo_ref[4 * i + 3]
        vec = vece_ref[i]                       # (9, E) bias / LN-affine slab
        bq, bk, bv = vec[0:1], vec[1:2], vec[2:3]      # bq carries the folded 1/sqrt(Dh)
        bo, g1, be1 = vec[3:4], vec[4:5], vec[5:6]
        bf2, g2, be2 = vec[6:7], vec[7:8], vec[8:9]
        wf1T = wf1_ref[i]                       # (E, Fw)
        wf2T = wf2_ref[i]                       # (Fw, E)
        bf1 = bf1_ref[i]                        # (1, Fw)

        # --- multi-head self-attention: heads batched on the leading axis ---
        q = jnp.dot(xe, wqT, preferred_element_type=jnp.float32) + bq        # (L, E), pre-scaled
        k = jnp.dot(xe, wkT, preferred_element_type=jnp.float32) + bk
        v = jnp.dot(xe, wvT, preferred_element_type=jnp.float32) + bv
        q3 = jnp.stack([q[:, hh * Dh:(hh + 1) * Dh] for hh in range(n_heads)])  # (H, L, Dh)
        k3 = jnp.stack([k[:, hh * Dh:(hh + 1) * Dh] for hh in range(n_heads)])
        v3 = jnp.stack([v[:, hh * Dh:(hh + 1) * Dh] for hh in range(n_heads)])
        s = jnp.einsum('hld,hmd->hlm', q3, k3,
                       preferred_element_type=jnp.float32)                    # (H, L, L)
        p = _softmax_lastdim(s)
        c3 = jnp.einsum('hlm,hmd->hld', p, v3,
                        preferred_element_type=jnp.float32)                   # (H, L, Dh)
        ctx = jnp.concatenate([c3[hh] for hh in range(n_heads)], axis=-1)     # (L, E)
        attn = jnp.dot(ctx, woT, preferred_element_type=jnp.float32) + bo     # single out-proj

        # TODO(synk): dropout is identity in eval mode; training-mode dropout not implemented.
        x1 = _layernorm_lastdim(xe + attn, gamma=g1, beta=be1)

        ff = jnp.maximum(
            jnp.dot(x1, wf1T, preferred_element_type=jnp.float32) + bf1, 0.0)
        ff = jnp.dot(ff, wf2T, preferred_element_type=jnp.float32) + bf2
        xe = _layernorm_lastdim(x1 + ff, gamma=g2, beta=be2)

    # ---- DiscardModel head: Conv1d(E, 1, 1) -> squeeze(1) -> softmax over L ----
    logits = lax.dot_general(wout_ref[...], xe, (((1,), (1,)), ((), ())),
                             preferred_element_type=jnp.float32) + bout_ref[...]   # (1, L)
    o_ref[0] = _softmax_lastdim(logits)


# ----------------------------- wrapper (one pallas_call, no inter-kernel glue) -----------

def discard_model_forward(x, params, *, n_heads, n_layer):
    N, Cin, L = x.shape
    weights = [params["w1"], params["b1"], params["w2"], params["b2"],
               params["w_qkvo"], params["w_ffn1"], params["w_ffn2"],
               params["vec_e"], params["b_f1"], params["w_out"], params["b_out"]]

    def full_spec(a):
        nd = a.ndim
        return pl.BlockSpec(a.shape, lambda n: (0,) * nd)

    kernel = functools.partial(discard_model_kernel, n_heads=n_heads, n_layer=n_layer)
    out = pl.pallas_call(
        kernel,
        out_shape=jax.ShapeDtypeStruct((N, 1, L), jnp.float32),
        grid=(N,),
        in_specs=[pl.BlockSpec((1, Cin, L), lambda n: (n, 0, 0))]
                 + [full_spec(w) for w in weights],
        out_specs=pl.BlockSpec((1, 1, L), lambda n: (n, 0, 0)),
        compiler_params=pltpu.CompilerParams(dimension_semantics=("parallel",)),
    )(x, *weights)
    return out.reshape(N, L)


# ----------------------------- deterministic parameter init ------------------------------

def init_params(key, n_input, n_emb, n_fw, n_heads, n_layer):
    E, Fw = n_emb, n_fw
    Dh = E // n_heads
    scale = 1.0 / math.sqrt(Dh)
    keys = jax.random.split(key, 6 + n_layer)

    def rnd(k, shape, s):
        return (s * jax.random.normal(k, shape)).astype(jnp.float32)

    params = {
        "w1": rnd(keys[0], (Fw, n_input), 1.0 / math.sqrt(n_input)),
        "b1": rnd(keys[1], (Fw, 1), 0.02),
        "w2": rnd(keys[2], (E, Fw), 1.0 / math.sqrt(Fw)),
        "b2": rnd(keys[3], (E, 1), 0.02),
        "w_out": rnd(keys[4], (1, E), 1.0 / math.sqrt(E)),
        "b_out": rnd(keys[5], (1, 1), 0.02),
    }

    qkvo, f1, f2, vece, bf1 = [], [], [], [], []
    for i in range(n_layer):
        lk = jax.random.split(keys[6 + i], 12)
        wqT = rnd(lk[0], (E, E), 1.0 / math.sqrt(E)) * scale   # 1/sqrt(Dh) folded in
        wkT = rnd(lk[1], (E, E), 1.0 / math.sqrt(E))
        wvT = rnd(lk[2], (E, E), 1.0 / math.sqrt(E))
        woT = rnd(lk[3], (E, E), 1.0 / math.sqrt(E))
        bq = rnd(lk[4], (E,), 0.02) * scale                    # scale folded into bq too
        bk = rnd(lk[5], (E,), 0.02)
        bv = rnd(lk[6], (E,), 0.02)
        bo = rnd(lk[7], (E,), 0.02)
        g1 = jnp.ones((E,), jnp.float32)
        be1 = jnp.zeros((E,), jnp.float32)
        wf1T = rnd(lk[8], (E, Fw), 1.0 / math.sqrt(E))
        b_f1 = rnd(lk[9], (Fw,), 0.02)
        wf2T = rnd(lk[10], (Fw, E), 1.0 / math.sqrt(Fw))
        bf2 = rnd(lk[11], (E,), 0.02)
        g2 = jnp.ones((E,), jnp.float32)
        be2 = jnp.zeros((E,), jnp.float32)

        qkvo.append(jnp.stack([wqT, wkT, wvT, woT]))                          # (4, E, E)
        f1.append(wf1T)
        f2.append(wf2T)
        vece.append(jnp.stack([bq, bk, bv, bo, g1, be1, bf2, g2, be2]))       # (9, E)
        bf1.append(b_f1.reshape(1, Fw))

    params["w_qkvo"] = jnp.concatenate(qkvo, axis=0)   # (n_layer*4, E, E)
    params["w_ffn1"] = jnp.stack(f1)                   # (n_layer, E, Fw)
    params["w_ffn2"] = jnp.stack(f2)                   # (n_layer, Fw, E)
    params["vec_e"] = jnp.stack(vece)                  # (n_layer, 9, E)
    params["b_f1"] = jnp.stack(bf1)                    # (n_layer, 1, Fw)
    return params


# ----------------------------- main -------------------------------------------------------

if __name__ == "__main__":
    # small shapes consistent with the module: nInput=16, nEmb=32, nFw=64, nAttnHead=4, nLayer=2
    N, n_input, L = 2, 16, 8
    n_emb, n_fw, n_heads, n_layer = 32, 64, 4, 2

    key = jax.random.PRNGKey(0)
    kx, kp = jax.random.split(key)
    x = jax.random.normal(kx, (N, n_input, L), dtype=jnp.float32)
    params = init_params(kp, n_input, n_emb, n_fw, n_heads, n_layer)

    out = discard_model_forward(x, params, n_heads=n_heads, n_layer=n_layer)
    out = jax.block_until_ready(out)
    assert out.shape == (N, L), out.shape
    assert bool(jnp.all(jnp.isfinite(out)))
    # softmax rows should sum to ~1 (loose tolerance: approx reciprocal on the EUP)
    assert bool(jnp.all(jnp.abs(jnp.sum(out, axis=1) - 1.0) < 1e-2))
    print("KERNEL_OK")
</pallas_src>

<mosaic_0001>
module attributes {stable_mosaic.version = 11 : i64} {
  func.func @discard_model_kernel(%arg0: i32, %arg1: memref<1x16x8xf32, #tpu.memory_space<vmem>>, %arg2: memref<64x16xf32, #tpu.memory_space<vmem>>, %arg3: memref<64x1xf32, #tpu.memory_space<vmem>>, %arg4: memref<32x64xf32, #tpu.memory_space<vmem>>, %arg5: memref<32x1xf32, #tpu.memory_space<vmem>>, %arg6: memref<8x32x32xf32, #tpu.memory_space<vmem>>, %arg7: memref<2x32x64xf32, #tpu.memory_space<vmem>>, %arg8: memref<2x64x32xf32, #tpu.memory_space<vmem>>, %arg9: memref<2x9x32xf32, #tpu.memory_space<vmem>>, %arg10: memref<2x1x64xf32, #tpu.memory_space<vmem>>, %arg11: memref<1x32xf32, #tpu.memory_space<vmem>>, %arg12: memref<1x1xf32, #tpu.memory_space<vmem>>, %arg13: memref<1x1x8xf32, #tpu.memory_space<vmem>>) attributes {dimension_semantics = [#tpu.dimension_semantics<parallel>], iteration_bounds = array<i64: 2>, scalar_prefetch = 0 : i64, scratch_operands = 0 : i64, tpu.core_type = #tpu.core_type<tc>, window_params = [{transform_indices = @transform_0, window_bounds = array<i64: 1, 16, 8>}, {pipeline_mode = #tpu.pipeline_mode<synchronous>, transform_indices = @transform_1, window_bounds = array<i64: 64, 16>}, {pipeline_mode = #tpu.pipeline_mode<synchronous>, transform_indices = @transform_2, window_bounds = array<i64: 64, 1>}, {pipeline_mode = #tpu.pipeline_mode<synchronous>, transform_indices = @transform_3, window_bounds = array<i64: 32, 64>}, {pipeline_mode = #tpu.pipeline_mode<synchronous>, transform_indices = @transform_4, window_bounds = array<i64: 32, 1>}, {pipeline_mode = #tpu.pipeline_mode<synchronous>, transform_indices = @transform_5, window_bounds = array<i64: 8, 32, 32>}, {pipeline_mode = #tpu.pipeline_mode<synchronous>, transform_indices = @transform_6, window_bounds = array<i64: 2, 32, 64>}, {pipeline_mode = #tpu.pipeline_mode<synchronous>, transform_indices = @transform_7, window_bounds = array<i64: 2, 64, 32>}, {pipeline_mode = #tpu.pipeline_mode<synchronous>, transform_indices = @transform_8, window_bounds = array<i64: 2, 9, 32>}, {pipeline_mode = #tpu.pipeline_mode<synchronous>, transform_indices = @transform_9, window_bounds = array<i64: 2, 1, 64>}, {pipeline_mode = #tpu.pipeline_mode<synchronous>, transform_indices = @transform_10, window_bounds = array<i64: 1, 32>}, {pipeline_mode = #tpu.pipeline_mode<synchronous>, transform_indices = @transform_11, window_bounds = array<i64: 1, 1>}, {transform_indices = @transform_12, window_bounds = array<i64: 1, 1, 8>}]} {
    %c0 = arith.constant 0 : index
    %c0_0 = arith.constant 0 : index
    %c0_1 = arith.constant 0 : index
    %0 = vector.load %arg1[%c0, %c0_0, %c0_1] : memref<1x16x8xf32, #tpu.memory_space<vmem>>, vector<1x16x8xf32>
    %1 = vector.shape_cast %0 : vector<1x16x8xf32> to vector<16x8xf32>
    %c0_2 = arith.constant 0 : index
    %c0_3 = arith.constant 0 : index
    %2 = vector.load %arg2[%c0_2, %c0_3] : memref<64x16xf32, #tpu.memory_space<vmem>>, vector<64x16xf32>
    %cst = arith.constant dense<0.000000e+00> : vector<64x8xf32>
    %3 = tpu.matmul %2, %1, %cst {dimension_numbers = #tpu.dot_dimension_numbers<[1], [0], [0], [1], [0, 0, 1, 1], [], []>} : vector<64x16xf32>, vector<16x8xf32>, vector<64x8xf32> -> vector<64x8xf32>
    %c0_4 = arith.constant 0 : index
    %c0_5 = arith.constant 0 : index
    %4 = vector.load %arg3[%c0_4, %c0_5] : memref<64x1xf32, #tpu.memory_space<vmem>>, vector<64x1xf32>
    %5 = vector.broadcast %4 : vector<64x1xf32> to vector<64x8xf32>
    %6 = arith.addf %3, %5 : vector<64x8xf32>
    %cst_6 = arith.constant 0.000000e+00 : f32
    %7 = vector.broadcast %cst_6 : f32 to vector<64x8xf32>
    %8 = arith.maximumf %6, %7 : vector<64x8xf32>
    %c0_7 = arith.constant 0 : index
    %c0_8 = arith.constant 0 : index
    %9 = vector.load %arg4[%c0_7, %c0_8] : memref<32x64xf32, #tpu.memory_space<vmem>>, vector<32x64xf32>
    %cst_9 = arith.constant dense<0.000000e+00> : vector<32x8xf32>
    %10 = tpu.matmul %9, %8, %cst_9 {dimension_numbers = #tpu.dot_dimension_numbers<[1], [0], [0], [1], [0, 0, 1, 1], [], []>} : vector<32x64xf32>, vector<64x8xf32>, vector<32x8xf32> -> vector<32x8xf32>
    %c0_10 = arith.constant 0 : index
    %c0_11 = arith.constant 0 : index
    %11 = vector.load %arg5[%c0_10, %c0_11] : memref<32x1xf32, #tpu.memory_space<vmem>>, vector<32x1xf32>
    %12 = vector.broadcast %11 : vector<32x1xf32> to vector<32x8xf32>
    %13 = arith.addf %10, %12 : vector<32x8xf32>
    %cst_12 = arith.constant dense<0.000000e+00> : vector<32xf32>
    %14 = vector.multi_reduction <add>, %13, %cst_12 [1] : vector<32x8xf32> to vector<32xf32>
    %15 = vector.shape_cast %14 : vector<32xf32> to vector<32x1xf32>
    %cst_13 = arith.constant 8.000000e+00 : f32
    %16 = vector.broadcast %cst_13 : f32 to vector<32x1xf32>
    %17 = arith.divf %15, %16 : vector<32x1xf32>
    %18 = vector.broadcast %17 : vector<32x1xf32> to vector<32x8xf32>
    %19 = arith.subf %13, %18 : vector<32x8xf32>
    %20 = arith.mulf %19, %19 : vector<32x8xf32>
    %cst_14 = arith.constant dense<0.000000e+00> : vector<32xf32>
    %21 = vector.multi_reduction <add>, %20, %cst_14 [1] : vector<32x8xf32> to vector<32xf32>
    %22 = vector.shape_cast %21 : vector<32xf32> to vector<32x1xf32>
    %cst_15 = arith.constant 8.000000e+00 : f32
    %23 = vector.broadcast %cst_15 : f32 to vector<32x1xf32>
    %24 = arith.divf %22, %23 : vector<32x1xf32>
    %25 = vector.broadcast %17 : vector<32x1xf32> to vector<32x8xf32>
    %26 = arith.subf %13, %25 : vector<32x8xf32>
    %cst_16 = arith.constant 9.99999974E-6 : f32
    %27 = vector.broadcast %cst_16 : f32 to vector<32x1xf32>
    %28 = arith.addf %24, %27 : vector<32x1xf32>
    %29 = math.rsqrt %28 : vector<32x1xf32>
    %30 = vector.broadcast %29 : vector<32x1xf32> to vector<32x8xf32>
    %31 = arith.mulf %26, %30 : vector<32x8xf32>
    %32 = tpu.transpose %31, [1, 0] : vector<32x8xf32> -> vector<8x32xf32>
    %c0_17 = arith.constant 0 : index
    %c0_18 = arith.constant 0 : index
    %c0_19 = arith.constant 0 : index
    %33 = vector.load %arg6[%c0_17, %c0_18, %c0_19] : memref<8x32x32xf32, #tpu.memory_space<vmem>>, vector<1x32x32xf32>
    %34 = vector.shape_cast %33 : vector<1x32x32xf32> to vector<32x32xf32>
    %c1 = arith.constant 1 : index
    %c0_20 = arith.constant 0 : index
    %c0_21 = arith.constant 0 : index
    %35 = vector.load %arg6[%c1, %c0_20, %c0_21] : memref<8x32x32xf32, #tpu.memory_space<vmem>>, vector<1x32x32xf32>
    %36 = vector.shape_cast %35 : vector<1x32x32xf32> to vector<32x32xf32>
    %c2 = arith.constant 2 : index
    %c0_22 = arith.constant 0 : index
    %c0_23 = arith.constant 0 : index
    %37 = vector.load %arg6[%c2, %c0_22, %c0_23] : memref<8x32x32xf32, #tpu.memory_space<vmem>>, vector<1x32x32xf32>
    %38 = vector.shape_cast %37 : vector<1x32x32xf32> to vector<32x32xf32>
    %c3 = arith.constant 3 : index
    %c0_24 = arith.constant 0 : index
    %c0_25 = arith.constant 0 : index
    %39 = vector.load %arg6[%c3, %c0_24, %c0_25] : memref<8x32x32xf32, #tpu.memory_space<vmem>>, vector<1x32x32xf32>
    %40 = vector.shape_cast %39 : vector<1x32x32xf32> to vector<32x32xf32>
    %c0_26 = arith.constant 0 : index
    %c0_27 = arith.constant 0 : index
    %c0_28 = arith.constant 0 : index
    %41 = vector.load %arg9[%c0_26, %c0_27, %c0_28] : memref<2x9x32xf32, #tpu.memory_space<vmem>>, vector<1x9x32xf32>
    %42 = vector.shape_cast %41 : vector<1x9x32xf32> to vector<9x32xf32>
    %43 = vector.extract_strided_slice %42 {offsets = [0, 0], sizes = [1, 32], strides = [1, 1]} : vector<9x32xf32> to vector<1x32xf32>
    %44 = vector.extract_strided_slice %42 {offsets = [1, 0], sizes = [1, 32], strides = [1, 1]} : vector<9x32xf32> to vector<1x32xf32>
    %45 = vector.extract_strided_slice %42 {offsets = [2, 0], sizes = [1, 32], strides = [1, 1]} : vector<9x32xf32> to vector<1x32xf32>
    %46 = vector.extract_strided_slice %42 {offsets = [3, 0], sizes = [1, 32], strides = [1, 1]} : vector<9x32xf32> to vector<1x32xf32>
    %47 = vector.extract_strided_slice %42 {offsets = [4, 0], sizes = [1, 32], strides = [1, 1]} : vector<9x32xf32> to vector<1x32xf32>
    %48 = vector.extract_strided_slice %42 {offsets = [5, 0], sizes = [1, 32], strides = [1, 1]} : vector<9x32xf32> to vector<1x32xf32>
    %49 = vector.extract_strided_slice %42 {offsets = [6, 0], sizes = [1, 32], strides = [1, 1]} : vector<9x32xf32> to vector<1x32xf32>
    %50 = vector.extract_strided_slice %42 {offsets = [7, 0], sizes = [1, 32], strides = [1, 1]} : vector<9x32xf32> to vector<1x32xf32>
    %51 = vector.extract_strided_slice %42 {offsets = [8, 0], sizes = [1, 32], strides = [1, 1]} : vector<9x32xf32> to vector<1x32xf32>
    %c0_29 = arith.constant 0 : index
    %c0_30 = arith.constant 0 : index
    %c0_31 = arith.constant 0 : index
    %52 = vector.load %arg7[%c0_29, %c0_30, %c0_31] : memref<2x32x64xf32, #tpu.memory_space<vmem>>, vector<1x32x64xf32>
    %53 = vector.shape_cast %52 : vector<1x32x64xf32> to vector<32x64xf32>
    %c0_32 = arith.constant 0 : index
    %c0_33 = arith.constant 0 : index
    %c0_34 = arith.constant 0 : index
    %54 = vector.load %arg8[%c0_32, %c0_33, %c0_34] : memref<2x64x32xf32, #tpu.memory_space<vmem>>, vector<1x64x32xf32>
    %55 = vector.shape_cast %54 : vector<1x64x32xf32> to vector<64x32xf32>
    %c0_35 = arith.constant 0 : index
    %c0_36 = arith.constant 0 : index
    %c0_37 = arith.constant 0 : index
    %56 = vector.load %arg10[%c0_35, %c0_36, %c0_37] : memref<2x1x64xf32, #tpu.memory_space<vmem>>, vector<1x1x64xf32>
    %57 = vector.shape_cast %56 : vector<1x1x64xf32> to vector<1x64xf32>
    %cst_38 = arith.constant dense<0.000000e+00> : vector<8x32xf32>
    %58 = tpu.matmul %32, %34, %cst_38 {dimension_numbers = #tpu.dot_dimension_numbers<[1], [0], [0], [1], [0, 0, 1, 1], [], []>} : vector<8x32xf32>, vector<32x32xf32>, vector<8x32xf32> -> vector<8x32xf32>
    %59 = vector.broadcast %43 : vector<1x32xf32> to vector<8x32xf32>
    %60 = arith.addf %58, %59 : vector<8x32xf32>
    %cst_39 = arith.constant dense<0.000000e+00> : vector<8x32xf32>
    %61 = tpu.matmul %32, %36, %cst_39 {dimension_numbers = #tpu.dot_dimension_numbers<[1], [0], [0], [1], [0, 0, 1, 1], [], []>} : vector<8x32xf32>, vector<32x32xf32>, vector<8x32xf32> -> vector<8x32xf32>
    %62 = vector.broadcast %44 : vector<1x32xf32> to vector<8x32xf32>
    %63 = arith.addf %61, %62 : vector<8x32xf32>
    %cst_40 = arith.constant dense<0.000000e+00> : vector<8x32xf32>
    %64 = tpu.matmul %32, %38, %cst_40 {dimension_numbers = #tpu.dot_dimension_numbers<[1], [0], [0], [1], [0, 0, 1, 1], [], []>} : vector<8x32xf32>, vector<32x32xf32>, vector<8x32xf32> -> vector<8x32xf32>
    %65 = vector.broadcast %45 : vector<1x32xf32> to vector<8x32xf32>
    %66 = arith.addf %64, %65 : vector<8x32xf32>
    %67 = vector.extract_strided_slice %60 {offsets = [0, 0], sizes = [8, 8], strides = [1, 1]} : vector<8x32xf32> to vector<8x8xf32>
    %68 = vector.extract_strided_slice %60 {offsets = [0, 8], sizes = [8, 8], strides = [1, 1]} : vector<8x32xf32> to vector<8x8xf32>
    %69 = vector.extract_strided_slice %60 {offsets = [0, 16], sizes = [8, 8], strides = [1, 1]} : vector<8x32xf32> to vector<8x8xf32>
    %70 = vector.extract_strided_slice %60 {offsets = [0, 24], sizes = [8, 8], strides = [1, 1]} : vector<8x32xf32> to vector<8x8xf32>
    %71 = vector.shape_cast %67 : vector<8x8xf32> to vector<1x8x8xf32>
    %72 = vector.shape_cast %68 : vector<8x8xf32> to vector<1x8x8xf32>
    %73 = vector.shape_cast %69 : vector<8x8xf32> to vector<1x8x8xf32>
    %74 = vector.shape_cast %70 : vector<8x8xf32> to vector<1x8x8xf32>
    %75 = tpu.concatenate %71, %72, %73, %74 in 0 : vector<1x8x8xf32>, vector<1x8x8xf32>, vector<1x8x8xf32>, vector<1x8x8xf32> -> vector<4x8x8xf32>
    %76 = vector.extract_strided_slice %63 {offsets = [0, 0], sizes = [8, 8], strides = [1, 1]} : vector<8x32xf32> to vector<8x8xf32>
    %77 = vector.extract_strided_slice %63 {offsets = [0, 8], sizes = [8, 8], strides = [1, 1]} : vector<8x32xf32> to vector<8x8xf32>
    %78 = vector.extract_strided_slice %63 {offsets = [0, 16], sizes = [8, 8], strides = [1, 1]} : vector<8x32xf32> to vector<8x8xf32>
    %79 = vector.extract_strided_slice %63 {offsets = [0, 24], sizes = [8, 8], strides = [1, 1]} : vector<8x32xf32> to vector<8x8xf32>
    %80 = vector.shape_cast %76 : vector<8x8xf32> to vector<1x8x8xf32>
    %81 = vector.shape_cast %77 : vector<8x8xf32> to vector<1x8x8xf32>
    %82 = vector.shape_cast %78 : vector<8x8xf32> to vector<1x8x8xf32>
    %83 = vector.shape_cast %79 : vector<8x8xf32> to vector<1x8x8xf32>
    %84 = tpu.concatenate %80, %81, %82, %83 in 0 : vector<1x8x8xf32>, vector<1x8x8xf32>, vector<1x8x8xf32>, vector<1x8x8xf32> -> vector<4x8x8xf32>
    %85 = vector.extract_strided_slice %66 {offsets = [0, 0], sizes = [8, 8], strides = [1, 1]} : vector<8x32xf32> to vector<8x8xf32>
    %86 = vector.extract_strided_slice %66 {offsets = [0, 8], sizes = [8, 8], strides = [1, 1]} : vector<8x32xf32> to vector<8x8xf32>
    %87 = vector.extract_strided_slice %66 {offsets = [0, 16], sizes = [8, 8], strides = [1, 1]} : vector<8x32xf32> to vector<8x8xf32>
    %88 = vector.extract_strided_slice %66 {offsets = [0, 24], sizes = [8, 8], strides = [1, 1]} : vector<8x32xf32> to vector<8x8xf32>
    %89 = vector.shape_cast %85 : vector<8x8xf32> to vector<1x8x8xf32>
    %90 = vector.shape_cast %86 : vector<8x8xf32> to vector<1x8x8xf32>
    %91 = vector.shape_cast %87 : vector<8x8xf32> to vector<1x8x8xf32>
    %92 = vector.shape_cast %88 : vector<8x8xf32> to vector<1x8x8xf32>
    %93 = tpu.concatenate %89, %90, %91, %92 in 0 : vector<1x8x8xf32>, vector<1x8x8xf32>, vector<1x8x8xf32>, vector<1x8x8xf32> -> vector<4x8x8xf32>
    "tpu.trace_start"() <{level = 10 : i32, message = "hld,hmd->hlm"}> : () -> ()
    %cst_41 = arith.constant dense<0.000000e+00> : vector<4x8x8xf32>
    %94 = tpu.matmul %75, %84, %cst_41 {dimension_numbers = #tpu.dot_dimension_numbers<[2], [2], [1], [1], [0, 0, 0, 1, 1, 1], [0], [0]>} : vector<4x8x8xf32>, vector<4x8x8xf32>, vector<4x8x8xf32> -> vector<4x8x8xf32>
    "tpu.trace_stop"() : () -> ()
    %cst_42 = arith.constant dense<0xFF800000> : vector<4x8xf32>
    %95 = vector.multi_reduction <maximumf>, %94, %cst_42 [2] : vector<4x8x8xf32> to vector<4x8xf32>
    %96 = vector.shape_cast %95 : vector<4x8xf32> to vector<4x8x1xf32>
    %97 = vector.broadcast %96 : vector<4x8x1xf32> to vector<4x8x8xf32>
    %98 = arith.subf %94, %97 : vector<4x8x8xf32>
    %99 = math.exp %98 : vector<4x8x8xf32>
    %cst_43 = arith.constant dense<0.000000e+00> : vector<4x8xf32>
    %100 = vector.multi_reduction <add>, %99, %cst_43 [2] : vector<4x8x8xf32> to vector<4x8xf32>
    %101 = vector.shape_cast %100 : vector<4x8xf32> to vector<4x8x1xf32>
    %102 = tpu.reciprocal %101 {approx = true} : vector<4x8x1xf32> -> vector<4x8x1xf32>
    %103 = vector.broadcast %102 : vector<4x8x1xf32> to vector<4x8x8xf32>
    %104 = arith.mulf %99, %103 : vector<4x8x8xf32>
    "tpu.trace_start"() <{level = 10 : i32, message = "hlm,hmd->hld"}> : () -> ()
    %cst_44 = arith.constant dense<0.000000e+00> : vector<4x8x8xf32>
    %105 = tpu.matmul %104, %93, %cst_44 {dimension_numbers = #tpu.dot_dimension_numbers<[2], [1], [1], [2], [0, 0, 0, 1, 1, 2], [0], [0]>} : vector<4x8x8xf32>, vector<4x8x8xf32>, vector<4x8x8xf32> -> vector<4x8x8xf32>
    "tpu.trace_stop"() : () -> ()
    %106 = vector.extract_strided_slice %105 {offsets = [0, 0, 0], sizes = [1, 8, 8], strides = [1, 1, 1]} : vector<4x8x8xf32> to vector<1x8x8xf32>
    %107 = vector.shape_cast %106 : vector<1x8x8xf32> to vector<8x8xf32>
    %108 = vector.extract_strided_slice %105 {offsets = [1, 0, 0], sizes = [1, 8, 8], strides = [1, 1, 1]} : vector<4x8x8xf32> to vector<1x8x8xf32>
    %109 = vector.shape_cast %108 : vector<1x8x8xf32> to vector<8x8xf32>
    %110 = vector.extract_strided_slice %105 {offsets = [2, 0, 0], sizes = [1, 8, 8], strides = [1, 1, 1]} : vector<4x8x8xf32> to vector<1x8x8xf32>
    %111 = vector.shape_cast %110 : vector<1x8x8xf32> to vector<8x8xf32>
    %112 = vector.extract_strided_slice %105 {offsets = [3, 0, 0], sizes = [1, 8, 8], strides = [1, 1, 1]} : vector<4x8x8xf32> to vector<1x8x8xf32>
    %113 = vector.shape_cast %112 : vector<1x8x8xf32> to vector<8x8xf32>
    %114 = tpu.concatenate %107, %109, %111, %113 in 1 : vector<8x8xf32>, vector<8x8xf32>, vector<8x8xf32>, vector<8x8xf32> -> vector<8x32xf32>
    %cst_45 = arith.constant dense<0.000000e+00> : vector<8x32xf32>
    %115 = tpu.matmul %114, %40, %cst_45 {dimension_numbers = #tpu.dot_dimension_numbers<[1], [0], [0], [1], [0, 0, 1, 1], [], []>} : vector<8x32xf32>, vector<32x32xf32>, vector<8x32xf32> -> vector<8x32xf32>
    %116 = vector.broadcast %46 : vector<1x32xf32> to vector<8x32xf32>
    %117 = arith.addf %115, %116 : vector<8x32xf32>
    %118 = arith.addf %32, %117 : vector<8x32xf32>
    %cst_46 = arith.constant dense<0.000000e+00> : vector<8xf32>
    %119 = vector.multi_reduction <add>, %118, %cst_46 [1] : vector<8x32xf32> to vector<8xf32>
    %120 = vector.shape_cast %119 : vector<8xf32> to vector<8x1xf32>
    %cst_47 = arith.constant 3.200000e+01 : f32
    %121 = vector.broadcast %cst_47 : f32 to vector<8x1xf32>
    %122 = arith.divf %120, %121 : vector<8x1xf32>
    %123 = vector.broadcast %122 : vector<8x1xf32> to vector<8x32xf32>
    %124 = arith.subf %118, %123 : vector<8x32xf32>
    %125 = arith.mulf %124, %124 : vector<8x32xf32>
    %cst_48 = arith.constant dense<0.000000e+00> : vector<8xf32>
    %126 = vector.multi_reduction <add>, %125, %cst_48 [1] : vector<8x32xf32> to vector<8xf32>
    %127 = vector.shape_cast %126 : vector<8xf32> to vector<8x1xf32>
    %cst_49 = arith.constant 3.200000e+01 : f32
    %128 = vector.broadcast %cst_49 : f32 to vector<8x1xf32>
    %129 = arith.divf %127, %128 : vector<8x1xf32>
    %130 = vector.broadcast %122 : vector<8x1xf32> to vector<8x32xf32>
    %131 = arith.subf %118, %130 : vector<8x32xf32>
    %cst_50 = arith.constant 9.99999974E-6 : f32
    %132 = vector.broadcast %cst_50 : f32 to vector<8x1xf32>
    %133 = arith.addf %129, %132 : vector<8x1xf32>
    %134 = math.rsqrt %133 : vector<8x1xf32>
    %135 = vector.broadcast %134 : vector<8x1xf32> to vector<8x32xf32>
    %136 = arith.mulf %131, %135 : vector<8x32xf32>
    %137 = vector.broadcast %47 : vector<1x32xf32> to vector<8x32xf32>
    %138 = arith.mulf %136, %137 : vector<8x32xf32>
    %139 = vector.broadcast %48 : vector<1x32xf32> to vector<8x32xf32>
    %140 = arith.addf %138, %139 : vector<8x32xf32>
    %cst_51 = arith.constant dense<0.000000e+00> : vector<8x64xf32>
    %141 = tpu.matmul %140, %53, %cst_51 {dimension_numbers = #tpu.dot_dimension_numbers<[1], [0], [0], [1], [0, 0, 1, 1], [], []>} : vector<8x32xf32>, vector<32x64xf32>, vector<8x64xf32> -> vector<8x64xf32>
    %142 = vector.broadcast %57 : vector<1x64xf32> to vector<8x64xf32>
    %143 = arith.addf %141, %142 : vector<8x64xf32>
    %cst_52 = arith.constant 0.000000e+00 : f32
    %144 = vector.broadcast %cst_52 : f32 to vector<8x64xf32>
    %145 = arith.maximumf %143, %144 : vector<8x64xf32>
    %cst_53 = arith.constant dense<0.000000e+00> : vector<8x32xf32>
    %146 = tpu.matmul %145, %55, %cst_53 {dimension_numbers = #tpu.dot_dimension_numbers<[1], [0], [0], [1], [0, 0, 1, 1], [], []>} : vector<8x64xf32>, vector<64x32xf32>, vector<8x32xf32> -> vector<8x32xf32>
    %147 = vector.broadcast %49 : vector<1x32xf32> to vector<8x32xf32>
    %148 = arith.addf %146, %147 : vector<8x32xf32>
    %149 = arith.addf %140, %148 : vector<8x32xf32>
    %cst_54 = arith.constant dense<0.000000e+00> : vector<8xf32>
    %150 = vector.multi_reduction <add>, %149, %cst_54 [1] : vector<8x32xf32> to vector<8xf32>
    %151 = vector.shape_cast %150 : vector<8xf32> to vector<8x1xf32>
    %cst_55 = arith.constant 3.200000e+01 : f32
    %152 = vector.broadcast %cst_55 : f32 to vector<8x1xf32>
    %153 = arith.divf %151, %152 : vector<8x1xf32>
    %154 = vector.broadcast %153 : vector<8x1xf32> to vector<8x32xf32>
    %155 = arith.subf %149, %154 : vector<8x32xf32>
    %156 = arith.mulf %155, %155 : vector<8x32xf32>
    %cst_56 = arith.constant dense<0.000000e+00> : vector<8xf32>
    %157 = vector.multi_reduction <add>, %156, %cst_56 [1] : vector<8x32xf32> to vector<8xf32>
    %158 = vector.shape_cast %157 : vector<8xf32> to vector<8x1xf32>
    %cst_57 = arith.constant 3.200000e+01 : f32
    %159 = vector.broadcast %cst_57 : f32 to vector<8x1xf32>
    %160 = arith.divf %158, %159 : vector<8x1xf32>
    %161 = vector.broadcast %153 : vector<8x1xf32> to vector<8x32xf32>
    %162 = arith.subf %149, %161 : vector<8x32xf32>
    %cst_58 = arith.constant 9.99999974E-6 : f32
    %163 = vector.broadcast %cst_58 : f32 to vector<8x1xf32>
    %164 = arith.addf %160, %163 : vector<8x1xf32>
    %165 = math.rsqrt %164 : vector<8x1xf32>
    %166 = vector.broadcast %165 : vector<8x1xf32> to vector<8x32xf32>
    %167 = arith.mulf %162, %166 : vector<8x32xf32>
    %168 = vector.broadcast %50 : vector<1x32xf32> to vector<8x32xf32>
    %169 = arith.mulf %167, %168 : vector<8x32xf32>
    %170 = vector.broadcast %51 : vector<1x32xf32> to vector<8x32xf32>
    %171 = arith.addf %169, %170 : vector<8x32xf32>
    %c4 = arith.constant 4 : index
    %c0_59 = arith.constant 0 : index
    %c0_60 = arith.constant 0 : index
    %172 = vector.load %arg6[%c4, %c0_59, %c0_60] : memref<8x32x32xf32, #tpu.memory_space<vmem>>, vector<1x32x32xf32>
    %173 = vector.shape_cast %172 : vector<1x32x32xf32> to vector<32x32xf32>
    %c5 = arith.constant 5 : index
    %c0_61 = arith.constant 0 : index
    %c0_62 = arith.constant 0 : index
    %174 = vector.load %arg6[%c5, %c0_61, %c0_62] : memref<8x32x32xf32, #tpu.memory_space<vmem>>, vector<1x32x32xf32>
    %175 = vector.shape_cast %174 : vector<1x32x32xf32> to vector<32x32xf32>
    %c6 = arith.constant 6 : index
    %c0_63 = arith.constant 0 : index
    %c0_64 = arith.constant 0 : index
    %176 = vector.load %arg6[%c6, %c0_63, %c0_64] : memref<8x32x32xf32, #tpu.memory_space<vmem>>, vector<1x32x32xf32>
    %177 = vector.shape_cast %176 : vector<1x32x32xf32> to vector<32x32xf32>
    %c7 = arith.constant 7 : index
    %c0_65 = arith.constant 0 : index
    %c0_66 = arith.constant 0 : index
    %178 = vector.load %arg6[%c7, %c0_65, %c0_66] : memref<8x32x32xf32, #tpu.memory_space<vmem>>, vector<1x32x32xf32>
    %179 = vector.shape_cast %178 : vector<1x32x32xf32> to vector<32x32xf32>
    %c1_67 = arith.constant 1 : index
    %c0_68 = arith.constant 0 : index
    %c0_69 = arith.constant 0 : index
    %180 = vector.load %arg9[%c1_67, %c0_68, %c0_69] : memref<2x9x32xf32, #tpu.memory_space<vmem>>, vector<1x9x32xf32>
    %181 = vector.shape_cast %180 : vector<1x9x32xf32> to vector<9x32xf32>
    %182 = vector.extract_strided_slice %181 {offsets = [0, 0], sizes = [1, 32], strides = [1, 1]} : vector<9x32xf32> to vector<1x32xf32>
    %183 = vector.extract_strided_slice %181 {offsets = [1, 0], sizes = [1, 32], strides = [1, 1]} : vector<9x32xf32> to vector<1x32xf32>
    %184 = vector.extract_strided_slice %181 {offsets = [2, 0], sizes = [1, 32], strides = [1, 1]} : vector<9x32xf32> to vector<1x32xf32>
    %185 = vector.extract_strided_slice %181 {offsets = [3, 0], sizes = [1, 32], strides = [1, 1]} : vector<9x32xf32> to vector<1x32xf32>
    %186 = vector.extract_strided_slice %181 {offsets = [4, 0], sizes = [1, 32], strides = [1, 1]} : vector<9x32xf32> to vector<1x32xf32>
    %187 = vector.extract_strided_slice %181 {offsets = [5, 0], sizes = [1, 32], strides = [1, 1]} : vector<9x32xf32> to vector<1x32xf32>
    %188 = vector.extract_strided_slice %181 {offsets = [6, 0], sizes = [1, 32], strides = [1, 1]} : vector<9x32xf32> to vector<1x32xf32>
    %189 = vector.extract_strided_slice %181 {offsets = [7, 0], sizes = [1, 32], strides = [1, 1]} : vector<9x32xf32> to vector<1x32xf32>
    %190 = vector.extract_strided_slice %181 {offsets = [8, 0], sizes = [1, 32], strides = [1, 1]} : vector<9x32xf32> to vector<1x32xf32>
    %c1_70 = arith.constant 1 : index
    %c0_71 = arith.constant 0 : index
    %c0_72 = arith.constant 0 : index
    %191 = vector.load %arg7[%c1_70, %c0_71, %c0_72] : memref<2x32x64xf32, #tpu.memory_space<vmem>>, vector<1x32x64xf32>
    %192 = vector.shape_cast %191 : vector<1x32x64xf32> to vector<32x64xf32>
    %c1_73 = arith.constant 1 : index
    %c0_74 = arith.constant 0 : index
    %c0_75 = arith.constant 0 : index
    %193 = vector.load %arg8[%c1_73, %c0_74, %c0_75] : memref<2x64x32xf32, #tpu.memory_space<vmem>>, vector<1x64x32xf32>
    %194 = vector.shape_cast %193 : vector<1x64x32xf32> to vector<64x32xf32>
    %c1_76 = arith.constant 1 : index
    %c0_77 = arith.constant 0 : index
    %c0_78 = arith.constant 0 : index
    %195 = vector.load %arg10[%c1_76, %c0_77, %c0_78] : memref<2x1x64xf32, #tpu.memory_space<vmem>>, vector<1x1x64xf32>
    %196 = vector.shape_cast %195 : vector<1x1x64xf32> to vector<1x64xf32>
    %cst_79 = arith.constant dense<0.000000e+00> : vector<8x32xf32>
    %197 = tpu.matmul %171, %173, %cst_79 {dimension_numbers = #tpu.dot_dimension_numbers<[1], [0], [0], [1], [0, 0, 1, 1], [], []>} : vector<8x32xf32>, vector<32x32xf32>, vector<8x32xf32> -> vector<8x32xf32>
    %198 = vector.broadcast %182 : vector<1x32xf32> to vector<8x32xf32>
    %199 = arith.addf %197, %198 : vector<8x32xf32>
    %cst_80 = arith.constant dense<0.000000e+00> : vector<8x32xf32>
    %200 = tpu.matmul %171, %175, %cst_80 {dimension_numbers = #tpu.dot_dimension_numbers<[1], [0], [0], [1], [0, 0, 1, 1], [], []>} : vector<8x32xf32>, vector<32x32xf32>, vector<8x32xf32> -> vector<8x32xf32>
    %201 = vector.broadcast %183 : vector<1x32xf32> to vector<8x32xf32>
    %202 = arith.addf %200, %201 : vector<8x32xf32>
    %cst_81 = arith.constant dense<0.000000e+00> : vector<8x32xf32>
    %203 = tpu.matmul %171, %177, %cst_81 {dimension_numbers = #tpu.dot_dimension_numbers<[1], [0], [0], [1], [0, 0, 1, 1], [], []>} : vector<8x32xf32>, vector<32x32xf32>, vector<8x32xf32> -> vector<8x32xf32>
    %204 = vector.broadcast %184 : vector<1x32xf32> to vector<8x32xf32>
    %205 = arith.addf %203, %204 : vector<8x32xf32>
    %206 = vector.extract_strided_slice %199 {offsets = [0, 0], sizes = [8, 8], strides = [1, 1]} : vector<8x32xf32> to vector<8x8xf32>
    %207 = vector.extract_strided_slice %199 {offsets = [0, 8], sizes = [8, 8], strides = [1, 1]} : vector<8x32xf32> to vector<8x8xf32>
    %208 = vector.extract_strided_slice %199 {offsets = [0, 16], sizes = [8, 8], strides = [1, 1]} : vector<8x32xf32> to vector<8x8xf32>
    %209 = vector.extract_strided_slice %199 {offsets = [0, 24], sizes = [8, 8], strides = [1, 1]} : vector<8x32xf32> to vector<8x8xf32>
    %210 = vector.shape_cast %206 : vector<8x8xf32> to vector<1x8x8xf32>
    %211 = vector.shape_cast %207 : vector<8x8xf32> to vector<1x8x8xf32>
    %212 = vector.shape_cast %208 : vector<8x8xf32> to vector<1x8x8xf32>
    %213 = vector.shape_cast %209 : vector<8x8xf32> to vector<1x8x8xf32>
    %214 = tpu.concatenate %210, %211, %212, %213 in 0 : vector<1x8x8xf32>, vector<1x8x8xf32>, vector<1x8x8xf32>, vector<1x8x8xf32> -> vector<4x8x8xf32>
    %215 = vector.extract_strided_slice %202 {offsets = [0, 0], sizes = [8, 8], strides = [1, 1]} : vector<8x32xf32> to vector<8x8xf32>
    %216 = vector.extract_strided_slice %202 {offsets = [0, 8], sizes = [8, 8], strides = [1, 1]} : vector<8x32xf32> to vector<8x8xf32>
    %217 = vector.extract_strided_slice %202 {offsets = [0, 16], sizes = [8, 8], strides = [1, 1]} : vector<8x32xf32> to vector<8x8xf32>
    %218 = vector.extract_strided_slice %202 {offsets = [0, 24], sizes = [8, 8], strides = [1, 1]} : vector<8x32xf32> to vector<8x8xf32>
    %219 = vector.shape_cast %215 : vector<8x8xf32> to vector<1x8x8xf32>
    %220 = vector.shape_cast %216 : vector<8x8xf32> to vector<1x8x8xf32>
    %221 = vector.shape_cast %217 : vector<8x8xf32> to vector<1x8x8xf32>
    %222 = vector.shape_cast %218 : vector<8x8xf32> to vector<1x8x8xf32>
    %223 = tpu.concatenate %219, %220, %221, %222 in 0 : vector<1x8x8xf32>, vector<1x8x8xf32>, vector<1x8x8xf32>, vector<1x8x8xf32> -> vector<4x8x8xf32>
    %224 = vector.extract_strided_slice %205 {offsets = [0, 0], sizes = [8, 8], strides = [1, 1]} : vector<8x32xf32> to vector<8x8xf32>
    %225 = vector.extract_strided_slice %205 {offsets = [0, 8], sizes = [8, 8], strides = [1, 1]} : vector<8x32xf32> to vector<8x8xf32>
    %226 = vector.extract_strided_slice %205 {offsets = [0, 16], sizes = [8, 8], strides = [1, 1]} : vector<8x32xf32> to vector<8x8xf32>
    %227 = vector.extract_strided_slice %205 {offsets = [0, 24], sizes = [8, 8], strides = [1, 1]} : vector<8x32xf32> to vector<8x8xf32>
    %228 = vector.shape_cast %224 : vector<8x8xf32> to vector<1x8x8xf32>
    %229 = vector.shape_cast %225 : vector<8x8xf32> to vector<1x8x8xf32>
    %230 = vector.shape_cast %226 : vector<8x8xf32> to vector<1x8x8xf32>
    %231 = vector.shape_cast %227 : vector<8x8xf32> to vector<1x8x8xf32>
    %232 = tpu.concatenate %228, %229, %230, %231 in 0 : vector<1x8x8xf32>, vector<1x8x8xf32>, vector<1x8x8xf32>, vector<1x8x8xf32> -> vector<4x8x8xf32>
    "tpu.trace_start"() <{level = 10 : i32, message = "hld,hmd->hlm"}> : () -> ()
    %cst_82 = arith.constant dense<0.000000e+00> : vector<4x8x8xf32>
    %233 = tpu.matmul %214, %223, %cst_82 {dimension_numbers = #tpu.dot_dimension_numbers<[2], [2], [1], [1], [0, 0, 0, 1, 1, 1], [0], [0]>} : vector<4x8x8xf32>, vector<4x8x8xf32>, vector<4x8x8xf32> -> vector<4x8x8xf32>
    "tpu.trace_stop"() : () -> ()
    %cst_83 = arith.constant dense<0xFF800000> : vector<4x8xf32>
    %234 = vector.multi_reduction <maximumf>, %233, %cst_83 [2] : vector<4x8x8xf32> to vector<4x8xf32>
    %235 = vector.shape_cast %234 : vector<4x8xf32> to vector<4x8x1xf32>
    %236 = vector.broadcast %235 : vector<4x8x1xf32> to vector<4x8x8xf32>
    %237 = arith.subf %233, %236 : vector<4x8x8xf32>
    %238 = math.exp %237 : vector<4x8x8xf32>
    %cst_84 = arith.constant dense<0.000000e+00> : vector<4x8xf32>
    %239 = vector.multi_reduction <add>, %238, %cst_84 [2] : vector<4x8x8xf32> to vector<4x8xf32>
    %240 = vector.shape_cast %239 : vector<4x8xf32> to vector<4x8x1xf32>
    %241 = tpu.reciprocal %240 {approx = true} : vector<4x8x1xf32> -> vector<4x8x1xf32>
    %242 = vector.broadcast %241 : vector<4x8x1xf32> to vector<4x8x8xf32>
    %243 = arith.mulf %238, %242 : vector<4x8x8xf32>
    "tpu.trace_start"() <{level = 10 : i32, message = "hlm,hmd->hld"}> : () -> ()
    %cst_85 = arith.constant dense<0.000000e+00> : vector<4x8x8xf32>
    %244 = tpu.matmul %243, %232, %cst_85 {dimension_numbers = #tpu.dot_dimension_numbers<[2], [1], [1], [2], [0, 0, 0, 1, 1, 2], [0], [0]>} : vector<4x8x8xf32>, vector<4x8x8xf32>, vector<4x8x8xf32> -> vector<4x8x8xf32>
    "tpu.trace_stop"() : () -> ()
    %245 = vector.extract_strided_slice %244 {offsets = [0, 0, 0], sizes = [1, 8, 8], strides = [1, 1, 1]} : vector<4x8x8xf32> to vector<1x8x8xf32>
    %246 = vector.shape_cast %245 : vector<1x8x8xf32> to vector<8x8xf32>
    %247 = vector.extract_strided_slice %244 {offsets = [1, 0, 0], sizes = [1, 8, 8], strides = [1, 1, 1]} : vector<4x8x8xf32> to vector<1x8x8xf32>
    %248 = vector.shape_cast %247 : vector<1x8x8xf32> to vector<8x8xf32>
    %249 = vector.extract_strided_slice %244 {offsets = [2, 0, 0], sizes = [1, 8, 8], strides = [1, 1, 1]} : vector<4x8x8xf32> to vector<1x8x8xf32>
    %250 = vector.shape_cast %249 : vector<1x8x8xf32> to vector<8x8xf32>
    %251 = vector.extract_strided_slice %244 {offsets = [3, 0, 0], sizes = [1, 8, 8], strides = [1, 1, 1]} : vector<4x8x8xf32> to vector<1x8x8xf32>
    %252 = vector.shape_cast %251 : vector<1x8x8xf32> to vector<8x8xf32>
    %253 = tpu.concatenate %246, %248, %250, %252 in 1 : vector<8x8xf32>, vector<8x8xf32>, vector<8x8xf32>, vector<8x8xf32> -> vector<8x32xf32>
    %cst_86 = arith.constant dense<0.000000e+00> : vector<8x32xf32>
    %254 = tpu.matmul %253, %179, %cst_86 {dimension_numbers = #tpu.dot_dimension_numbers<[1], [0], [0], [1], [0, 0, 1, 1], [], []>} : vector<8x32xf32>, vector<32x32xf32>, vector<8x32xf32> -> vector<8x32xf32>
    %255 = vector.broadcast %185 : vector<1x32xf32> to vector<8x32xf32>
    %256 = arith.addf %254, %255 : vector<8x32xf32>
    %257 = arith.addf %171, %256 : vector<8x32xf32>
    %cst_87 = arith.constant dense<0.000000e+00> : vector<8xf32>
    %258 = vector.multi_reduction <add>, %257, %cst_87 [1] : vector<8x32xf32> to vector<8xf32>
    %259 = vector.shape_cast %258 : vector<8xf32> to vector<8x1xf32>
    %cst_88 = arith.constant 3.200000e+01 : f32
    %260 = vector.broadcast %cst_88 : f32 to vector<8x1xf32>
    %261 = arith.divf %259, %260 : vector<8x1xf32>
    %262 = vector.broadcast %261 : vector<8x1xf32> to vector<8x32xf32>
    %263 = arith.subf %257, %262 : vector<8x32xf32>
    %264 = arith.mulf %263, %263 : vector<8x32xf32>
    %cst_89 = arith.constant dense<0.000000e+00> : vector<8xf32>
    %265 = vector.multi_reduction <add>, %264, %cst_89 [1] : vector<8x32xf32> to vector<8xf32>
    %266 = vector.shape_cast %265 : vector<8xf32> to vector<8x1xf32>
    %cst_90 = arith.constant 3.200000e+01 : f32
    %267 = vector.broadcast %cst_90 : f32 to vector<8x1xf32>
    %268 = arith.divf %266, %267 : vector<8x1xf32>
    %269 = vector.broadcast %261 : vector<8x1xf32> to vector<8x32xf32>
    %270 = arith.subf %257, %269 : vector<8x32xf32>
    %cst_91 = arith.constant 9.99999974E-6 : f32
    %271 = vector.broadcast %cst_91 : f32 to vector<8x1xf32>
    %272 = arith.addf %268, %271 : vector<8x1xf32>
    %273 = math.rsqrt %272 : vector<8x1xf32>
    %274 = vector.broadcast %273 : vector<8x1xf32> to vector<8x32xf32>
    %275 = arith.mulf %270, %274 : vector<8x32xf32>
    %276 = vector.broadcast %186 : vector<1x32xf32> to vector<8x32xf32>
    %277 = arith.mulf %275, %276 : vector<8x32xf32>
    %278 = vector.broadcast %187 : vector<1x32xf32> to vector<8x32xf32>
    %279 = arith.addf %277, %278 : vector<8x32xf32>
    %cst_92 = arith.constant dense<0.000000e+00> : vector<8x64xf32>
    %280 = tpu.matmul %279, %192, %cst_92 {dimension_numbers = #tpu.dot_dimension_numbers<[1], [0], [0], [1], [0, 0, 1, 1], [], []>} : vector<8x32xf32>, vector<32x64xf32>, vector<8x64xf32> -> vector<8x64xf32>
    %281 = vector.broadcast %196 : vector<1x64xf32> to vector<8x64xf32>
    %282 = arith.addf %280, %281 : vector<8x64xf32>
    %cst_93 = arith.constant 0.000000e+00 : f32
    %283 = vector.broadcast %cst_93 : f32 to vector<8x64xf32>
    %284 = arith.maximumf %282, %283 : vector<8x64xf32>
    %cst_94 = arith.constant dense<0.000000e+00> : vector<8x32xf32>
    %285 = tpu.matmul %284, %194, %cst_94 {dimension_numbers = #tpu.dot_dimension_numbers<[1], [0], [0], [1], [0, 0, 1, 1], [], []>} : vector<8x64xf32>, vector<64x32xf32>, vector<8x32xf32> -> vector<8x32xf32>
    %286 = vector.broadcast %188 : vector<1x32xf32> to vector<8x32xf32>
    %287 = arith.addf %285, %286 : vector<8x32xf32>
    %288 = arith.addf %279, %287 : vector<8x32xf32>
    %cst_95 = arith.constant dense<0.000000e+00> : vector<8xf32>
    %289 = vector.multi_reduction <add>, %288, %cst_95 [1] : vector<8x32xf32> to vector<8xf32>
    %290 = vector.shape_cast %289 : vector<8xf32> to vector<8x1xf32>
    %cst_96 = arith.constant 3.200000e+01 : f32
    %291 = vector.broadcast %cst_96 : f32 to vector<8x1xf32>
    %292 = arith.divf %290, %291 : vector<8x1xf32>
    %293 = vector.broadcast %292 : vector<8x1xf32> to vector<8x32xf32>
    %294 = arith.subf %288, %293 : vector<8x32xf32>
    %295 = arith.mulf %294, %294 : vector<8x32xf32>
    %cst_97 = arith.constant dense<0.000000e+00> : vector<8xf32>
    %296 = vector.multi_reduction <add>, %295, %cst_97 [1] : vector<8x32xf32> to vector<8xf32>
    %297 = vector.shape_cast %296 : vector<8xf32> to vector<8x1xf32>
    %cst_98 = arith.constant 3.200000e+01 : f32
    %298 = vector.broadcast %cst_98 : f32 to vector<8x1xf32>
    %299 = arith.divf %297, %298 : vector<8x1xf32>
    %300 = vector.broadcast %292 : vector<8x1xf32> to vector<8x32xf32>
    %301 = arith.subf %288, %300 : vector<8x32xf32>
    %cst_99 = arith.constant 9.99999974E-6 : f32
    %302 = vector.broadcast %cst_99 : f32 to vector<8x1xf32>
    %303 = arith.addf %299, %302 : vector<8x1xf32>
    %304 = math.rsqrt %303 : vector<8x1xf32>
    %305 = vector.broadcast %304 : vector<8x1xf32> to vector<8x32xf32>
    %306 = arith.mulf %301, %305 : vector<8x32xf32>
    %307 = vector.broadcast %189 : vector<1x32xf32> to vector<8x32xf32>
    %308 = arith.mulf %306, %307 : vector<8x32xf32>
    %309 = vector.broadcast %190 : vector<1x32xf32> to vector<8x32xf32>
    %310 = arith.addf %308, %309 : vector<8x32xf32>
    %c0_100 = arith.constant 0 : index
    %c0_101 = arith.constant 0 : index
    %311 = vector.load %arg11[%c0_100, %c0_101] : memref<1x32xf32, #tpu.memory_space<vmem>>, vector<1x32xf32>
    %cst_102 = arith.constant dense<0.000000e+00> : vector<1x8xf32>
    %312 = tpu.matmul %311, %310, %cst_102 {dimension_numbers = #tpu.dot_dimension_numbers<[1], [1], [0], [0], [0, 0, 1, 0], [], []>} : vector<1x32xf32>, vector<8x32xf32>, vector<1x8xf32> -> vector<1x8xf32>
    %c0_103 = arith.constant 0 : index
    %c0_104 = arith.constant 0 : index
    %313 = vector.load %arg12[%c0_103, %c0_104] : memref<1x1xf32, #tpu.memory_space<vmem>>, vector<1x1xf32>
    %314 = vector.broadcast %313 : vector<1x1xf32> to vector<1x8xf32>
    %315 = arith.addf %312, %314 : vector<1x8xf32>
    %cst_105 = arith.constant dense<0xFF800000> : vector<1xf32>
    %316 = vector.multi_reduction <maximumf>, %315, %cst_105 [1] : vector<1x8xf32> to vector<1xf32>
    %317 = vector.shape_cast %316 : vector<1xf32> to vector<1x1xf32>
    %318 = vector.broadcast %317 : vector<1x1xf32> to vector<1x8xf32>
    %319 = arith.subf %315, %318 : vector<1x8xf32>
    %320 = math.exp %319 : vector<1x8xf32>
    %cst_106 = arith.constant dense<0.000000e+00> : vector<1xf32>
    %321 = vector.multi_reduction <add>, %320, %cst_106 [1] : vector<1x8xf32> to vector<1xf32>
    %322 = vector.shape_cast %321 : vector<1xf32> to vector<1x1xf32>
    %323 = tpu.reciprocal %322 {approx = true} : vector<1x1xf32> -> vector<1x1xf32>
    %324 = vector.broadcast %323 : vector<1x1xf32> to vector<1x8xf32>
    %325 = arith.mulf %320, %324 : vector<1x8xf32>
    %c0_107 = arith.constant 0 : index
    %c0_108 = arith.constant 0 : index
    %c0_109 = arith.constant 0 : index
    %326 = vector.load %arg13[%c0_107, %c0_108, %c0_109] : memref<1x1x8xf32, #tpu.memory_space<vmem>>, vector<1x1x8xf32>
    %327 = vector.shape_cast %326 : vector<1x1x8xf32> to vector<1x8xf32>
    %328 = vector.shape_cast %325 : vector<1x8xf32> to vector<1x1x8xf32>
    tpu.vector_store %arg13[%c0_107, %c0_108, %c0_109], %328 {strides = array<i32>} : memref<1x1x8xf32, #tpu.memory_space<vmem>>, vector<1x1x8xf32>,
    return
  }
  func.func @transform_0(%arg0: i32) -> (i32, i32, i32) {
    %c0_i32 = arith.constant 0 : i32
    %c0_i32_0 = arith.constant 0 : i32
    %c0_i32_1 = arith.constant 0 : i32
    return %arg0, %c0_i32, %c0_i32_0 : i32, i32, i32
  }
  func.func @transform_1(%arg0: i32) -> (i32, i32) {
    %c0_i32 = arith.constant 0 : i32
    %c0_i32_0 = arith.constant 0 : i32
    %c0_i32_1 = arith.constant 0 : i32
    return %c0_i32, %c0_i32_0 : i32, i32
  }
  func.func @transform_2(%arg0: i32) -> (i32, i32) {
    %c0_i32 = arith.constant 0 : i32
    %c0_i32_0 = arith.constant 0 : i32
    %c0_i32_1 = arith.constant 0 : i32
    return %c0_i32, %c0_i32_0 : i32, i32
  }
  func.func @transform_3(%arg0: i32) -> (i32, i32) {
    %c0_i32 = arith.constant 0 : i32
    %c0_i32_0 = arith.constant 0 : i32
    %c0_i32_1 = arith.constant 0 : i32
    return %c0_i32, %c0_i32_0 : i32, i32
  }
  func.func @transform_4(%arg0: i32) -> (i32, i32) {
    %c0_i32 = arith.constant 0 : i32
    %c0_i32_0 = arith.constant 0 : i32
    %c0_i32_1 = arith.constant 0 : i32
    return %c0_i32, %c0_i32_0 : i32, i32
  }
  func.func @transform_5(%arg0: i32) -> (i32, i32, i32) {
    %c0_i32 = arith.constant 0 : i32
    %c0_i32_0 = arith.constant 0 : i32
    %c0_i32_1 = arith.constant 0 : i32
    %c0_i32_2 = arith.constant 0 : i32
    return %c0_i32, %c0_i32_0, %c0_i32_1 : i32, i32, i32
  }
  func.func @transform_6(%arg0: i32) -> (i32, i32, i32) {
    %c0_i32 = arith.constant 0 : i32
    %c0_i32_0 = arith.constant 0 : i32
    %c0_i32_1 = arith.constant 0 : i32
    %c0_i32_2 = arith.constant 0 : i32
    return %c0_i32, %c0_i32_0, %c0_i32_1 : i32, i32, i32
  }
  func.func @transform_7(%arg0: i32) -> (i32, i32, i32) {
    %c0_i32 = arith.constant 0 : i32
    %c0_i32_0 = arith.constant 0 : i32
    %c0_i32_1 = arith.constant 0 : i32
    %c0_i32_2 = arith.constant 0 : i32
    return %c0_i32, %c0_i32_0, %c0_i32_1 : i32, i32, i32
  }
  func.func @transform_8(%arg0: i32) -> (i32, i32, i32) {
    %c0_i32 = arith.constant 0 : i32
    %c0_i32_0 = arith.constant 0 : i32
    %c0_i32_1 = arith.constant 0 : i32
    %c0_i32_2 = arith.constant 0 : i32
    return %c0_i32, %c0_i32_0, %c0_i32_1 : i32, i32, i32
  }
  func.func @transform_9(%arg0: i32) -> (i32, i32, i32) {
    %c0_i32 = arith.constant 0 : i32
    %c0_i32_0 = arith.constant 0 : i32
    %c0_i32_1 = arith.constant 0 : i32
    %c0_i32_2 = arith.constant 0 : i32
    return %c0_i32, %c0_i32_0, %c0_i32_1 : i32, i32, i32
  }
  func.func @transform_10(%arg0: i32) -> (i32, i32) {
    %c0_i32 = arith.constant 0 : i32
    %c0_i32_0 = arith.constant 0 : i32
    %c0_i32_1 = arith.constant 0 : i32
    return %c0_i32, %c0_i32_0 : i32, i32
  }
  func.func @transform_11(%arg0: i32) -> (i32, i32) {
    %c0_i32 = arith.constant 0 : i32
    %c0_i32_0 = arith.constant 0 : i32
    %c0_i32_1 = arith.constant 0 : i32
    return %c0_i32, %c0_i32_0 : i32, i32
  }
  func.func @transform_12(%arg0: i32) -> (i32, i32, i32) {
    %c0_i32 = arith.constant 0 : i32
    %c0_i32_0 = arith.constant 0 : i32
    %c0_i32_1 = arith.constant 0 : i32
    return %arg0, %c0_i32, %c0_i32_0 : i32, i32, i32
  }
}

</mosaic_0001>

<llo_original>
// kernel: tpu_custom_call.1
$region0: #{tpu_custom_call.1}
  #allocation0 [shape = 'u32[]', space=smem, size = 0x4, offset = 0x4, fixed_abs, tag = 'smem constant byte address 0x4 - core index']
  #allocation1 [shape = 'u32[144,128]{1,0:T(1,128)}', space=vmem, size = 0x12000, scoped, tag = 'internal scratch']
  #allocation2 [shape = 'f32[1,1]{1,0:T(1,128)S(1)}', space=vmem, size = 0x200, scoped, tag = 'scoped memory for tpu_custom_call.1']
  %s0 = inlined_call_operand.vmem [shape: f32[2,16,8], index: 0, kind: input, shape index: {}]
  %s1 = inlined_call_operand.vmem [shape: f32[64,16], index: 1, kind: input, shape index: {}]
  %s2 = inlined_call_operand.vmem [shape: f32[64,1], index: 2, kind: input, shape index: {}]
  %s3 = inlined_call_operand.vmem [shape: f32[32,64], index: 3, kind: input, shape index: {}]
  %s4 = inlined_call_operand.vmem [shape: f32[32,1], index: 4, kind: input, shape index: {}]
  %s5 = inlined_call_operand.vmem [shape: f32[8,32,32], index: 5, kind: input, shape index: {}]
  %s6 = inlined_call_operand.vmem [shape: f32[2,32,64], index: 6, kind: input, shape index: {}]
  %s7 = inlined_call_operand.vmem [shape: f32[2,64,32], index: 7, kind: input, shape index: {}]
  %s8 = inlined_call_operand.vmem [shape: f32[2,9,32], index: 8, kind: input, shape index: {}]
  %s9 = inlined_call_operand.vmem [shape: f32[2,1,64], index: 9, kind: input, shape index: {}]
  %s10 = inlined_call_operand.vmem [shape: f32[1,32], index: 10, kind: input, shape index: {}]
  %s11 = inlined_call_operand.<no memory space> [shape: f32[1,1], index: 11, kind: input, shape index: {}]
  %s12 = inlined_call_operand.hbm [shape: f32[2,1,8], index: 12, kind: output, shape index: {}]
  %s13 = sld [smem:[#allocation0]]
  $region81: #{tpu_custom_call.1} parent=0
    _
  %s15 = ssub.s32 1, %s13
  %s16 = scalar_select 0, %s15, %s13
  %v17 = vstv %s11
  %18 = vst [vmem:[#allocation2] sm:$0x1] %v17
  $region1: #{tpu_custom_call.1} parent=0
    #allocation3 [shape = 'u8[1024]{0}', space=vmem, size = 0x400, scoped, tag = 'output window, operand 0']
    #allocation4 [shape = 's32[2]{0}', space=sflag, size = 0x8, scoped, tag = 'scoped memory for tpu_custom_call.1']
    %19 = vsyncpa [#allocation4], 0
    %s20 = scalar_lea.sflag [#allocation4], 1
    %21 = vsyncpa %s20, 0
    loop: start=0, step=1, limit=4
    $region2: #{tpu_custom_call.1} parent=1 // loop_pre_header
      _
    $region3: #{tpu_custom_call.1} parent=1 // loop_header
      %s23 = sphi 0, %s27
      %p24 = scmp.ge.s32.totalorder %s23, 4
      %s33 = sphi 0, %s35
      %s36 = sphi 0, %s33
      %s37 = sphi 0, %s36
      %s53 = sphi 0, %s37
      %s57 = sphi 0, %s57
      %s59 = sphi 0, %s57
      %s60 = sphi 0, %s59
      %s74 = sphi 0, %s60
      %s78 = sphi 0, %s78
      %s80 = sphi 0, %s78
      %s81 = sphi 0, %s80
      %s95 = sphi 0, %s81
      %s99 = sphi 0, %s99
      %s101 = sphi 0, %s99
      %s102 = sphi 0, %s101
      %s116 = sphi 0, %s102
      %s120 = sphi 0, %s120
      %s122 = sphi 0, %s120
      %s123 = sphi 0, %s122
      %s137 = sphi 0, %s123
      %s141 = sphi 0, %s141
      %s143 = sphi 0, %s141
      %s144 = sphi 0, %s143
      %s158 = sphi 0, %s144
      %s162 = sphi 0, %s162
      %s164 = sphi 0, %s162
      %s165 = sphi 0, %s164
      %s179 = sphi 0, %s165
      %s183 = sphi 0, %s183
      %s185 = sphi 0, %s183
      %s186 = sphi 0, %s185
      %s200 = sphi 0, %s186
      %s204 = sphi 0, %s204
      %s206 = sphi 0, %s204
      %s207 = sphi 0, %s206
      %s221 = sphi 0, %s207
      %s225 = sphi 0, %s225
      %s227 = sphi 0, %s225
      %s228 = sphi 0, %s227
      %s242 = sphi 0, %s228
      %s246 = sphi 0, %s246
      %s248 = sphi 0, %s246
      %s249 = sphi 0, %s248
      %s263 = sphi 0, %s249
      %s267 = sphi 0, %s267
      %s269 = sphi 0, %s267
      %s270 = sphi 0, %s269
      %s284 = sphi 0, %s270
      %s290 = sphi 0, %s292
      %s293 = sphi 0, %s290
      %s294 = sphi 0, %s293
      %s310 = sphi 0, %s294
    $region4: #{tpu_custom_call.1} parent=1 // loop_header_branch
      %26 = sbr.rel (%p24) target = $region8
    $region5: #{tpu_custom_call.1} parent=1 // loop_body
      %s28 = ssub.s32 %s23, 1
      %s29 = ssub.s32 %s23, 2
      %s30 = sadd.s32 %s23, 1
      %s31 = ssub.s32 %s23, %s30
      %p32 = scmp.eq.s32.totalorder %s31, 0
      %s34 = sadd.s32 %s33, 1
      %s35 = scalar_select %p32, %s33, %s34
      %p38 = pneg %p32
      %p39 = scmp.eq.s32.totalorder %s23, 1
      %p40 = por %p38, %p39
      %p41 = scmp.ne.s32.totalorder %s33, %s36
      %p42 = scmp.eq.s32.totalorder %s23, 0
      %p43 = por %p41, %p42
      %p44 = scmp.ne.s32.totalorder %s33, %s36
      %p45 = scmp.eq.s32.totalorder %s28, 1
      %p46 = por %p44, %p45
      %p47 = scmp.ne.s32.totalorder %s36, %s37
      %p48 = scmp.eq.s32.totalorder %s28, 0
      %p49 = por %p47, %p48
      %p50 = scmp.ne.s32.totalorder %s36, %s37
      %p51 = scmp.eq.s32.totalorder %s29, 1
      %p52 = por %p50, %p51
      %p54 = scmp.ne.s32.totalorder %s37, %s53
      %p55 = scmp.eq.s32.totalorder %s29, 0
      %p56 = por %p54, %p55
      %s58 = sadd.s32 %s57, 1
      %p61 = scmp.eq.s32.totalorder %s23, 1
      %p62 = scmp.ne.s32.totalorder %s57, %s59
      %p63 = scmp.eq.s32.totalorder %s23, 0
      %p64 = por %p62, %p63
      %p65 = scmp.ne.s32.totalorder %s57, %s59
      %p66 = scmp.eq.s32.totalorder %s28, 1
      %p67 = por %p65, %p66
      %p68 = scmp.ne.s32.totalorder %s59, %s60
      %p69 = scmp.eq.s32.totalorder %s28, 0
      %p70 = por %p68, %p69
      %p71 = scmp.ne.s32.totalorder %s59, %s60
      %p72 = scmp.eq.s32.totalorder %s29, 1
      %p73 = por %p71, %p72
      %p75 = scmp.ne.s32.totalorder %s60, %s74
      %p76 = scmp.eq.s32.totalorder %s29, 0
      %p77 = por %p75, %p76
      %s79 = sadd.s32 %s78, 1
      %p82 = scmp.eq.s32.totalorder %s23, 1
      %p83 = scmp.ne.s32.totalorder %s78, %s80
      %p84 = scmp.eq.s32.totalorder %s23, 0
      %p85 = por %p83, %p84
      %p86 = scmp.ne.s32.totalorder %s78, %s80
      %p87 = scmp.eq.s32.totalorder %s28, 1
      %p88 = por %p86, %p87
      %p89 = scmp.ne.s32.totalorder %s80, %s81
      %p90 = scmp.eq.s32.totalorder %s28, 0
      %p91 = por %p89, %p90
      %p92 = scmp.ne.s32.totalorder %s80, %s81
      %p93 = scmp.eq.s32.totalorder %s29, 1
      %p94 = por %p92, %p93
      %p96 = scmp.ne.s32.totalorder %s81, %s95
      %p97 = scmp.eq.s32.totalorder %s29, 0
      %p98 = por %p96, %p97
      %s100 = sadd.s32 %s99, 1
      %p103 = scmp.eq.s32.totalorder %s23, 1
      %p104 = scmp.ne.s32.totalorder %s99, %s101
      %p105 = scmp.eq.s32.totalorder %s23, 0
      %p106 = por %p104, %p105
      %p107 = scmp.ne.s32.totalorder %s99, %s101
      %p108 = scmp.eq.s32.totalorder %s28, 1
      %p109 = por %p107, %p108
      %p110 = scmp.ne.s32.totalorder %s101, %s102
      %p111 = scmp.eq.s32.totalorder %s28, 0
      %p112 = por %p110, %p111
      %p113 = scmp.ne.s32.totalorder %s101, %s102
      %p114 = scmp.eq.s32.totalorder %s29, 1
      %p115 = por %p113, %p114
      %p117 = scmp.ne.s32.totalorder %s102, %s116
      %p118 = scmp.eq.s32.totalorder %s29, 0
      %p119 = por %p117, %p118
      %s121 = sadd.s32 %s120, 1
      %p124 = scmp.eq.s32.totalorder %s23, 1
      %p125 = scmp.ne.s32.totalorder %s120, %s122
      %p126 = scmp.eq.s32.totalorder %s23, 0
      %p127 = por %p125, %p126
      %p128 = scmp.ne.s32.totalorder %s120, %s122
      %p129 = scmp.eq.s32.totalorder %s28, 1
      %p130 = por %p128, %p129
      %p131 = scmp.ne.s32.totalorder %s122, %s123
      %p132 = scmp.eq.s32.totalorder %s28, 0
      %p133 = por %p131, %p132
      %p134 = scmp.ne.s32.totalorder %s122, %s123
      %p135 = scmp.eq.s32.totalorder %s29, 1
      %p136 = por %p134, %p135
      %p138 = scmp.ne.s32.totalorder %s123, %s137
      %p139 = scmp.eq.s32.totalorder %s29, 0
      %p140 = por %p138, %p139
      %s142 = sadd.s32 %s141, 1
      %p145 = scmp.eq.s32.totalorder %s23, 1
      %p146 = scmp.ne.s32.totalorder %s141, %s143
      %p147 = scmp.eq.s32.totalorder %s23, 0
      %p148 = por %p146, %p147
      %p149 = scmp.ne.s32.totalorder %s141, %s143
      %p150 = scmp.eq.s32.totalorder %s28, 1
      %p151 = por %p149, %p150
      %p152 = scmp.ne.s32.totalorder %s143, %s144
      %p153 = scmp.eq.s32.totalorder %s28, 0
      %p154 = por %p152, %p153
      %p155 = scmp.ne.s32.totalorder %s143, %s144
      %p156 = scmp.eq.s32.totalorder %s29, 1
      %p157 = por %p155, %p156
      %p159 = scmp.ne.s32.totalorder %s144, %s158
      %p160 = scmp.eq.s32.totalorder %s29, 0
      %p161 = por %p159, %p160
      %s163 = sadd.s32 %s162, 1
      %p166 = scmp.eq.s32.totalorder %s23, 1
      %p167 = scmp.ne.s32.totalorder %s162, %s164
      %p168 = scmp.eq.s32.totalorder %s23, 0
      %p169 = por %p167, %p168
      %p170 = scmp.ne.s32.totalorder %s162, %s164
      %p171 = scmp.eq.s32.totalorder %s28, 1
      %p172 = por %p170, %p171
      %p173 = scmp.ne.s32.totalorder %s164, %s165
      %p174 = scmp.eq.s32.totalorder %s28, 0
      %p175 = por %p173, %p174
      %p176 = scmp.ne.s32.totalorder %s164, %s165
      %p177 = scmp.eq.s32.totalorder %s29, 1
      %p178 = por %p176, %p177
      %p180 = scmp.ne.s32.totalorder %s165, %s179
      %p181 = scmp.eq.s32.totalorder %s29, 0
      %p182 = por %p180, %p181
      %s184 = sadd.s32 %s183, 1
      %p187 = scmp.eq.s32.totalorder %s23, 1
      %p188 = scmp.ne.s32.totalorder %s183, %s185
      %p189 = scmp.eq.s32.totalorder %s23, 0
      %p190 = por %p188, %p189
      %p191 = scmp.ne.s32.totalorder %s183, %s185
      %p192 = scmp.eq.s32.totalorder %s28, 1
      %p193 = por %p191, %p192
      %p194 = scmp.ne.s32.totalorder %s185, %s186
      %p195 = scmp.eq.s32.totalorder %s28, 0
      %p196 = por %p194, %p195
      %p197 = scmp.ne.s32.totalorder %s185, %s186
      %p198 = scmp.eq.s32.totalorder %s29, 1
      %p199 = por %p197, %p198
      %p201 = scmp.ne.s32.totalorder %s186, %s200
      %p202 = scmp.eq.s32.totalorder %s29, 0
      %p203 = por %p201, %p202
      %s205 = sadd.s32 %s204, 1
      %p208 = scmp.eq.s32.totalorder %s23, 1
      %p209 = scmp.ne.s32.totalorder %s204, %s206
      %p210 = scmp.eq.s32.totalorder %s23, 0
      %p211 = por %p209, %p210
      %p212 = scmp.ne.s32.totalorder %s204, %s206
      %p213 = scmp.eq.s32.totalorder %s28, 1
      %p214 = por %p212, %p213
      %p215 = scmp.ne.s32.totalorder %s206, %s207
      %p216 = scmp.eq.s32.totalorder %s28, 0
      %p217 = por %p215, %p216
      %p218 = scmp.ne.s32.totalorder %s206, %s207
      %p219 = scmp.eq.s32.totalorder %s29, 1
      %p220 = por %p218, %p219
      %p222 = scmp.ne.s32.totalorder %s207, %s221
      %p223 = scmp.eq.s32.totalorder %s29, 0
      %p224 = por %p222, %p223
      %s226 = sadd.s32 %s225, 1
      %p229 = scmp.eq.s32.totalorder %s23, 1
      %p230 = scmp.ne.s32.totalorder %s225, %s227
      %p231 = scmp.eq.s32.totalorder %s23, 0
      %p232 = por %p230, %p231
      %p233 = scmp.ne.s32.totalorder %s225, %s227
      %p234 = scmp.eq.s32.totalorder %s28, 1
      %p235 = por %p233, %p234
      %p236 = scmp.ne.s32.totalorder %s227, %s228
      %p237 = scmp.eq.s32.totalorder %s28, 0
      %p238 = por %p236, %p237
      %p239 = scmp.ne.s32.totalorder %s227, %s228
      %p240 = scmp.eq.s32.totalorder %s29, 1
      %p241 = por %p239, %p240
      %p243 = scmp.ne.s32.totalorder %s228, %s242
      %p244 = scmp.eq.s32.totalorder %s29, 0
      %p245 = por %p243, %p244
      %s247 = sadd.s32 %s246, 1
      %p250 = scmp.eq.s32.totalorder %s23, 1
      %p251 = scmp.ne.s32.totalorder %s246, %s248
      %p252 = scmp.eq.s32.totalorder %s23, 0
      %p253 = por %p251, %p252
      %p254 = scmp.ne.s32.totalorder %s246, %s248
      %p255 = scmp.eq.s32.totalorder %s28, 1
      %p256 = por %p254, %p255
      %p257 = scmp.ne.s32.totalorder %s248, %s249
      %p258 = scmp.eq.s32.totalorder %s28, 0
      %p259 = por %p257, %p258
      %p260 = scmp.ne.s32.totalorder %s248, %s249
      %p261 = scmp.eq.s32.totalorder %s29, 1
      %p262 = por %p260, %p261
      %p264 = scmp.ne.s32.totalorder %s249, %s263
      %p265 = scmp.eq.s32.totalorder %s29, 0
      %p266 = por %p264, %p265
      %s268 = sadd.s32 %s267, 1
      %p271 = scmp.eq.s32.totalorder %s23, 1
      %p272 = scmp.ne.s32.totalorder %s267, %s269
      %p273 = scmp.eq.s32.totalorder %s23, 0
      %p274 = por %p272, %p273
      %p275 = scmp.ne.s32.totalorder %s267, %s269
      %p276 = scmp.eq.s32.totalorder %s28, 1
      %p277 = por %p275, %p276
      %p278 = scmp.ne.s32.totalorder %s269, %s270
      %p279 = scmp.eq.s32.totalorder %s28, 0
      %p280 = por %p278, %p279
      %p281 = scmp.ne.s32.totalorder %s269, %s270
      %p282 = scmp.eq.s32.totalorder %s29, 1
      %p283 = por %p281, %p282
      %p285 = scmp.ne.s32.totalorder %s270, %s284
      %p286 = scmp.eq.s32.totalorder %s29, 0
      %p287 = por %p285, %p286
      %s288 = ssub.s32 %s23, %s30
      %p289 = scmp.eq.s32.totalorder %s288, 0
      %s291 = sadd.s32 %s290, 1
      %s292 = scalar_select %p289, %s290, %s291
      %p295 = pneg %p289
      %p296 = scmp.eq.s32.totalorder %s23, 1
      %p297 = por %p295, %p296
      %p298 = scmp.ne.s32.totalorder %s290, %s293
      %p299 = scmp.eq.s32.totalorder %s23, 0
      %p300 = por %p298, %p299
      %p301 = scmp.ne.s32.totalorder %s290, %s293
      %p302 = scmp.eq.s32.totalorder %s28, 1
      %p303 = por %p301, %p302
      %p304 = scmp.ne.s32.totalorder %s293, %s294
      %p305 = scmp.eq.s32.totalorder %s28, 0
      %p306 = por %p304, %p305
      %p307 = scmp.ne.s32.totalorder %s293, %s294
      %p308 = scmp.eq.s32.totalorder %s29, 1
      %p309 = por %p307, %p308
      %p311 = scmp.ne.s32.totalorder %s294, %s310
      %p312 = scmp.eq.s32.totalorder %s29, 0
      %p313 = por %p311, %p312
      %p314 = scmp.le.s32.totalorder 1, %s23
      %p315 = scmp.lt.s32.totalorder %s23, 3
      %p316 = pnand %p314, %p315
      %p317 = pneg %p316
      // Predicated region
      $region9: #{tpu_custom_call.1} parent=5 // pred_check
        _
      $region10: #{tpu_custom_call.1} parent=5 // pred_check_branch
        %319 = sbr.rel (%p316) target = $region12
      $region11: #{tpu_custom_call.1} parent=5 // pred_region
        %s320 = ssub.s32 %s23, 1
        // Predicated region
        $region13: #{tpu_custom_call.1} parent=11 // pred_check
          %p321 = pneg %p70
        $region14: #{tpu_custom_call.1} parent=11 // pred_check_branch
          %323 = sbr.rel (%p321) target = $region16
        $region15: #{tpu_custom_call.1} parent=11 // pred_region
          _
        $region16: #{tpu_custom_call.1} parent=11 // pred_fallthru
          _
        // Predicated region
        $region17: #{tpu_custom_call.1} parent=11 // pred_check
          %p324 = pneg %p91
        $region18: #{tpu_custom_call.1} parent=11 // pred_check_branch
          %326 = sbr.rel (%p324) target = $region20
        $region19: #{tpu_custom_call.1} parent=11 // pred_region
          _
        $region20: #{tpu_custom_call.1} parent=11 // pred_fallthru
          _
        // Predicated region
        $region21: #{tpu_custom_call.1} parent=11 // pred_check
          %p327 = pneg %p112
        $region22: #{tpu_custom_call.1} parent=11 // pred_check_branch
          %329 = sbr.rel (%p327) target = $region24
        $region23: #{tpu_custom_call.1} parent=11 // pred_region
          _
        $region24: #{tpu_custom_call.1} parent=11 // pred_fallthru
          _
        // Predicated region
        $region25: #{tpu_custom_call.1} parent=11 // pred_check
          %p330 = pneg %p133
        $region26: #{tpu_custom_call.1} parent=11 // pred_check_branch
          %332 = sbr.rel (%p330) target = $region28
        $region27: #{tpu_custom_call.1} parent=11 // pred_region
          _
        $region28: #{tpu_custom_call.1} parent=11 // pred_fallthru
          _
        // Predicated region
        $region29: #{tpu_custom_call.1} parent=11 // pred_check
          %p333 = pneg %p154
        $region30: #{tpu_custom_call.1} parent=11 // pred_check_branch
          %335 = sbr.rel (%p333) target = $region32
        $region31: #{tpu_custom_call.1} parent=11 // pred_region
          _
        $region32: #{tpu_custom_call.1} parent=11 // pred_fallthru
          _
        // Predicated region
        $region33: #{tpu_custom_call.1} parent=11 // pred_check
          %p336 = pneg %p175
        $region34: #{tpu_custom_call.1} parent=11 // pred_check_branch
          %338 = sbr.rel (%p336) target = $region36
        $region35: #{tpu_custom_call.1} parent=11 // pred_region
          _
        $region36: #{tpu_custom_call.1} parent=11 // pred_fallthru
          _
        // Predicated region
        $region37: #{tpu_custom_call.1} parent=11 // pred_check
          %p339 = pneg %p196
        $region38: #{tpu_custom_call.1} parent=11 // pred_check_branch
          %341 = sbr.rel (%p339) target = $region40
        $region39: #{tpu_custom_call.1} parent=11 // pred_region
          _
        $region40: #{tpu_custom_call.1} parent=11 // pred_fallthru
          _
        // Predicated region
        $region41: #{tpu_custom_call.1} parent=11 // pred_check
          %p342 = pneg %p217
        $region42: #{tpu_custom_call.1} parent=11 // pred_check_branch
          %344 = sbr.rel (%p342) target = $region44
        $region43: #{tpu_custom_call.1} parent=11 // pred_region
          _
        $region44: #{tpu_custom_call.1} parent=11 // pred_fallthru
          _
        // Predicated region
        $region45: #{tpu_custom_call.1} parent=11 // pred_check
          %p345 = pneg %p238
        $region46: #{tpu_custom_call.1} parent=11 // pred_check_branch
          %347 = sbr.rel (%p345) target = $region48
        $region47: #{tpu_custom_call.1} parent=11 // pred_region
          _
        $region48: #{tpu_custom_call.1} parent=11 // pred_fallthru
          _
        // Predicated region
        $region49: #{tpu_custom_call.1} parent=11 // pred_check
          %p348 = pneg %p259
        $region50: #{tpu_custom_call.1} parent=11 // pred_check_branch
          %350 = sbr.rel (%p348) target = $region52
        $region51: #{tpu_custom_call.1} parent=11 // pred_region
          _
        $region52: #{tpu_custom_call.1} parent=11 // pred_fallthru
          _
        // Predicated region
        $region53: #{tpu_custom_call.1} parent=11 // pred_check
          %p351 = pneg %p280
        $region54: #{tpu_custom_call.1} parent=11 // pred_check_branch
          %353 = sbr.rel (%p351) target = $region56
        $region55: #{tpu_custom_call.1} parent=11 // pred_region
          _
        $region56: #{tpu_custom_call.1} parent=11 // pred_fallthru
          _
      $region12: #{tpu_custom_call.1} parent=5 // pred_fallthru
        _
      %p354 = scmp.lt.s32.totalorder %s23, 2
      // Predicated region
      $region57: #{tpu_custom_call.1} parent=5 // pred_check
        %p355 = pneg %p354
      $region58: #{tpu_custom_call.1} parent=5 // pred_check_branch
        %357 = sbr.rel (%p355) target = $region60
      $region59: #{tpu_custom_call.1} parent=5 // pred_region
        // Predicated region
        $region61: #{tpu_custom_call.1} parent=59 // pred_check
          %p358 = pneg %p43
        $region62: #{tpu_custom_call.1} parent=59 // pred_check_branch
          %360 = sbr.rel (%p358) target = $region64
        $region63: #{tpu_custom_call.1} parent=59 // pred_region
          %p361 = scmp.lt.s32.totalorder %s23, 1
          %s362 = scalar_select %p361, %s23, 1
          %s363 = smul.addr %s362, 2
          %s364 = smul.addr %s363, 8
          %s365 = scalar_lea.vmem %s0, %s364
        $region64: #{tpu_custom_call.1} parent=59 // pred_fallthru
          _
      $region60: #{tpu_custom_call.1} parent=5 // pred_fallthru
        _
      %p366 = scmp.le.s32.totalorder 1, %s23
      %p367 = scmp.lt.s32.totalorder %s23, 3
      %p368 = pnand %p366, %p367
      %p369 = pneg %p368
      // Predicated region
      $region65: #{tpu_custom_call.1} parent=5 // pred_check
        _
      $region66: #{tpu_custom_call.1} parent=5 // pred_check_branch
        %371 = sbr.rel (%p368) target = $region68
      $region67: #{tpu_custom_call.1} parent=5 // pred_region
        %s372 = ssub.s32 %s23, 1
        %p373 = scmp.lt.s32.totalorder %s28, 1
        %s374 = scalar_select %p373, %s28, 1
        %s375 = smul.addr %s374, 2
        %s376 = smul.addr %s375, 8
        %s377 = scalar_lea.vmem %s0, %s376
        %p378 = pneg %p49
        %p379 = pneg %p46
        %p380 = pneg %p70
        %p381 = pneg %p67
        %p382 = pneg %p91
        %p383 = pneg %p88
        %p384 = pneg %p112
        %p385 = pneg %p109
        %p386 = pneg %p133
        %p387 = pneg %p130
        %p388 = pneg %p154
        %p389 = pneg %p151
        %p390 = pneg %p175
        %p391 = pneg %p172
        %p392 = pneg %p196
        %p393 = pneg %p193
        %p394 = pneg %p217
        %p395 = pneg %p214
        %p396 = pneg %p238
        %p397 = pneg %p235
        %p398 = pneg %p259
        %p399 = pneg %p256
        %p400 = pneg %p280
        %p401 = pneg %p277
        %p402 = pneg %p306
        %p403 = pneg %p303
        %s404 = sand.u32 %s293, 1
        %s405 = scalar_lea.sflag [#allocation4], %s404
        %s406 = sand.u32 %s293, 1
        %s407 = scalar_lea.vmem [#allocation3], %s406
        %p408 = scmp.lt.s32.totalorder %s28, 1
        %s409 = scalar_select %p408, %s28, 1
        %s410 = smul.addr %s409, 2
        %s411 = smul.addr %s410, 8
        %s412 = scalar_lea.vmem %s0, %s411
        %v413 = vld [vmem:[%s412] sm:$0xff]
        %v414 = vld [vmem:[%s412 + $0x8] sm:$0xff]
        %v415 = vld [vmem:[%s1] sm:$0xff]
        %v416 = vld [vmem:[%s1 + $0x8] sm:$0xff]
        %v417 = vld [vmem:[%s1 + $0x10] sm:$0xff]
        %v418 = vld [vmem:[%s1 + $0x18] sm:$0xff]
        %v419 = vld [vmem:[%s1 + $0x20] sm:$0xff]
        %v420 = vld [vmem:[%s1 + $0x28] sm:$0xff]
        %v421 = vld [vmem:[%s1 + $0x30] sm:$0xff]
        %v422 = vld [vmem:[%s1 + $0x38] sm:$0xff]
        %v423 = vld [vmem:[%s2] sm:$0xff]
        %v424 = vld [vmem:[%s2 + $0x8] sm:$0xff]
        %v425 = vld [vmem:[%s2 + $0x10] sm:$0xff]
        %v426 = vld [vmem:[%s2 + $0x18] sm:$0xff]
        %v427 = vld [vmem:[%s2 + $0x20] sm:$0xff]
        %v428 = vld [vmem:[%s2 + $0x28] sm:$0xff]
        %v429 = vld [vmem:[%s2 + $0x30] sm:$0xff]
        %v430 = vld [vmem:[%s2 + $0x38] sm:$0xff]
        %432 = vset.pattern.permute.xlu0 0
        %433 = vperm.xlu0 %432, %v423
        %v434 = vpop.permute.xlu0 %433
        %437 = vset.pattern.permute.xlu0 0
        %438 = vperm.xlu0 %437, %v424
        %v439 = vpop.permute.xlu0 %438
        %442 = vset.pattern.permute.xlu0 0
        %443 = vperm.xlu0 %442, %v425
        %v444 = vpop.permute.xlu0 %443
        %447 = vset.pattern.permute.xlu0 0
        %448 = vperm.xlu0 %447, %v426
        %v449 = vpop.permute.xlu0 %448
        %452 = vset.pattern.permute.xlu0 0
        %453 = vperm.xlu0 %452, %v427
        %v454 = vpop.permute.xlu0 %453
        %457 = vset.pattern.permute.xlu0 0
        %458 = vperm.xlu0 %457, %v428
        %v459 = vpop.permute.xlu0 %458
        %462 = vset.pattern.permute.xlu0 0
        %463 = vperm.xlu0 %462, %v429
        %v464 = vpop.permute.xlu0 %463
        %467 = vset.pattern.permute.xlu0 0
        %468 = vperm.xlu0 %467, %v430
        %v469 = vpop.permute.xlu0 %468
        %vm471 = vcmask 130048
        %v473 = vsel %vm471, %v415, 0
        %v476 = vsel %vm471, %v416, 0
        %v479 = vsel %vm471, %v417, 0
        %v482 = vsel %vm471, %v418, 0
        %v485 = vsel %vm471, %v419, 0
        %v488 = vsel %vm471, %v420, 0
        %v491 = vsel %vm471, %v421, 0
        %v494 = vsel %vm471, %v422, 0
        %496 = vmatprep.subr.mxu0 0.0
        %497 = vmatpush1.msra.mxu0 0.0
        %498 = vmatprep.subr.mxu0 0.0
        %499 = vmatpush1.msra.mxu0 0.0
        %500 = vmatprep.subr.mxu0 0.0
        %501 = vmatpush1.msra.mxu0 0.0
        %502 = vmatprep.subr.mxu0 0.0
        %503 = vmatpush1.msra.mxu0 0.0
        %504 = vmatprep.subr.mxu0 0.0
        %505 = vmatpush1.msra.mxu0 0.0
        %506 = vmatprep.subr.mxu0 0.0
        %507 = vmatpush1.msra.mxu0 0.0
        %508 = vmatprep.subr.mxu0 0.0
        %509 = vmatpush1.msra.mxu0 0.0
        %510 = vmatprep.subr.mxu0 0.0
        %511 = vmatpush1.msra.mxu0 0.0
        %512 = vmatprep.subr.mxu0 0.0
        %513 = vmatpush1.msra.mxu0 0.0
        %514 = vmatprep.subr.mxu0 0.0
        %515 = vmatpush1.msra.mxu0 0.0
        %516 = vmatprep.subr.mxu0 0.0
        %517 = vmatpush1.msra.mxu0 0.0
        %518 = vmatprep.subr.mxu0 0.0
        %519 = vmatpush1.msra.mxu0 0.0
        %520 = vmatprep.subr.mxu0 0.0
        %521 = vmatpush1.msra.mxu0 0.0
        %522 = vmatprep.subr.mxu0 0.0
        %523 = vmatpush1.msra.mxu0 0.0
        %524 = vmatprep.subr.mxu0 0.0
        %525 = vmatpush1.msra.mxu0 %v414
        %526 = vmatprep.subr.mxu0 0.0
        %527 = vmatpush1.msra.mxu0 %v413
        %528 = vmatprep.subr.mxu0 0.0
        %529 = vmatpush2.msra.mxu0 0.0
        %530 = vmatprep.subr.mxu0 0.0
        %531 = vmatpush2.msra.mxu0 0.0
        %532 = vmatprep.subr.mxu0 0.0
        %533 = vmatpush2.msra.mxu0 0.0
        %534 = vmatprep.subr.mxu0 0.0
        %535 = vmatpush2.msra.mxu0 0.0
        %536 = vmatprep.subr.mxu0 0.0
        %537 = vmatpush2.msra.mxu0 0.0
        %538 = vmatprep.subr.mxu0 0.0
        %539 = vmatpush2.msra.mxu0 0.0
        %540 = vmatprep.subr.mxu0 0.0
        %541 = vmatpush2.msra.mxu0 0.0
        %542 = vmatprep.subr.mxu0 0.0
        %543 = vmatpush2.msra.mxu0 0.0
        %544 = vmatprep.subr.mxu0 0.0
        %545 = vmatpush2.msra.mxu0 0.0
        %546 = vmatprep.subr.mxu0 0.0
        %547 = vmatpush2.msra.mxu0 0.0
        %548 = vmatprep.subr.mxu0 0.0
        %549 = vmatpush2.msra.mxu0 0.0
        %550 = vmatprep.subr.mxu0 0.0
        %551 = vmatpush2.msra.mxu0 0.0
        %552 = vmatprep.subr.mxu0 0.0
        %553 = vmatpush2.msra.mxu0 0.0
        %554 = vmatprep.subr.mxu0 0.0
        %555 = vmatpush2.msra.mxu0 0.0
        %556 = vmatprep.subr.mxu0 0.0
        %557 = vmatpush2.msra.mxu0 0.0
        %558 = vmatprep.subr.mxu0 0.0
        %559 = vmatpush2.msra.mxu0 0.0
        %560 = vmatprep.mubr.f32.mxu0 0.0
        %561 = vmatmul.mubr.f32.gmra.mxu0 %v473
        %v562 = vpop.f32.mrf.mxu0
        %v563 = vadd.f32 %v434, %v562
        %v564 = vpop.f32.mrf.mxu0
        %565 = vmatprep.mubr.f32.mxu0 0.0
        %566 = vmatmul.mubr.f32.gmra.mxu0 %v476
        %v567 = vpop.f32.mrf.mxu0
        %v568 = vadd.f32 %v439, %v567
        %v569 = vpop.f32.mrf.mxu0
        %570 = vmatprep.mubr.f32.mxu0 0.0
        %571 = vmatmul.mubr.f32.gmra.mxu0 %v479
        %v572 = vpop.f32.mrf.mxu0
        %v573 = vadd.f32 %v444, %v572
        %v574 = vpop.f32.mrf.mxu0
        %575 = vmatprep.mubr.f32.mxu0 0.0
        %576 = vmatmul.mubr.f32.gmra.mxu0 %v482
        %v577 = vpop.f32.mrf.mxu0
        %v578 = vadd.f32 %v449, %v577
        %v579 = vpop.f32.mrf.mxu0
        %580 = vmatprep.mubr.f32.mxu0 0.0
        %581 = vmatmul.mubr.f32.gmra.mxu0 %v485
        %v582 = vpop.f32.mrf.mxu0
        %v583 = vadd.f32 %v454, %v582
        %v584 = vpop.f32.mrf.mxu0
        %585 = vmatprep.mubr.f32.mxu0 0.0
        %586 = vmatmul.mubr.f32.gmra.mxu0 %v488
        %v587 = vpop.f32.mrf.mxu0
        %v588 = vadd.f32 %v459, %v587
        %v589 = vpop.f32.mrf.mxu0
        %590 = vmatprep.mubr.f32.mxu0 0.0
        %591 = vmatmul.mubr.f32.gmra.mxu0 %v491
        %v592 = vpop.f32.mrf.mxu0
        %v593 = vadd.f32 %v464, %v592
        %v594 = vpop.f32.mrf.mxu0
        %595 = vmatprep.mubr.f32.mxu0 0.0
        %596 = vmatmul.mubr.f32.gmra.mxu0 %v494
        %v597 = vpop.f32.mrf.mxu0
        %v598 = vadd.f32 %v469, %v597
        %v599 = vpop.f32.mrf.mxu0
        %600 = vdwg.mxu0
        %v601 = vmax.f32 %v563, 0.0
        %v602 = vmax.f32 %v568, 0.0
        %v603 = vmax.f32 %v573, 0.0
        %v604 = vmax.f32 %v578, 0.0
        %v605 = vmax.f32 %v583, 0.0
        %v606 = vmax.f32 %v588, 0.0
        %v607 = vmax.f32 %v593, 0.0
        %v608 = vmax.f32 %v598, 0.0
        %v609 = vld [vmem:[%s3] sm:$0xff]
        %v610 = vld [vmem:[%s3 + $0x8] sm:$0xff]
        %v611 = vld [vmem:[%s3 + $0x10] sm:$0xff]
        %v612 = vld [vmem:[%s3 + $0x18] sm:$0xff]
        %v613 = vld [vmem:[%s4] sm:$0xff]
        %v614 = vld [vmem:[%s4 + $0x8] sm:$0xff]
        %v615 = vld [vmem:[%s4 + $0x10] sm:$0xff]
        %v616 = vld [vmem:[%s4 + $0x18] sm:$0xff]
        %618 = vset.pattern.permute.xlu0 0
        %619 = vperm.xlu0 %618, %v613
        %v620 = vpop.permute.xlu0 %619
        %623 = vset.pattern.permute.xlu0 0
        %624 = vperm.xlu0 %623, %v614
        %v625 = vpop.permute.xlu0 %624
        %628 = vset.pattern.permute.xlu0 0
        %629 = vperm.xlu0 %628, %v615
        %v630 = vpop.permute.xlu0 %629
        %633 = vset.pattern.permute.xlu0 0
        %634 = vperm.xlu0 %633, %v616
        %v635 = vpop.permute.xlu0 %634
        %vm637 = vcmask 523264
        %v639 = vsel %vm637, %v609, 0
        %v642 = vsel %vm637, %v610, 0
        %v645 = vsel %vm637, %v611, 0
        %v648 = vsel %vm637, %v612, 0
        %650 = vmatprep.subr.mxu0 0.0
        %651 = vmatpush1.msra.mxu0 0.0
        %652 = vmatprep.subr.mxu0 0.0
        %653 = vmatpush1.msra.mxu0 0.0
        %654 = vmatprep.subr.mxu0 0.0
        %655 = vmatpush1.msra.mxu0 0.0
        %656 = vmatprep.subr.mxu0 0.0
        %657 = vmatpush1.msra.mxu0 0.0
        %658 = vmatprep.subr.mxu0 0.0
        %659 = vmatpush1.msra.mxu0 0.0
        %660 = vmatprep.subr.mxu0 0.0
        %661 = vmatpush1.msra.mxu0 0.0
        %662 = vmatprep.subr.mxu0 0.0
        %663 = vmatpush1.msra.mxu0 0.0
        %664 = vmatprep.subr.mxu0 0.0
        %665 = vmatpush1.msra.mxu0 0.0
        %666 = vmatprep.subr.mxu0 0.0
        %667 = vmatpush1.msra.mxu0 %v608
        %668 = vmatprep.subr.mxu0 0.0
        %669 = vmatpush1.msra.mxu0 %v607
        %670 = vmatprep.subr.mxu0 0.0
        %671 = vmatpush1.msra.mxu0 %v606
        %672 = vmatprep.subr.mxu0 0.0
        %673 = vmatpush1.msra.mxu0 %v605
        %674 = vmatprep.subr.mxu0 0.0
        %675 = vmatpush1.msra.mxu0 %v604
        %676 = vmatprep.subr.mxu0 0.0
        %677 = vmatpush1.msra.mxu0 %v603
        %678 = vmatprep.subr.mxu0 0.0
        %679 = vmatpush1.msra.mxu0 %v602
        %680 = vmatprep.subr.mxu0 0.0
        %681 = vmatpush1.msra.mxu0 %v601
        %682 = vmatprep.subr.mxu0 0.0
        %683 = vmatpush2.msra.mxu0 0.0
        %684 = vmatprep.subr.mxu0 0.0
        %685 = vmatpush2.msra.mxu0 0.0
        %686 = vmatprep.subr.mxu0 0.0
        %687 = vmatpush2.msra.mxu0 0.0
        %688 = vmatprep.subr.mxu0 0.0
        %689 = vmatpush2.msra.mxu0 0.0
        %690 = vmatprep.subr.mxu0 0.0
        %691 = vmatpush2.msra.mxu0 0.0
        %692 = vmatprep.subr.mxu0 0.0
        %693 = vmatpush2.msra.mxu0 0.0
        %694 = vmatprep.subr.mxu0 0.0
        %695 = vmatpush2.msra.mxu0 0.0
        %696 = vmatprep.subr.mxu0 0.0
        %697 = vmatpush2.msra.mxu0 0.0
        %698 = vmatprep.subr.mxu0 0.0
        %699 = vmatpush2.msra.mxu0 0.0
        %700 = vmatprep.subr.mxu0 0.0
        %701 = vmatpush2.msra.mxu0 0.0
        %702 = vmatprep.subr.mxu0 0.0
        %703 = vmatpush2.msra.mxu0 0.0
        %704 = vmatprep.subr.mxu0 0.0
        %705 = vmatpush2.msra.mxu0 0.0
        %706 = vmatprep.subr.mxu0 0.0
        %707 = vmatpush2.msra.mxu0 0.0
        %708 = vmatprep.subr.mxu0 0.0
        %709 = vmatpush2.msra.mxu0 0.0
        %710 = vmatprep.subr.mxu0 0.0
        %711 = vmatpush2.msra.mxu0 0.0
        %712 = vmatprep.subr.mxu0 0.0
        %713 = vmatpush2.msra.mxu0 0.0
        %714 = vmatprep.mubr.f32.mxu0 0.0
        %715 = vmatmul.mubr.f32.gmra.mxu0 %v639
        %v716 = vpop.f32.mrf.mxu0
        %v717 = vadd.f32 %v620, %v716
        %v718 = vpop.f32.mrf.mxu0
        %719 = vmatprep.mubr.f32.mxu0 0.0
        %720 = vmatmul.mubr.f32.gmra.mxu0 %v642
        %v721 = vpop.f32.mrf.mxu0
        %v722 = vadd.f32 %v625, %v721
        %v723 = vpop.f32.mrf.mxu0
        %724 = vmatprep.mubr.f32.mxu0 0.0
        %725 = vmatmul.mubr.f32.gmra.mxu0 %v645
        %v726 = vpop.f32.mrf.mxu0
        %v727 = vadd.f32 %v630, %v726
        %v728 = vpop.f32.mrf.mxu0
        %729 = vmatprep.mubr.f32.mxu0 0.0
        %730 = vmatmul.mubr.f32.gmra.mxu0 %v648
        %v731 = vpop.f32.mrf.mxu0
        %v732 = vadd.f32 %v635, %v731
        %v733 = vpop.f32.mrf.mxu0
        %734 = vdwg.mxu0
        %vm735 = vcmask 64512
        %v736 = vsel %vm735, %v717, 0.0
        %737 = vadd.xlane.f32.xlu0 %v736
        %v738 = vpop.xlane.xlu0 %737
        %v739 = vsel %vm735, %v722, 0.0
        %740 = vadd.xlane.f32.xlu0 %v739
        %v741 = vpop.xlane.xlu0 %740
        %v742 = vsel %vm735, %v727, 0.0
        %743 = vadd.xlane.f32.xlu0 %v742
        %v744 = vpop.xlane.xlu0 %743
        %v745 = vsel %vm735, %v732, 0.0
        %746 = vadd.xlane.f32.xlu0 %v745
        %v747 = vpop.xlane.xlu0 %746
        %v748 = vrcp.pop 8.0
        %v749 = vmul.f32 %v738, %v748
        %v750 = vmul.f32 %v741, %v748
        %v751 = vmul.f32 %v744, %v748
        %v752 = vmul.f32 %v747, %v748
        %v753 = vsub.f32 %v717, %v749
        %v754 = vsub.f32 %v722, %v750
        %v755 = vsub.f32 %v727, %v751
        %v756 = vsub.f32 %v732, %v752
        %v757 = vmul.f32 %v753, %v753
        %v758 = vmul.f32 %v754, %v754
        %v759 = vmul.f32 %v755, %v755
        %v760 = vmul.f32 %v756, %v756
        %v761 = vsel %vm735, %v757, 0.0
        %762 = vadd.xlane.f32.xlu0 %v761
        %v763 = vpop.xlane.xlu0 %762
        %v764 = vsel %vm735, %v758, 0.0
        %765 = vadd.xlane.f32.xlu0 %v764
        %v766 = vpop.xlane.xlu0 %765
        %v767 = vsel %vm735, %v759, 0.0
        %768 = vadd.xlane.f32.xlu0 %v767
        %v769 = vpop.xlane.xlu0 %768
        %v770 = vsel %vm735, %v760, 0.0
        %771 = vadd.xlane.f32.xlu0 %v770
        %v772 = vpop.xlane.xlu0 %771
        %v773 = vmul.f32 %v763, %v748
        %v774 = vmul.f32 %v766, %v748
        %v775 = vmul.f32 %v769, %v748
        %v776 = vmul.f32 %v772, %v748
        %v777 = vadd.f32 %v773, 1e-05
        %v778 = vadd.f32 %v774, 1e-05
        %v779 = vadd.f32 %v775, 1e-05
        %v780 = vadd.f32 %v776, 1e-05
        %v781 = vrsqrt.pop %v777
        %v782 = vrsqrt.pop %v778
        %v783 = vrsqrt.pop %v779
        %v784 = vrsqrt.pop %v780
        %v785 = vmul.f32 %v753, %v781
        %v786 = vmul.f32 %v754, %v782
        %v787 = vmul.f32 %v755, %v783
        %v788 = vmul.f32 %v756, %v784
        %789 = vxpose.xlu0.b32.start [1/16] %v785, 128
        %790 = vxpose.xlu0.b32.cont [2/16] %v786, 128
        %791 = vxpose.xlu0.b32.cont [3/16] %v787, 128
        %792 = vxpose.xlu0.b32.cont [4/16] %v788, 128
        %793 = vxpose.xlu0.b32.cont [5/16] 0.0, 128
        %794 = vxpose.xlu0.b32.cont [6/16] 0.0, 128
        %795 = vxpose.xlu0.b32.cont [7/16] 0.0, 128
        %796 = vxpose.xlu0.b32.cont [8/16] 0.0, 128
        %797 = vxpose.xlu0.b32.cont [9/16] 0.0, 128
        %798 = vxpose.xlu0.b32.cont [10/16] 0.0, 128
        %799 = vxpose.xlu0.b32.cont [11/16] 0.0, 128
        %800 = vxpose.xlu0.b32.cont [12/16] 0.0, 128
        %801 = vxpose.xlu0.b32.cont [13/16] 0.0, 128
        %802 = vxpose.xlu0.b32.cont [14/16] 0.0, 128
        %803 = vxpose.xlu0.b32.cont [15/16] 0.0, 128
        %804 = vxpose.xlu0.b32.end [16/16] 0.0, 128
        %v805 = vpop.trf.xlu0
        %v806 = vpop.trf.xlu0
        %v807 = vpop.trf.xlu0
        %v808 = vpop.trf.xlu0
        %v809 = vpop.trf.xlu0
        %v810 = vpop.trf.xlu0
        %v811 = vpop.trf.xlu0
        %v812 = vpop.trf.xlu0
        %v813 = vpop.trf.xlu0
        %v814 = vpop.trf.xlu0
        %v815 = vpop.trf.xlu0
        %v816 = vpop.trf.xlu0
        %v817 = vpop.trf.xlu0
        %v818 = vpop.trf.xlu0
        %v819 = vpop.trf.xlu0
        %v820 = vpop.trf.xlu0
        %v821 = vld [vmem:[%s5] sm:$0xff]
        %v822 = vld [vmem:[%s5 + $0x8] sm:$0xff]
        %v823 = vld [vmem:[%s5 + $0x10] sm:$0xff]
        %v824 = vld [vmem:[%s5 + $0x18] sm:$0xff]
        %s825 = scalar_lea.vmem %s5, 32
        %v826 = vld [vmem:[%s825] sm:$0xff]
        %v827 = vld [vmem:[%s825 + $0x8] sm:$0xff]
        %v828 = vld [vmem:[%s825 + $0x10] sm:$0xff]
        %v829 = vld [vmem:[%s825 + $0x18] sm:$0xff]
        %s830 = scalar_lea.vmem %s5, 64
        %v831 = vld [vmem:[%s830] sm:$0xff]
        %v832 = vld [vmem:[%s830 + $0x8] sm:$0xff]
        %v833 = vld [vmem:[%s830 + $0x10] sm:$0xff]
        %v834 = vld [vmem:[%s830 + $0x18] sm:$0xff]
        %s835 = scalar_lea.vmem %s5, 96
        %v836 = vld [vmem:[%s835] sm:$0xff]
        %v837 = vld [vmem:[%s835 + $0x8] sm:$0xff]
        %v838 = vld [vmem:[%s835 + $0x10] sm:$0xff]
        %v839 = vld [vmem:[%s835 + $0x18] sm:$0xff]
        %v840 = vld [vmem:[%s8] sm:$0xff]
        %v841 = vld [vmem:[%s8 + $0x8] sm:$0x1]
        %v842 = vld [vmem:[%s6] sm:$0xff]
        %v843 = vld [vmem:[%s6 + $0x8] sm:$0xff]
        %v844 = vld [vmem:[%s6 + $0x10] sm:$0xff]
        %v845 = vld [vmem:[%s6 + $0x18] sm:$0xff]
        %v846 = vld [vmem:[%s7] sm:$0xff]
        %v847 = vld [vmem:[%s7 + $0x8] sm:$0xff]
        %v848 = vld [vmem:[%s7 + $0x10] sm:$0xff]
        %v849 = vld [vmem:[%s7 + $0x18] sm:$0xff]
        %v850 = vld [vmem:[%s7 + $0x20] sm:$0xff]
        %v851 = vld [vmem:[%s7 + $0x28] sm:$0xff]
        %v852 = vld [vmem:[%s7 + $0x30] sm:$0xff]
        %v853 = vld [vmem:[%s7 + $0x38] sm:$0xff]
        %v854 = vld [vmem:[%s9] sm:$0x1]
        %v855 = vlaneseq
        %v856 = vshrl.u32 %v855, 7
        %v857 = vsub.s32 0, %v856
        %v858 = vrot.slane %v840, %v857
        %vm859 = vcmask 261120
        %v861 = vsel %vm859, %v805, 0
        %863 = vmatprep.subr.mxu0 0.0
        %864 = vmatpush1.msra.mxu0 0.0
        %865 = vmatprep.subr.mxu0 0.0
        %866 = vmatpush1.msra.mxu0 0.0
        %867 = vmatprep.subr.mxu0 0.0
        %868 = vmatpush1.msra.mxu0 0.0
        %869 = vmatprep.subr.mxu0 0.0
        %870 = vmatpush1.msra.mxu0 0.0
        %871 = vmatprep.subr.mxu0 0.0
        %872 = vmatpush1.msra.mxu0 0.0
        %873 = vmatprep.subr.mxu0 0.0
        %874 = vmatpush1.msra.mxu0 0.0
        %875 = vmatprep.subr.mxu0 0.0
        %876 = vmatpush1.msra.mxu0 0.0
        %877 = vmatprep.subr.mxu0 0.0
        %878 = vmatpush1.msra.mxu0 0.0
        %879 = vmatprep.subr.mxu0 0.0
        %880 = vmatpush1.msra.mxu0 0.0
        %881 = vmatprep.subr.mxu0 0.0
        %882 = vmatpush1.msra.mxu0 0.0
        %883 = vmatprep.subr.mxu0 0.0
        %884 = vmatpush1.msra.mxu0 0.0
        %885 = vmatprep.subr.mxu0 0.0
        %886 = vmatpush1.msra.mxu0 0.0
        %887 = vmatprep.subr.mxu0 0.0
        %888 = vmatpush1.msra.mxu0 %v824
        %889 = vmatprep.subr.mxu0 0.0
        %890 = vmatpush1.msra.mxu0 %v823
        %891 = vmatprep.subr.mxu0 0.0
        %892 = vmatpush1.msra.mxu0 %v822
        %893 = vmatprep.subr.mxu0 0.0
        %894 = vmatpush1.msra.mxu0 %v821
        %895 = vmatprep.subr.mxu0 0.0
        %896 = vmatpush2.msra.mxu0 0.0
        %897 = vmatprep.subr.mxu0 0.0
        %898 = vmatpush2.msra.mxu0 0.0
        %899 = vmatprep.subr.mxu0 0.0
        %900 = vmatpush2.msra.mxu0 0.0
        %901 = vmatprep.subr.mxu0 0.0
        %902 = vmatpush2.msra.mxu0 0.0
        %903 = vmatprep.subr.mxu0 0.0
        %904 = vmatpush2.msra.mxu0 0.0
        %905 = vmatprep.subr.mxu0 0.0
        %906 = vmatpush2.msra.mxu0 0.0
        %907 = vmatprep.subr.mxu0 0.0
        %908 = vmatpush2.msra.mxu0 0.0
        %909 = vmatprep.subr.mxu0 0.0
        %910 = vmatpush2.msra.mxu0 0.0
        %911 = vmatprep.subr.mxu0 0.0
        %912 = vmatpush2.msra.mxu0 0.0
        %913 = vmatprep.subr.mxu0 0.0
        %914 = vmatpush2.msra.mxu0 0.0
        %915 = vmatprep.subr.mxu0 0.0
        %916 = vmatpush2.msra.mxu0 0.0
        %917 = vmatprep.subr.mxu0 0.0
        %918 = vmatpush2.msra.mxu0 0.0
        %919 = vmatprep.subr.mxu0 0.0
        %920 = vmatpush2.msra.mxu0 0.0
        %921 = vmatprep.subr.mxu0 0.0
        %922 = vmatpush2.msra.mxu0 0.0
        %923 = vmatprep.subr.mxu0 0.0
        %924 = vmatpush2.msra.mxu0 0.0
        %925 = vmatprep.subr.mxu0 0.0
        %926 = vmatpush2.msra.mxu0 0.0
        %927 = vmatprep.mubr.f32.mxu0 0.0
        %928 = vmatmul.mubr.f32.gmra.mxu0 %v861
        %v929 = vpop.f32.mrf.mxu0
        %v930 = vadd.f32 %v858, %v929
        %v931 = vpop.f32.mrf.mxu0
        %932 = vdwg.mxu0
        %v933 = vlaneseq
        %v934 = vshrl.u32 %v933, 7
        %v935 = vsub.s32 1, %v934
        %v936 = vrot.slane %v840, %v935
        %937 = vmatprep.subr.mxu0 0.0
        %938 = vmatpush1.msra.mxu0 0.0
        %939 = vmatprep.subr.mxu0 0.0
        %940 = vmatpush1.msra.mxu0 0.0
        %941 = vmatprep.subr.mxu0 0.0
        %942 = vmatpush1.msra.mxu0 0.0
        %943 = vmatprep.subr.mxu0 0.0
        %944 = vmatpush1.msra.mxu0 0.0
        %945 = vmatprep.subr.mxu0 0.0
        %946 = vmatpush1.msra.mxu0 0.0
        %947 = vmatprep.subr.mxu0 0.0
        %948 = vmatpush1.msra.mxu0 0.0
        %949 = vmatprep.subr.mxu0 0.0
        %950 = vmatpush1.msra.mxu0 0.0
        %951 = vmatprep.subr.mxu0 0.0
        %952 = vmatpush1.msra.mxu0 0.0
        %953 = vmatprep.subr.mxu0 0.0
        %954 = vmatpush1.msra.mxu0 0.0
        %955 = vmatprep.subr.mxu0 0.0
        %956 = vmatpush1.msra.mxu0 0.0
        %957 = vmatprep.subr.mxu0 0.0
        %958 = vmatpush1.msra.mxu0 0.0
        %959 = vmatprep.subr.mxu0 0.0
        %960 = vmatpush1.msra.mxu0 0.0
        %961 = vmatprep.subr.mxu0 0.0
        %962 = vmatpush1.msra.mxu0 %v829
        %963 = vmatprep.subr.mxu0 0.0
        %964 = vmatpush1.msra.mxu0 %v828
        %965 = vmatprep.subr.mxu0 0.0
        %966 = vmatpush1.msra.mxu0 %v827
        %967 = vmatprep.subr.mxu0 0.0
        %968 = vmatpush1.msra.mxu0 %v826
        %969 = vmatprep.subr.mxu0 0.0
        %970 = vmatpush2.msra.mxu0 0.0
        %971 = vmatprep.subr.mxu0 0.0
        %972 = vmatpush2.msra.mxu0 0.0
        %973 = vmatprep.subr.mxu0 0.0
        %974 = vmatpush2.msra.mxu0 0.0
        %975 = vmatprep.subr.mxu0 0.0
        %976 = vmatpush2.msra.mxu0 0.0
        %977 = vmatprep.subr.mxu0 0.0
        %978 = vmatpush2.msra.mxu0 0.0
        %979 = vmatprep.subr.mxu0 0.0
        %980 = vmatpush2.msra.mxu0 0.0
        %981 = vmatprep.subr.mxu0 0.0
        %982 = vmatpush2.msra.mxu0 0.0
        %983 = vmatprep.subr.mxu0 0.0
        %984 = vmatpush2.msra.mxu0 0.0
        %985 = vmatprep.subr.mxu0 0.0
        %986 = vmatpush2.msra.mxu0 0.0
        %987 = vmatprep.subr.mxu0 0.0
        %988 = vmatpush2.msra.mxu0 0.0
        %989 = vmatprep.subr.mxu0 0.0
        %990 = vmatpush2.msra.mxu0 0.0
        %991 = vmatprep.subr.mxu0 0.0
        %992 = vmatpush2.msra.mxu0 0.0
        %993 = vmatprep.subr.mxu0 0.0
        %994 = vmatpush2.msra.mxu0 0.0
        %995 = vmatprep.subr.mxu0 0.0
        %996 = vmatpush2.msra.mxu0 0.0
        %997 = vmatprep.subr.mxu0 0.0
        %998 = vmatpush2.msra.mxu0 0.0
        %999 = vmatprep.subr.mxu0 0.0
        %1000 = vmatpush2.msra.mxu0 0.0
        %1001 = vmatprep.mubr.f32.mxu0 0.0
        %1002 = vmatmul.mubr.f32.gmra.mxu0 %v861
        %v1003 = vpop.f32.mrf.mxu0
        %v1004 = vadd.f32 %v936, %v1003
        %v1005 = vpop.f32.mrf.mxu0
        %1006 = vdwg.mxu0
        %v1007 = vlaneseq
        %v1008 = vshrl.u32 %v1007, 7
        %v1009 = vsub.s32 2, %v1008
        %v1010 = vrot.slane %v840, %v1009
        %1011 = vmatprep.subr.mxu0 0.0
        %1012 = vmatpush1.msra.mxu0 0.0
        %1013 = vmatprep.subr.mxu0 0.0
        %1014 = vmatpush1.msra.mxu0 0.0
        %1015 = vmatprep.subr.mxu0 0.0
        %1016 = vmatpush1.msra.mxu0 0.0
        %1017 = vmatprep.subr.mxu0 0.0
        %1018 = vmatpush1.msra.mxu0 0.0
        %1019 = vmatprep.subr.mxu0 0.0
        %1020 = vmatpush1.msra.mxu0 0.0
        %1021 = vmatprep.subr.mxu0 0.0
        %1022 = vmatpush1.msra.mxu0 0.0
        %1023 = vmatprep.subr.mxu0 0.0
        %1024 = vmatpush1.msra.mxu0 0.0
        %1025 = vmatprep.subr.mxu0 0.0
        %1026 = vmatpush1.msra.mxu0 0.0
        %1027 = vmatprep.subr.mxu0 0.0
        %1028 = vmatpush1.msra.mxu0 0.0
        %1029 = vmatprep.subr.mxu0 0.0
        %1030 = vmatpush1.msra.mxu0 0.0
        %1031 = vmatprep.subr.mxu0 0.0
        %1032 = vmatpush1.msra.mxu0 0.0
        %1033 = vmatprep.subr.mxu0 0.0
        %1034 = vmatpush1.msra.mxu0 0.0
        %1035 = vmatprep.subr.mxu0 0.0
        %1036 = vmatpush1.msra.mxu0 %v834
        %1037 = vmatprep.subr.mxu0 0.0
        %1038 = vmatpush1.msra.mxu0 %v833
        %1039 = vmatprep.subr.mxu0 0.0
        %1040 = vmatpush1.msra.mxu0 %v832
        %1041 = vmatprep.subr.mxu0 0.0
        %1042 = vmatpush1.msra.mxu0 %v831
        %1043 = vmatprep.subr.mxu0 0.0
        %1044 = vmatpush2.msra.mxu0 0.0
        %1045 = vmatprep.subr.mxu0 0.0
        %1046 = vmatpush2.msra.mxu0 0.0
        %1047 = vmatprep.subr.mxu0 0.0
        %1048 = vmatpush2.msra.mxu0 0.0
        %1049 = vmatprep.subr.mxu0 0.0
        %1050 = vmatpush2.msra.mxu0 0.0
        %1051 = vmatprep.subr.mxu0 0.0
        %1052 = vmatpush2.msra.mxu0 0.0
        %1053 = vmatprep.subr.mxu0 0.0
        %1054 = vmatpush2.msra.mxu0 0.0
        %1055 = vmatprep.subr.mxu0 0.0
        %1056 = vmatpush2.msra.mxu0 0.0
        %1057 = vmatprep.subr.mxu0 0.0
        %1058 = vmatpush2.msra.mxu0 0.0
        %1059 = vmatprep.subr.mxu0 0.0
        %1060 = vmatpush2.msra.mxu0 0.0
        %1061 = vmatprep.subr.mxu0 0.0
        %1062 = vmatpush2.msra.mxu0 0.0
        %1063 = vmatprep.subr.mxu0 0.0
        %1064 = vmatpush2.msra.mxu0 0.0
        %1065 = vmatprep.subr.mxu0 0.0
        %1066 = vmatpush2.msra.mxu0 0.0
        %1067 = vmatprep.subr.mxu0 0.0
        %1068 = vmatpush2.msra.mxu0 0.0
        %1069 = vmatprep.subr.mxu0 0.0
        %1070 = vmatpush2.msra.mxu0 0.0
        %1071 = vmatprep.subr.mxu0 0.0
        %1072 = vmatpush2.msra.mxu0 0.0
        %1073 = vmatprep.subr.mxu0 0.0
        %1074 = vmatpush2.msra.mxu0 0.0
        %1075 = vmatprep.mubr.f32.mxu0 0.0
        %1076 = vmatmul.mubr.f32.gmra.mxu0 %v861
        %v1077 = vpop.f32.mrf.mxu0
        %v1078 = vadd.f32 %v1010, %v1077
        %v1079 = vpop.f32.mrf.mxu0
        %1080 = vdwg.mxu0
        %1082 = vrot.lane.b32.xlu0 %v930, 120
        %v1083 = vpop.permute.xlu0 %1082
        %1084 = vrot.lane.b32.xlu0 %v930, 112
        %v1085 = vpop.permute.xlu0 %1084
        %1086 = vrot.lane.b32.xlu0 %v930, 104
        %v1087 = vpop.permute.xlu0 %1086
        %1089 = vrot.lane.b32.xlu0 %v1004, 120
        %v1090 = vpop.permute.xlu0 %1089
        %1091 = vrot.lane.b32.xlu0 %v1004, 112
        %v1092 = vpop.permute.xlu0 %1091
        %1093 = vrot.lane.b32.xlu0 %v1004, 104
        %v1094 = vpop.permute.xlu0 %1093
        %1096 = vrot.lane.b32.xlu0 %v1078, 120
        %v1097 = vpop.permute.xlu0 %1096
        %1099 = vrot.lane.b32.xlu0 %v1078, 112
        %v1100 = vpop.permute.xlu0 %1099
        %1102 = vrot.lane.b32.xlu0 %v1078, 104
        %v1103 = vpop.permute.xlu0 %1102
        %v1105 = vsel %vm735, %v930, 0
        %v1107 = vsel %vm735, %v1004, 0
        %1109 = vmatprep.subr.mxu0 0.0
        %1110 = vmatpush1.xpose.msra.mxu0 0.0
        %1111 = vmatprep.subr.mxu0 0.0
        %1112 = vmatpush1.xpose.msra.mxu0 0.0
        %1113 = vmatprep.subr.mxu0 0.0
        %1114 = vmatpush1.xpose.msra.mxu0 0.0
        %1115 = vmatprep.subr.mxu0 0.0
        %1116 = vmatpush1.xpose.msra.mxu0 0.0
        %1117 = vmatprep.subr.mxu0 0.0
        %1118 = vmatpush1.xpose.msra.mxu0 0.0
        %1119 = vmatprep.subr.mxu0 0.0
        %1120 = vmatpush1.xpose.msra.mxu0 0.0
        %1121 = vmatprep.subr.mxu0 0.0
        %1122 = vmatpush1.xpose.msra.mxu0 0.0
        %1123 = vmatprep.subr.mxu0 0.0
        %1124 = vmatpush1.xpose.msra.mxu0 0.0
        %1125 = vmatprep.subr.mxu0 0.0
        %1126 = vmatpush1.xpose.msra.mxu0 0.0
        %1127 = vmatprep.subr.mxu0 0.0
        %1128 = vmatpush1.xpose.msra.mxu0 0.0
        %1129 = vmatprep.subr.mxu0 0.0
        %1130 = vmatpush1.xpose.msra.mxu0 0.0
        %1131 = vmatprep.subr.mxu0 0.0
        %1132 = vmatpush1.xpose.msra.mxu0 0.0
        %1133 = vmatprep.subr.mxu0 0.0
        %1134 = vmatpush1.xpose.msra.mxu0 0.0
        %1135 = vmatprep.subr.mxu0 0.0
        %1136 = vmatpush1.xpose.msra.mxu0 0.0
        %1137 = vmatprep.subr.mxu0 0.0
        %1138 = vmatpush1.xpose.msra.mxu0 0.0
        %1139 = vmatprep.subr.mxu0 0.0
        %1140 = vmatpush1.xpose.msra.mxu0 %v1107
        %1141 = vmatprep.subr.mxu0 0.0
        %1142 = vmatpush2.xpose.msra.mxu0 0.0
        %1143 = vmatprep.subr.mxu0 0.0
        %1144 = vmatpush2.xpose.msra.mxu0 0.0
        %1145 = vmatprep.subr.mxu0 0.0
        %1146 = vmatpush2.xpose.msra.mxu0 0.0
        %1147 = vmatprep.subr.mxu0 0.0
        %1148 = vmatpush2.xpose.msra.mxu0 0.0
        %1149 = vmatprep.subr.mxu0 0.0
        %1150 = vmatpush2.xpose.msra.mxu0 0.0
        %1151 = vmatprep.subr.mxu0 0.0
        %1152 = vmatpush2.xpose.msra.mxu0 0.0
        %1153 = vmatprep.subr.mxu0 0.0
        %1154 = vmatpush2.xpose.msra.mxu0 0.0
        %1155 = vmatprep.subr.mxu0 0.0
        %1156 = vmatpush2.xpose.msra.mxu0 0.0
        %1157 = vmatprep.subr.mxu0 0.0
        %1158 = vmatpush2.xpose.msra.mxu0 0.0
        %1159 = vmatprep.subr.mxu0 0.0
        %1160 = vmatpush2.xpose.msra.mxu0 0.0
        %1161 = vmatprep.subr.mxu0 0.0
        %1162 = vmatpush2.xpose.msra.mxu0 0.0
        %1163 = vmatprep.subr.mxu0 0.0
        %1164 = vmatpush2.xpose.msra.mxu0 0.0
        %1165 = vmatprep.subr.mxu0 0.0
        %1166 = vmatpush2.xpose.msra.mxu0 0.0
        %1167 = vmatprep.subr.mxu0 0.0
        %1168 = vmatpush2.xpose.msra.mxu0 0.0
        %1169 = vmatprep.subr.mxu0 0.0
        %1170 = vmatpush2.xpose.msra.mxu0 0.0
        %1171 = vmatprep.subr.mxu0 0.0
        %1172 = vmatpush2.xpose.msra.mxu0 0.0
        %1173 = vmatprep.mubr.f32.mxu0 0.0
        %1174 = vmatmul.mubr.f32.gmra.mxu0 %v1105
        %v1175 = vpop.f32.mrf.mxu0
        %v1176 = vadd.f32 0.0, %v1175
        %v1177 = vpop.f32.mrf.mxu0
        %1178 = vdwg.mxu0
        %v1179 = vsel %vm735, %v1083, 0
        %v1181 = vsel %vm735, %v1090, 0
        %1183 = vmatprep.subr.mxu0 0.0
        %1184 = vmatpush1.xpose.msra.mxu0 0.0
        %1185 = vmatprep.subr.mxu0 0.0
        %1186 = vmatpush1.xpose.msra.mxu0 0.0
        %1187 = vmatprep.subr.mxu0 0.0
        %1188 = vmatpush1.xpose.msra.mxu0 0.0
        %1189 = vmatprep.subr.mxu0 0.0
        %1190 = vmatpush1.xpose.msra.mxu0 0.0
        %1191 = vmatprep.subr.mxu0 0.0
        %1192 = vmatpush1.xpose.msra.mxu0 0.0
        %1193 = vmatprep.subr.mxu0 0.0
        %1194 = vmatpush1.xpose.msra.mxu0 0.0
        %1195 = vmatprep.subr.mxu0 0.0
        %1196 = vmatpush1.xpose.msra.mxu0 0.0
        %1197 = vmatprep.subr.mxu0 0.0
        %1198 = vmatpush1.xpose.msra.mxu0 0.0
        %1199 = vmatprep.subr.mxu0 0.0
        %1200 = vmatpush1.xpose.msra.mxu0 0.0
        %1201 = vmatprep.subr.mxu0 0.0
        %1202 = vmatpush1.xpose.msra.mxu0 0.0
        %1203 = vmatprep.subr.mxu0 0.0
        %1204 = vmatpush1.xpose.msra.mxu0 0.0
        %1205 = vmatprep.subr.mxu0 0.0
        %1206 = vmatpush1.xpose.msra.mxu0 0.0
        %1207 = vmatprep.subr.mxu0 0.0
        %1208 = vmatpush1.xpose.msra.mxu0 0.0
        %1209 = vmatprep.subr.mxu0 0.0
        %1210 = vmatpush1.xpose.msra.mxu0 0.0
        %1211 = vmatprep.subr.mxu0 0.0
        %1212 = vmatpush1.xpose.msra.mxu0 0.0
        %1213 = vmatprep.subr.mxu0 0.0
        %1214 = vmatpush1.xpose.msra.mxu0 %v1181
        %1215 = vmatprep.subr.mxu0 0.0
        %1216 = vmatpush2.xpose.msra.mxu0 0.0
        %1217 = vmatprep.subr.mxu0 0.0
        %1218 = vmatpush2.xpose.msra.mxu0 0.0
        %1219 = vmatprep.subr.mxu0 0.0
        %1220 = vmatpush2.xpose.msra.mxu0 0.0
        %1221 = vmatprep.subr.mxu0 0.0
        %1222 = vmatpush2.xpose.msra.mxu0 0.0
        %1223 = vmatprep.subr.mxu0 0.0
        %1224 = vmatpush2.xpose.msra.mxu0 0.0
        %1225 = vmatprep.subr.mxu0 0.0
        %1226 = vmatpush2.xpose.msra.mxu0 0.0
        %1227 = vmatprep.subr.mxu0 0.0
        %1228 = vmatpush2.xpose.msra.mxu0 0.0
        %1229 = vmatprep.subr.mxu0 0.0
        %1230 = vmatpush2.xpose.msra.mxu0 0.0
        %1231 = vmatprep.subr.mxu0 0.0
        %1232 = vmatpush2.xpose.msra.mxu0 0.0
        %1233 = vmatprep.subr.mxu0 0.0
        %1234 = vmatpush2.xpose.msra.mxu0 0.0
        %1235 = vmatprep.subr.mxu0 0.0
        %1236 = vmatpush2.xpose.msra.mxu0 0.0
        %1237 = vmatprep.subr.mxu0 0.0
        %1238 = vmatpush2.xpose.msra.mxu0 0.0
        %1239 = vmatprep.subr.mxu0 0.0
        %1240 = vmatpush2.xpose.msra.mxu0 0.0
        %1241 = vmatprep.subr.mxu0 0.0
        %1242 = vmatpush2.xpose.msra.mxu0 0.0
        %1243 = vmatprep.subr.mxu0 0.0
        %1244 = vmatpush2.xpose.msra.mxu0 0.0
        %1245 = vmatprep.subr.mxu0 0.0
        %1246 = vmatpush2.xpose.msra.mxu0 0.0
        %1247 = vmatprep.mubr.f32.mxu0 0.0
        %1248 = vmatmul.mubr.f32.gmra.mxu0 %v1179
        %v1249 = vpop.f32.mrf.mxu0
        %v1250 = vadd.f32 0.0, %v1249
        %v1251 = vpop.f32.mrf.mxu0
        %1252 = vdwg.mxu0
        %v1253 = vsel %vm735, %v1085, 0
        %v1255 = vsel %vm735, %v1092, 0
        %1257 = vmatprep.subr.mxu0 0.0
        %1258 = vmatpush1.xpose.msra.mxu0 0.0
        %1259 = vmatprep.subr.mxu0 0.0
        %1260 = vmatpush1.xpose.msra.mxu0 0.0
        %1261 = vmatprep.subr.mxu0 0.0
        %1262 = vmatpush1.xpose.msra.mxu0 0.0
        %1263 = vmatprep.subr.mxu0 0.0
        %1264 = vmatpush1.xpose.msra.mxu0 0.0
        %1265 = vmatprep.subr.mxu0 0.0
        %1266 = vmatpush1.xpose.msra.mxu0 0.0
        %1267 = vmatprep.subr.mxu0 0.0
        %1268 = vmatpush1.xpose.msra.mxu0 0.0
        %1269 = vmatprep.subr.mxu0 0.0
        %1270 = vmatpush1.xpose.msra.mxu0 0.0
        %1271 = vmatprep.subr.mxu0 0.0
        %1272 = vmatpush1.xpose.msra.mxu0 0.0
        %1273 = vmatprep.subr.mxu0 0.0
        %1274 = vmatpush1.xpose.msra.mxu0 0.0
        %1275 = vmatprep.subr.mxu0 0.0
        %1276 = vmatpush1.xpose.msra.mxu0 0.0
        %1277 = vmatprep.subr.mxu0 0.0
        %1278 = vmatpush1.xpose.msra.mxu0 0.0
        %1279 = vmatprep.subr.mxu0 0.0
        %1280 = vmatpush1.xpose.msra.mxu0 0.0
        %1281 = vmatprep.subr.mxu0 0.0
        %1282 = vmatpush1.xpose.msra.mxu0 0.0
        %1283 = vmatprep.subr.mxu0 0.0
        %1284 = vmatpush1.xpose.msra.mxu0 0.0
        %1285 = vmatprep.subr.mxu0 0.0
        %1286 = vmatpush1.xpose.msra.mxu0 0.0
        %1287 = vmatprep.subr.mxu0 0.0
        %1288 = vmatpush1.xpose.msra.mxu0 %v1255
        %1289 = vmatprep.subr.mxu0 0.0
        %1290 = vmatpush2.xpose.msra.mxu0 0.0
        %1291 = vmatprep.subr.mxu0 0.0
        %1292 = vmatpush2.xpose.msra.mxu0 0.0
        %1293 = vmatprep.subr.mxu0 0.0
        %1294 = vmatpush2.xpose.msra.mxu0 0.0
        %1295 = vmatprep.subr.mxu0 0.0
        %1296 = vmatpush2.xpose.msra.mxu0 0.0
        %1297 = vmatprep.subr.mxu0 0.0
        %1298 = vmatpush2.xpose.msra.mxu0 0.0
        %1299 = vmatprep.subr.mxu0 0.0
        %1300 = vmatpush2.xpose.msra.mxu0 0.0
        %1301 = vmatprep.subr.mxu0 0.0
        %1302 = vmatpush2.xpose.msra.mxu0 0.0
        %1303 = vmatprep.subr.mxu0 0.0
        %1304 = vmatpush2.xpose.msra.mxu0 0.0
        %1305 = vmatprep.subr.mxu0 0.0
        %1306 = vmatpush2.xpose.msra.mxu0 0.0
        %1307 = vmatprep.subr.mxu0 0.0
        %1308 = vmatpush2.xpose.msra.mxu0 0.0
        %1309 = vmatprep.subr.mxu0 0.0
        %1310 = vmatpush2.xpose.msra.mxu0 0.0
        %1311 = vmatprep.subr.mxu0 0.0
        %1312 = vmatpush2.xpose.msra.mxu0 0.0
        %1313 = vmatprep.subr.mxu0 0.0
        %1314 = vmatpush2.xpose.msra.mxu0 0.0
        %1315 = vmatprep.subr.mxu0 0.0
        %1316 = vmatpush2.xpose.msra.mxu0 0.0
        %1317 = vmatprep.subr.mxu0 0.0
        %1318 = vmatpush2.xpose.msra.mxu0 0.0
        %1319 = vmatprep.subr.mxu0 0.0
        %1320 = vmatpush2.xpose.msra.mxu0 0.0
        %1321 = vmatprep.mubr.f32.mxu0 0.0
        %1322 = vmatmul.mubr.f32.gmra.mxu0 %v1253
        %v1323 = vpop.f32.mrf.mxu0
        %v1324 = vadd.f32 0.0, %v1323
        %v1325 = vpop.f32.mrf.mxu0
        %1326 = vdwg.mxu0
        %v1327 = vsel %vm735, %v1087, 0
        %v1329 = vsel %vm735, %v1094, 0
        %1331 = vmatprep.subr.mxu0 0.0
        %1332 = vmatpush1.xpose.msra.mxu0 0.0
        %1333 = vmatprep.subr.mxu0 0.0
        %1334 = vmatpush1.xpose.msra.mxu0 0.0
        %1335 = vmatprep.subr.mxu0 0.0
        %1336 = vmatpush1.xpose.msra.mxu0 0.0
        %1337 = vmatprep.subr.mxu0 0.0
        %1338 = vmatpush1.xpose.msra.mxu0 0.0
        %1339 = vmatprep.subr.mxu0 0.0
        %1340 = vmatpush1.xpose.msra.mxu0 0.0
        %1341 = vmatprep.subr.mxu0 0.0
        %1342 = vmatpush1.xpose.msra.mxu0 0.0
        %1343 = vmatprep.subr.mxu0 0.0
        %1344 = vmatpush1.xpose.msra.mxu0 0.0
        %1345 = vmatprep.subr.mxu0 0.0
        %1346 = vmatpush1.xpose.msra.mxu0 0.0
        %1347 = vmatprep.subr.mxu0 0.0
        %1348 = vmatpush1.xpose.msra.mxu0 0.0
        %1349 = vmatprep.subr.mxu0 0.0
        %1350 = vmatpush1.xpose.msra.mxu0 0.0
        %1351 = vmatprep.subr.mxu0 0.0
        %1352 = vmatpush1.xpose.msra.mxu0 0.0
        %1353 = vmatprep.subr.mxu0 0.0
        %1354 = vmatpush1.xpose.msra.mxu0 0.0
        %1355 = vmatprep.subr.mxu0 0.0
        %1356 = vmatpush1.xpose.msra.mxu0 0.0
        %1357 = vmatprep.subr.mxu0 0.0
        %1358 = vmatpush1.xpose.msra.mxu0 0.0
        %1359 = vmatprep.subr.mxu0 0.0
        %1360 = vmatpush1.xpose.msra.mxu0 0.0
        %1361 = vmatprep.subr.mxu0 0.0
        %1362 = vmatpush1.xpose.msra.mxu0 %v1329
        %1363 = vmatprep.subr.mxu0 0.0
        %1364 = vmatpush2.xpose.msra.mxu0 0.0
        %1365 = vmatprep.subr.mxu0 0.0
        %1366 = vmatpush2.xpose.msra.mxu0 0.0
        %1367 = vmatprep.subr.mxu0 0.0
        %1368 = vmatpush2.xpose.msra.mxu0 0.0
        %1369 = vmatprep.subr.mxu0 0.0
        %1370 = vmatpush2.xpose.msra.mxu0 0.0
        %1371 = vmatprep.subr.mxu0 0.0
        %1372 = vmatpush2.xpose.msra.mxu0 0.0
        %1373 = vmatprep.subr.mxu0 0.0
        %1374 = vmatpush2.xpose.msra.mxu0 0.0
        %1375 = vmatprep.subr.mxu0 0.0
        %1376 = vmatpush2.xpose.msra.mxu0 0.0
        %1377 = vmatprep.subr.mxu0 0.0
        %1378 = vmatpush2.xpose.msra.mxu0 0.0
        %1379 = vmatprep.subr.mxu0 0.0
        %1380 = vmatpush2.xpose.msra.mxu0 0.0
        %1381 = vmatprep.subr.mxu0 0.0
        %1382 = vmatpush2.xpose.msra.mxu0 0.0
        %1383 = vmatprep.subr.mxu0 0.0
        %1384 = vmatpush2.xpose.msra.mxu0 0.0
        %1385 = vmatprep.subr.mxu0 0.0
        %1386 = vmatpush2.xpose.msra.mxu0 0.0
        %1387 = vmatprep.subr.mxu0 0.0
        %1388 = vmatpush2.xpose.msra.mxu0 0.0
        %1389 = vmatprep.subr.mxu0 0.0
        %1390 = vmatpush2.xpose.msra.mxu0 0.0
        %1391 = vmatprep.subr.mxu0 0.0
        %1392 = vmatpush2.xpose.msra.mxu0 0.0
        %1393 = vmatprep.subr.mxu0 0.0
        %1394 = vmatpush2.xpose.msra.mxu0 0.0
        %1395 = vmatprep.mubr.f32.mxu0 0.0
        %1396 = vmatmul.mubr.f32.gmra.mxu0 %v1327
        %v1397 = vpop.f32.mrf.mxu0
        %v1398 = vadd.f32 0.0, %v1397
        %v1399 = vpop.f32.mrf.mxu0
        %1400 = vdwg.mxu0
        %v1401 = vsel %vm735, %v1176, -inf
        %1402 = vmax.xlane.f32.xlu0 %v1401
        %v1403 = vpop.xlane.xlu0 %1402
        %v1404 = vsel %vm735, %v1250, -inf
        %1405 = vmax.xlane.f32.xlu0 %v1404
        %v1406 = vpop.xlane.xlu0 %1405
        %v1407 = vsel %vm735, %v1324, -inf
        %1408 = vmax.xlane.f32.xlu0 %v1407
        %v1409 = vpop.xlane.xlu0 %1408
        %v1410 = vsel %vm735, %v1398, -inf
        %1411 = vmax.xlane.f32.xlu0 %v1410
        %v1412 = vpop.xlane.xlu0 %1411
        %v1413 = vsub.f32 %v1176, %v1403
        %v1414 = vsub.f32 %v1250, %v1406
        %v1415 = vsub.f32 %v1324, %v1409
        %v1416 = vsub.f32 %v1398, %v1412
        %v1417 = vmul.f32 %v1413, 1.442695
        %v1418 = vpow.pop %v1417
        %v1419 = vmul.f32 %v1414, 1.442695
        %v1420 = vpow.pop %v1419
        %v1421 = vmul.f32 %v1415, 1.442695
        %v1422 = vpow.pop %v1421
        %v1423 = vmul.f32 %v1416, 1.442695
        %v1424 = vpow.pop %v1423
        %v1425 = vsel %vm735, %v1418, 0.0
        %1426 = vadd.xlane.f32.xlu0 %v1425
        %v1427 = vpop.xlane.xlu0 %1426
        %v1428 = vsel %vm735, %v1420, 0.0
        %1429 = vadd.xlane.f32.xlu0 %v1428
        %v1430 = vpop.xlane.xlu0 %1429
        %v1431 = vsel %vm735, %v1422, 0.0
        %1432 = vadd.xlane.f32.xlu0 %v1431
        %v1433 = vpop.xlane.xlu0 %1432
        %v1434 = vsel %vm735, %v1424, 0.0
        %1435 = vadd.xlane.f32.xlu0 %v1434
        %v1436 = vpop.xlane.xlu0 %1435
        %v1437 = vrcp.pop %v1427
        %v1438 = vrcp.pop %v1430
        %v1439 = vrcp.pop %v1433
        %v1440 = vrcp.pop %v1436
        %v1441 = vmul.f32 %v1418, %v1437
        %v1442 = vmul.f32 %v1420, %v1438
        %v1443 = vmul.f32 %v1422, %v1439
        %v1444 = vmul.f32 %v1424, %v1440
        %v1446 = vsel %vm735, %v1441, 0
        %1448 = vmatprep.subr.mxu0 0.0
        %1449 = vmatpush1.msra.mxu0 0.0
        %1450 = vmatprep.subr.mxu0 0.0
        %1451 = vmatpush1.msra.mxu0 0.0
        %1452 = vmatprep.subr.mxu0 0.0
        %1453 = vmatpush1.msra.mxu0 0.0
        %1454 = vmatprep.subr.mxu0 0.0
        %1455 = vmatpush1.msra.mxu0 0.0
        %1456 = vmatprep.subr.mxu0 0.0
        %1457 = vmatpush1.msra.mxu0 0.0
        %1458 = vmatprep.subr.mxu0 0.0
        %1459 = vmatpush1.msra.mxu0 0.0
        %1460 = vmatprep.subr.mxu0 0.0
        %1461 = vmatpush1.msra.mxu0 0.0
        %1462 = vmatprep.subr.mxu0 0.0
        %1463 = vmatpush1.msra.mxu0 0.0
        %1464 = vmatprep.subr.mxu0 0.0
        %1465 = vmatpush1.msra.mxu0 0.0
        %1466 = vmatprep.subr.mxu0 0.0
        %1467 = vmatpush1.msra.mxu0 0.0
        %1468 = vmatprep.subr.mxu0 0.0
        %1469 = vmatpush1.msra.mxu0 0.0
        %1470 = vmatprep.subr.mxu0 0.0
        %1471 = vmatpush1.msra.mxu0 0.0
        %1472 = vmatprep.subr.mxu0 0.0
        %1473 = vmatpush1.msra.mxu0 0.0
        %1474 = vmatprep.subr.mxu0 0.0
        %1475 = vmatpush1.msra.mxu0 0.0
        %1476 = vmatprep.subr.mxu0 0.0
        %1477 = vmatpush1.msra.mxu0 0.0
        %1478 = vmatprep.subr.mxu0 0.0
        %1479 = vmatpush1.msra.mxu0 %v1078
        %1480 = vmatprep.subr.mxu0 0.0
        %1481 = vmatpush2.msra.mxu0 0.0
        %1482 = vmatprep.subr.mxu0 0.0
        %1483 = vmatpush2.msra.mxu0 0.0
        %1484 = vmatprep.subr.mxu0 0.0
        %1485 = vmatpush2.msra.mxu0 0.0
        %1486 = vmatprep.subr.mxu0 0.0
        %1487 = vmatpush2.msra.mxu0 0.0
        %1488 = vmatprep.subr.mxu0 0.0
        %1489 = vmatpush2.msra.mxu0 0.0
        %1490 = vmatprep.subr.mxu0 0.0
        %1491 = vmatpush2.msra.mxu0 0.0
        %1492 = vmatprep.subr.mxu0 0.0
        %1493 = vmatpush2.msra.mxu0 0.0
        %1494 = vmatprep.subr.mxu0 0.0
        %1495 = vmatpush2.msra.mxu0 0.0
        %1496 = vmatprep.subr.mxu0 0.0
        %1497 = vmatpush2.msra.mxu0 0.0
        %1498 = vmatprep.subr.mxu0 0.0
        %1499 = vmatpush2.msra.mxu0 0.0
        %1500 = vmatprep.subr.mxu0 0.0
        %1501 = vmatpush2.msra.mxu0 0.0
        %1502 = vmatprep.subr.mxu0 0.0
        %1503 = vmatpush2.msra.mxu0 0.0
        %1504 = vmatprep.subr.mxu0 0.0
        %1505 = vmatpush2.msra.mxu0 0.0
        %1506 = vmatprep.subr.mxu0 0.0
        %1507 = vmatpush2.msra.mxu0 0.0
        %1508 = vmatprep.subr.mxu0 0.0
        %1509 = vmatpush2.msra.mxu0 0.0
        %1510 = vmatprep.subr.mxu0 0.0
        %1511 = vmatpush2.msra.mxu0 0.0
        %1512 = vmatprep.mubr.f32.mxu0 0.0
        %1513 = vmatmul.mubr.f32.gmra.mxu0 %v1446
        %v1514 = vpop.f32.mrf.mxu0
        %v1515 = vadd.f32 0.0, %v1514
        %v1516 = vpop.f32.mrf.mxu0
        %1517 = vdwg.mxu0
        %v1519 = vsel %vm735, %v1442, 0
        %1521 = vmatprep.subr.mxu0 0.0
        %1522 = vmatpush1.msra.mxu0 0.0
        %1523 = vmatprep.subr.mxu0 0.0
        %1524 = vmatpush1.msra.mxu0 0.0
        %1525 = vmatprep.subr.mxu0 0.0
        %1526 = vmatpush1.msra.mxu0 0.0
        %1527 = vmatprep.subr.mxu0 0.0
        %1528 = vmatpush1.msra.mxu0 0.0
        %1529 = vmatprep.subr.mxu0 0.0
        %1530 = vmatpush1.msra.mxu0 0.0
        %1531 = vmatprep.subr.mxu0 0.0
        %1532 = vmatpush1.msra.mxu0 0.0
        %1533 = vmatprep.subr.mxu0 0.0
        %1534 = vmatpush1.msra.mxu0 0.0
        %1535 = vmatprep.subr.mxu0 0.0
        %1536 = vmatpush1.msra.mxu0 0.0
        %1537 = vmatprep.subr.mxu0 0.0
        %1538 = vmatpush1.msra.mxu0 0.0
        %1539 = vmatprep.subr.mxu0 0.0
        %1540 = vmatpush1.msra.mxu0 0.0
        %1541 = vmatprep.subr.mxu0 0.0
        %1542 = vmatpush1.msra.mxu0 0.0
        %1543 = vmatprep.subr.mxu0 0.0
        %1544 = vmatpush1.msra.mxu0 0.0
        %1545 = vmatprep.subr.mxu0 0.0
        %1546 = vmatpush1.msra.mxu0 0.0
        %1547 = vmatprep.subr.mxu0 0.0
        %1548 = vmatpush1.msra.mxu0 0.0
        %1549 = vmatprep.subr.mxu0 0.0
        %1550 = vmatpush1.msra.mxu0 0.0
        %1551 = vmatprep.subr.mxu0 0.0
        %1552 = vmatpush1.msra.mxu0 %v1097
        %1553 = vmatprep.subr.mxu0 0.0
        %1554 = vmatpush2.msra.mxu0 0.0
        %1555 = vmatprep.subr.mxu0 0.0
        %1556 = vmatpush2.msra.mxu0 0.0
        %1557 = vmatprep.subr.mxu0 0.0
        %1558 = vmatpush2.msra.mxu0 0.0
        %1559 = vmatprep.subr.mxu0 0.0
        %1560 = vmatpush2.msra.mxu0 0.0
        %1561 = vmatprep.subr.mxu0 0.0
        %1562 = vmatpush2.msra.mxu0 0.0
        %1563 = vmatprep.subr.mxu0 0.0
        %1564 = vmatpush2.msra.mxu0 0.0
        %1565 = vmatprep.subr.mxu0 0.0
        %1566 = vmatpush2.msra.mxu0 0.0
        %1567 = vmatprep.subr.mxu0 0.0
        %1568 = vmatpush2.msra.mxu0 0.0
        %1569 = vmatprep.subr.mxu0 0.0
        %1570 = vmatpush2.msra.mxu0 0.0
        %1571 = vmatprep.subr.mxu0 0.0
        %1572 = vmatpush2.msra.mxu0 0.0
        %1573 = vmatprep.subr.mxu0 0.0
        %1574 = vmatpush2.msra.mxu0 0.0
        %1575 = vmatprep.subr.mxu0 0.0
        %1576 = vmatpush2.msra.mxu0 0.0
        %1577 = vmatprep.subr.mxu0 0.0
        %1578 = vmatpush2.msra.mxu0 0.0
        %1579 = vmatprep.subr.mxu0 0.0
        %1580 = vmatpush2.msra.mxu0 0.0
        %1581 = vmatprep.subr.mxu0 0.0
        %1582 = vmatpush2.msra.mxu0 0.0
        %1583 = vmatprep.subr.mxu0 0.0
        %1584 = vmatpush2.msra.mxu0 0.0
        %1585 = vmatprep.mubr.f32.mxu0 0.0
        %1586 = vmatmul.mubr.f32.gmra.mxu0 %v1519
        %v1587 = vpop.f32.mrf.mxu0
        %v1588 = vadd.f32 0.0, %v1587
        %v1589 = vpop.f32.mrf.mxu0
        %1590 = vdwg.mxu0
        %v1592 = vsel %vm735, %v1443, 0
        %1594 = vmatprep.subr.mxu0 0.0
        %1595 = vmatpush1.msra.mxu0 0.0
        %1596 = vmatprep.subr.mxu0 0.0
        %1597 = vmatpush1.msra.mxu0 0.0
        %1598 = vmatprep.subr.mxu0 0.0
        %1599 = vmatpush1.msra.mxu0 0.0
        %1600 = vmatprep.subr.mxu0 0.0
        %1601 = vmatpush1.msra.mxu0 0.0
        %1602 = vmatprep.subr.mxu0 0.0
        %1603 = vmatpush1.msra.mxu0 0.0
        %1604 = vmatprep.subr.mxu0 0.0
        %1605 = vmatpush1.msra.mxu0 0.0
        %1606 = vmatprep.subr.mxu0 0.0
        %1607 = vmatpush1.msra.mxu0 0.0
        %1608 = vmatprep.subr.mxu0 0.0
        %1609 = vmatpush1.msra.mxu0 0.0
        %1610 = vmatprep.subr.mxu0 0.0
        %1611 = vmatpush1.msra.mxu0 0.0
        %1612 = vmatprep.subr.mxu0 0.0
        %1613 = vmatpush1.msra.mxu0 0.0
        %1614 = vmatprep.subr.mxu0 0.0
        %1615 = vmatpush1.msra.mxu0 0.0
        %1616 = vmatprep.subr.mxu0 0.0
        %1617 = vmatpush1.msra.mxu0 0.0
        %1618 = vmatprep.subr.mxu0 0.0
        %1619 = vmatpush1.msra.mxu0 0.0
        %1620 = vmatprep.subr.mxu0 0.0
        %1621 = vmatpush1.msra.mxu0 0.0
        %1622 = vmatprep.subr.mxu0 0.0
        %1623 = vmatpush1.msra.mxu0 0.0
        %1624 = vmatprep.subr.mxu0 0.0
        %1625 = vmatpush1.msra.mxu0 %v1100
        %1626 = vmatprep.subr.mxu0 0.0
        %1627 = vmatpush2.msra.mxu0 0.0
        %1628 = vmatprep.subr.mxu0 0.0
        %1629 = vmatpush2.msra.mxu0 0.0
        %1630 = vmatprep.subr.mxu0 0.0
        %1631 = vmatpush2.msra.mxu0 0.0
        %1632 = vmatprep.subr.mxu0 0.0
        %1633 = vmatpush2.msra.mxu0 0.0
        %1634 = vmatprep.subr.mxu0 0.0
        %1635 = vmatpush2.msra.mxu0 0.0
        %1636 = vmatprep.subr.mxu0 0.0
        %1637 = vmatpush2.msra.mxu0 0.0
        %1638 = vmatprep.subr.mxu0 0.0
        %1639 = vmatpush2.msra.mxu0 0.0
        %1640 = vmatprep.subr.mxu0 0.0
        %1641 = vmatpush2.msra.mxu0 0.0
        %1642 = vmatprep.subr.mxu0 0.0
        %1643 = vmatpush2.msra.mxu0 0.0
        %1644 = vmatprep.subr.mxu0 0.0
        %1645 = vmatpush2.msra.mxu0 0.0
        %1646 = vmatprep.subr.mxu0 0.0
        %1647 = vmatpush2.msra.mxu0 0.0
        %1648 = vmatprep.subr.mxu0 0.0
        %1649 = vmatpush2.msra.mxu0 0.0
        %1650 = vmatprep.subr.mxu0 0.0
        %1651 = vmatpush2.msra.mxu0 0.0
        %1652 = vmatprep.subr.mxu0 0.0
        %1653 = vmatpush2.msra.mxu0 0.0
        %1654 = vmatprep.subr.mxu0 0.0
        %1655 = vmatpush2.msra.mxu0 0.0
        %1656 = vmatprep.subr.mxu0 0.0
        %1657 = vmatpush2.msra.mxu0 0.0
        %1658 = vmatprep.mubr.f32.mxu0 0.0
        %1659 = vmatmul.mubr.f32.gmra.mxu0 %v1592
        %v1660 = vpop.f32.mrf.mxu0
        %v1661 = vadd.f32 0.0, %v1660
        %v1662 = vpop.f32.mrf.mxu0
        %1663 = vdwg.mxu0
        %v1665 = vsel %vm735, %v1444, 0
        %1667 = vmatprep.subr.mxu0 0.0
        %1668 = vmatpush1.msra.mxu0 0.0
        %1669 = vmatprep.subr.mxu0 0.0
        %1670 = vmatpush1.msra.mxu0 0.0
        %1671 = vmatprep.subr.mxu0 0.0
        %1672 = vmatpush1.msra.mxu0 0.0
        %1673 = vmatprep.subr.mxu0 0.0
        %1674 = vmatpush1.msra.mxu0 0.0
        %1675 = vmatprep.subr.mxu0 0.0
        %1676 = vmatpush1.msra.mxu0 0.0
        %1677 = vmatprep.subr.mxu0 0.0
        %1678 = vmatpush1.msra.mxu0 0.0
        %1679 = vmatprep.subr.mxu0 0.0
        %1680 = vmatpush1.msra.mxu0 0.0
        %1681 = vmatprep.subr.mxu0 0.0
        %1682 = vmatpush1.msra.mxu0 0.0
        %1683 = vmatprep.subr.mxu0 0.0
        %1684 = vmatpush1.msra.mxu0 0.0
        %1685 = vmatprep.subr.mxu0 0.0
        %1686 = vmatpush1.msra.mxu0 0.0
        %1687 = vmatprep.subr.mxu0 0.0
        %1688 = vmatpush1.msra.mxu0 0.0
        %1689 = vmatprep.subr.mxu0 0.0
        %1690 = vmatpush1.msra.mxu0 0.0
        %1691 = vmatprep.subr.mxu0 0.0
        %1692 = vmatpush1.msra.mxu0 0.0
        %1693 = vmatprep.subr.mxu0 0.0
        %1694 = vmatpush1.msra.mxu0 0.0
        %1695 = vmatprep.subr.mxu0 0.0
        %1696 = vmatpush1.msra.mxu0 0.0
        %1697 = vmatprep.subr.mxu0 0.0
        %1698 = vmatpush1.msra.mxu0 %v1103
        %1699 = vmatprep.subr.mxu0 0.0
        %1700 = vmatpush2.msra.mxu0 0.0
        %1701 = vmatprep.subr.mxu0 0.0
        %1702 = vmatpush2.msra.mxu0 0.0
        %1703 = vmatprep.subr.mxu0 0.0
        %1704 = vmatpush2.msra.mxu0 0.0
        %1705 = vmatprep.subr.mxu0 0.0
        %1706 = vmatpush2.msra.mxu0 0.0
        %1707 = vmatprep.subr.mxu0 0.0
        %1708 = vmatpush2.msra.mxu0 0.0
        %1709 = vmatprep.subr.mxu0 0.0
        %1710 = vmatpush2.msra.mxu0 0.0
        %1711 = vmatprep.subr.mxu0 0.0
        %1712 = vmatpush2.msra.mxu0 0.0
        %1713 = vmatprep.subr.mxu0 0.0
        %1714 = vmatpush2.msra.mxu0 0.0
        %1715 = vmatprep.subr.mxu0 0.0
        %1716 = vmatpush2.msra.mxu0 0.0
        %1717 = vmatprep.subr.mxu0 0.0
        %1718 = vmatpush2.msra.mxu0 0.0
        %1719 = vmatprep.subr.mxu0 0.0
        %1720 = vmatpush2.msra.mxu0 0.0
        %1721 = vmatprep.subr.mxu0 0.0
        %1722 = vmatpush2.msra.mxu0 0.0
        %1723 = vmatprep.subr.mxu0 0.0
        %1724 = vmatpush2.msra.mxu0 0.0
        %1725 = vmatprep.subr.mxu0 0.0
        %1726 = vmatpush2.msra.mxu0 0.0
        %1727 = vmatprep.subr.mxu0 0.0
        %1728 = vmatpush2.msra.mxu0 0.0
        %1729 = vmatprep.subr.mxu0 0.0
        %1730 = vmatpush2.msra.mxu0 0.0
        %1731 = vmatprep.mubr.f32.mxu0 0.0
        %1732 = vmatmul.mubr.f32.gmra.mxu0 %v1665
        %v1733 = vpop.f32.mrf.mxu0
        %v1734 = vadd.f32 0.0, %v1733
        %v1735 = vpop.f32.mrf.mxu0
        %1736 = vdwg.mxu0
        %1738 = vrot.lane.b32.xlu0 %v1588, 8
        %v1739 = vpop.permute.xlu0 %1738
        %1742 = vrot.lane.b32.xlu0 %v1661, 16
        %v1743 = vpop.permute.xlu0 %1742
        %1746 = vrot.lane.b32.xlu0 %v1734, 24
        %v1747 = vpop.permute.xlu0 %1746
        %v1749 = vsel %vm735, %v1515, %v1739
        %v1750 = vsel %vm471, %v1749, %v1743
        %vm1751 = vcmask 195584
        %v1752 = vsel %vm1751, %v1750, %v1747
        %v1753 = vlaneseq
        %v1754 = vshrl.u32 %v1753, 7
        %v1755 = vsub.s32 3, %v1754
        %v1756 = vrot.slane %v840, %v1755
        %v1758 = vsel %vm859, %v1752, 0
        %1760 = vmatprep.subr.mxu0 0.0
        %1761 = vmatpush1.msra.mxu0 0.0
        %1762 = vmatprep.subr.mxu0 0.0
        %1763 = vmatpush1.msra.mxu0 0.0
        %1764 = vmatprep.subr.mxu0 0.0
        %1765 = vmatpush1.msra.mxu0 0.0
        %1766 = vmatprep.subr.mxu0 0.0
        %1767 = vmatpush1.msra.mxu0 0.0
        %1768 = vmatprep.subr.mxu0 0.0
        %1769 = vmatpush1.msra.mxu0 0.0
        %1770 = vmatprep.subr.mxu0 0.0
        %1771 = vmatpush1.msra.mxu0 0.0
        %1772 = vmatprep.subr.mxu0 0.0
        %1773 = vmatpush1.msra.mxu0 0.0
        %1774 = vmatprep.subr.mxu0 0.0
        %1775 = vmatpush1.msra.mxu0 0.0
        %1776 = vmatprep.subr.mxu0 0.0
        %1777 = vmatpush1.msra.mxu0 0.0
        %1778 = vmatprep.subr.mxu0 0.0
        %1779 = vmatpush1.msra.mxu0 0.0
        %1780 = vmatprep.subr.mxu0 0.0
        %1781 = vmatpush1.msra.mxu0 0.0
        %1782 = vmatprep.subr.mxu0 0.0
        %1783 = vmatpush1.msra.mxu0 0.0
        %1784 = vmatprep.subr.mxu0 0.0
        %1785 = vmatpush1.msra.mxu0 %v839
        %1786 = vmatprep.subr.mxu0 0.0
        %1787 = vmatpush1.msra.mxu0 %v838
        %1788 = vmatprep.subr.mxu0 0.0
        %1789 = vmatpush1.msra.mxu0 %v837
        %1790 = vmatprep.subr.mxu0 0.0
        %1791 = vmatpush1.msra.mxu0 %v836
        %1792 = vmatprep.subr.mxu0 0.0
        %1793 = vmatpush2.msra.mxu0 0.0
        %1794 = vmatprep.subr.mxu0 0.0
        %1795 = vmatpush2.msra.mxu0 0.0
        %1796 = vmatprep.subr.mxu0 0.0
        %1797 = vmatpush2.msra.mxu0 0.0
        %1798 = vmatprep.subr.mxu0 0.0
        %1799 = vmatpush2.msra.mxu0 0.0
        %1800 = vmatprep.subr.mxu0 0.0
        %1801 = vmatpush2.msra.mxu0 0.0
        %1802 = vmatprep.subr.mxu0 0.0
        %1803 = vmatpush2.msra.mxu0 0.0
        %1804 = vmatprep.subr.mxu0 0.0
        %1805 = vmatpush2.msra.mxu0 0.0
        %1806 = vmatprep.subr.mxu0 0.0
        %1807 = vmatpush2.msra.mxu0 0.0
        %1808 = vmatprep.subr.mxu0 0.0
        %1809 = vmatpush2.msra.mxu0 0.0
        %1810 = vmatprep.subr.mxu0 0.0
        %1811 = vmatpush2.msra.mxu0 0.0
        %1812 = vmatprep.subr.mxu0 0.0
        %1813 = vmatpush2.msra.mxu0 0.0
        %1814 = vmatprep.subr.mxu0 0.0
        %1815 = vmatpush2.msra.mxu0 0.0
        %1816 = vmatprep.subr.mxu0 0.0
        %1817 = vmatpush2.msra.mxu0 0.0
        %1818 = vmatprep.subr.mxu0 0.0
        %1819 = vmatpush2.msra.mxu0 0.0
        %1820 = vmatprep.subr.mxu0 0.0
        %1821 = vmatpush2.msra.mxu0 0.0
        %1822 = vmatprep.subr.mxu0 0.0
        %1823 = vmatpush2.msra.mxu0 0.0
        %1824 = vmatprep.mubr.f32.mxu0 0.0
        %1825 = vmatmul.mubr.f32.gmra.mxu0 %v1758
        %v1826 = vpop.f32.mrf.mxu0
        %v1827 = vadd.f32 %v1756, %v1826
        %v1828 = vpop.f32.mrf.mxu0
        %1829 = vdwg.mxu0
        %v1830 = vadd.f32 %v805, %v1827
        %v1831 = vsel %vm859, %v1830, 0.0
        %1832 = vadd.xlane.f32.xlu0 %v1831
        %v1833 = vpop.xlane.xlu0 %1832
        %v1834 = vrcp.pop 32.0
        %v1835 = vmul.f32 %v1833, %v1834
        %v1836 = vsub.f32 %v1830, %v1835
        %v1837 = vmul.f32 %v1836, %v1836
        %v1838 = vsel %vm859, %v1837, 0.0
        %1839 = vadd.xlane.f32.xlu0 %v1838
        %v1840 = vpop.xlane.xlu0 %1839
        %v1841 = vmul.f32 %v1840, %v1834
        %v1842 = vadd.f32 %v1841, 1e-05
        %v1843 = vrsqrt.pop %v1842
        %v1844 = vmul.f32 %v1836, %v1843
        %v1845 = vlaneseq
        %v1846 = vshrl.u32 %v1845, 7
        %v1847 = vsub.s32 4, %v1846
        %v1848 = vrot.slane %v840, %v1847
        %v1849 = vmul.f32 %v1844, %v1848
        %v1850 = vlaneseq
        %v1851 = vshrl.u32 %v1850, 7
        %v1852 = vsub.s32 5, %v1851
        %v1853 = vrot.slane %v840, %v1852
        %v1854 = vadd.f32 %v1849, %v1853
        %v1856 = vlaneseq
        %v1857 = vshrl.u32 %v1856, 7
        %v1858 = vsub.s32 0, %v1857
        %v1859 = vrot.slane %v854, %v1858
        %v1862 = vsel %vm859, %v1854, 0
        %1864 = vmatprep.subr.mxu0 0.0
        %1865 = vmatpush1.msra.mxu0 0.0
        %1866 = vmatprep.subr.mxu0 0.0
        %1867 = vmatpush1.msra.mxu0 0.0
        %1868 = vmatprep.subr.mxu0 0.0
        %1869 = vmatpush1.msra.mxu0 0.0
        %1870 = vmatprep.subr.mxu0 0.0
        %1871 = vmatpush1.msra.mxu0 0.0
        %1872 = vmatprep.subr.mxu0 0.0
        %1873 = vmatpush1.msra.mxu0 0.0
        %1874 = vmatprep.subr.mxu0 0.0
        %1875 = vmatpush1.msra.mxu0 0.0
        %1876 = vmatprep.subr.mxu0 0.0
        %1877 = vmatpush1.msra.mxu0 0.0
        %1878 = vmatprep.subr.mxu0 0.0
        %1879 = vmatpush1.msra.mxu0 0.0
        %1880 = vmatprep.subr.mxu0 0.0
        %1881 = vmatpush1.msra.mxu0 0.0
        %1882 = vmatprep.subr.mxu0 0.0
        %1883 = vmatpush1.msra.mxu0 0.0
        %1884 = vmatprep.subr.mxu0 0.0
        %1885 = vmatpush1.msra.mxu0 0.0
        %1886 = vmatprep.subr.mxu0 0.0
        %1887 = vmatpush1.msra.mxu0 0.0
        %1888 = vmatprep.subr.mxu0 0.0
        %1889 = vmatpush1.msra.mxu0 %v845
        %1890 = vmatprep.subr.mxu0 0.0
        %1891 = vmatpush1.msra.mxu0 %v844
        %1892 = vmatprep.subr.mxu0 0.0
        %1893 = vmatpush1.msra.mxu0 %v843
        %1894 = vmatprep.subr.mxu0 0.0
        %1895 = vmatpush1.msra.mxu0 %v842
        %1896 = vmatprep.subr.mxu0 0.0
        %1897 = vmatpush2.msra.mxu0 0.0
        %1898 = vmatprep.subr.mxu0 0.0
        %1899 = vmatpush2.msra.mxu0 0.0
        %1900 = vmatprep.subr.mxu0 0.0
        %1901 = vmatpush2.msra.mxu0 0.0
        %1902 = vmatprep.subr.mxu0 0.0
        %1903 = vmatpush2.msra.mxu0 0.0
        %1904 = vmatprep.subr.mxu0 0.0
        %1905 = vmatpush2.msra.mxu0 0.0
        %1906 = vmatprep.subr.mxu0 0.0
        %1907 = vmatpush2.msra.mxu0 0.0
        %1908 = vmatprep.subr.mxu0 0.0
        %1909 = vmatpush2.msra.mxu0 0.0
        %1910 = vmatprep.subr.mxu0 0.0
        %1911 = vmatpush2.msra.mxu0 0.0
        %1912 = vmatprep.subr.mxu0 0.0
        %1913 = vmatpush2.msra.mxu0 0.0
        %1914 = vmatprep.subr.mxu0 0.0
        %1915 = vmatpush2.msra.mxu0 0.0
        %1916 = vmatprep.subr.mxu0 0.0
        %1917 = vmatpush2.msra.mxu0 0.0
        %1918 = vmatprep.subr.mxu0 0.0
        %1919 = vmatpush2.msra.mxu0 0.0
        %1920 = vmatprep.subr.mxu0 0.0
        %1921 = vmatpush2.msra.mxu0 0.0
        %1922 = vmatprep.subr.mxu0 0.0
        %1923 = vmatpush2.msra.mxu0 0.0
        %1924 = vmatprep.subr.mxu0 0.0
        %1925 = vmatpush2.msra.mxu0 0.0
        %1926 = vmatprep.subr.mxu0 0.0
        %1927 = vmatpush2.msra.mxu0 0.0
        %1928 = vmatprep.mubr.f32.mxu0 0.0
        %1929 = vmatmul.mubr.f32.gmra.mxu0 %v1862
        %v1930 = vpop.f32.mrf.mxu0
        %v1931 = vadd.f32 %v1859, %v1930
        %v1932 = vpop.f32.mrf.mxu0
        %1933 = vdwg.mxu0
        %v1934 = vmax.f32 %v1931, 0.0
        %v1935 = vlaneseq
        %v1936 = vshrl.u32 %v1935, 7
        %v1937 = vsub.s32 6, %v1936
        %v1938 = vrot.slane %v840, %v1937
        %v1940 = vsel %vm637, %v1934, 0
        %1942 = vmatprep.subr.mxu0 0.0
        %1943 = vmatpush1.msra.mxu0 0.0
        %1944 = vmatprep.subr.mxu0 0.0
        %1945 = vmatpush1.msra.mxu0 0.0
        %1946 = vmatprep.subr.mxu0 0.0
        %1947 = vmatpush1.msra.mxu0 0.0
        %1948 = vmatprep.subr.mxu0 0.0
        %1949 = vmatpush1.msra.mxu0 0.0
        %1950 = vmatprep.subr.mxu0 0.0
        %1951 = vmatpush1.msra.mxu0 0.0
        %1952 = vmatprep.subr.mxu0 0.0
        %1953 = vmatpush1.msra.mxu0 0.0
        %1954 = vmatprep.subr.mxu0 0.0
        %1955 = vmatpush1.msra.mxu0 0.0
        %1956 = vmatprep.subr.mxu0 0.0
        %1957 = vmatpush1.msra.mxu0 0.0
        %1958 = vmatprep.subr.mxu0 0.0
        %1959 = vmatpush1.msra.mxu0 %v853
        %1960 = vmatprep.subr.mxu0 0.0
        %1961 = vmatpush1.msra.mxu0 %v852
        %1962 = vmatprep.subr.mxu0 0.0
        %1963 = vmatpush1.msra.mxu0 %v851
        %1964 = vmatprep.subr.mxu0 0.0
        %1965 = vmatpush1.msra.mxu0 %v850
        %1966 = vmatprep.subr.mxu0 0.0
        %1967 = vmatpush1.msra.mxu0 %v849
        %1968 = vmatprep.subr.mxu0 0.0
        %1969 = vmatpush1.msra.mxu0 %v848
        %1970 = vmatprep.subr.mxu0 0.0
        %1971 = vmatpush1.msra.mxu0 %v847
        %1972 = vmatprep.subr.mxu0 0.0
        %1973 = vmatpush1.msra.mxu0 %v846
        %1974 = vmatprep.subr.mxu0 0.0
        %1975 = vmatpush2.msra.mxu0 0.0
        %1976 = vmatprep.subr.mxu0 0.0
        %1977 = vmatpush2.msra.mxu0 0.0
        %1978 = vmatprep.subr.mxu0 0.0
        %1979 = vmatpush2.msra.mxu0 0.0
        %1980 = vmatprep.subr.mxu0 0.0
        %1981 = vmatpush2.msra.mxu0 0.0
        %1982 = vmatprep.subr.mxu0 0.0
        %1983 = vmatpush2.msra.mxu0 0.0
        %1984 = vmatprep.subr.mxu0 0.0
        %1985 = vmatpush2.msra.mxu0 0.0
        %1986 = vmatprep.subr.mxu0 0.0
        %1987 = vmatpush2.msra.mxu0 0.0
        %1988 = vmatprep.subr.mxu0 0.0
        %1989 = vmatpush2.msra.mxu0 0.0
        %1990 = vmatprep.subr.mxu0 0.0
        %1991 = vmatpush2.msra.mxu0 0.0
        %1992 = vmatprep.subr.mxu0 0.0
        %1993 = vmatpush2.msra.mxu0 0.0
        %1994 = vmatprep.subr.mxu0 0.0
        %1995 = vmatpush2.msra.mxu0 0.0
        %1996 = vmatprep.subr.mxu0 0.0
        %1997 = vmatpush2.msra.mxu0 0.0
        %1998 = vmatprep.subr.mxu0 0.0
        %1999 = vmatpush2.msra.mxu0 0.0
        %2000 = vmatprep.subr.mxu0 0.0
        %2001 = vmatpush2.msra.mxu0 0.0
        %2002 = vmatprep.subr.mxu0 0.0
        %2003 = vmatpush2.msra.mxu0 0.0
        %2004 = vmatprep.subr.mxu0 0.0
        %2005 = vmatpush2.msra.mxu0 0.0
        %2006 = vmatprep.mubr.f32.mxu0 0.0
        %2007 = vmatmul.mubr.f32.gmra.mxu0 %v1940
        %v2008 = vpop.f32.mrf.mxu0
        %v2009 = vadd.f32 %v1938, %v2008
        %v2010 = vpop.f32.mrf.mxu0
        %2011 = vdwg.mxu0
        %v2012 = vadd.f32 %v1854, %v2009
        %v2013 = vsel %vm859, %v2012, 0.0
        %2014 = vadd.xlane.f32.xlu0 %v2013
        %v2015 = vpop.xlane.xlu0 %2014
        %v2016 = vmul.f32 %v2015, %v1834
        %v2017 = vsub.f32 %v2012, %v2016
        %v2018 = vmul.f32 %v2017, %v2017
        %v2019 = vsel %vm859, %v2018, 0.0
        %2020 = vadd.xlane.f32.xlu0 %v2019
        %v2021 = vpop.xlane.xlu0 %2020
        %v2022 = vmul.f32 %v2021, %v1834
        %v2023 = vadd.f32 %v2022, 1e-05
        %v2024 = vrsqrt.pop %v2023
        %v2025 = vmul.f32 %v2017, %v2024
        %v2026 = vlaneseq
        %v2027 = vshrl.u32 %v2026, 7
        %v2028 = vsub.s32 7, %v2027
        %v2029 = vrot.slane %v840, %v2028
        %v2030 = vmul.f32 %v2025, %v2029
        %v2031 = vlaneseq
        %v2032 = vshrl.u32 %v2031, 7
        %v2033 = vsub.s32 0, %v2032
        %v2034 = vrot.slane %v841, %v2033
        %v2035 = vadd.f32 %v2030, %v2034
        %s2036 = scalar_lea.vmem %s5, 128
        %v2037 = vld [vmem:[%s2036] sm:$0xff]
        %v2038 = vld [vmem:[%s2036 + $0x8] sm:$0xff]
        %v2039 = vld [vmem:[%s2036 + $0x10] sm:$0xff]
        %v2040 = vld [vmem:[%s2036 + $0x18] sm:$0xff]
        %s2041 = scalar_lea.vmem %s5, 160
        %v2042 = vld [vmem:[%s2041] sm:$0xff]
        %v2043 = vld [vmem:[%s2041 + $0x8] sm:$0xff]
        %v2044 = vld [vmem:[%s2041 + $0x10] sm:$0xff]
        %v2045 = vld [vmem:[%s2041 + $0x18] sm:$0xff]
        %s2046 = scalar_lea.vmem %s5, 192
        %v2047 = vld [vmem:[%s2046] sm:$0xff]
        %v2048 = vld [vmem:[%s2046 + $0x8] sm:$0xff]
        %v2049 = vld [vmem:[%s2046 + $0x10] sm:$0xff]
        %v2050 = vld [vmem:[%s2046 + $0x18] sm:$0xff]
        %s2051 = scalar_lea.vmem %s5, 224
        %v2052 = vld [vmem:[%s2051] sm:$0xff]
        %v2053 = vld [vmem:[%s2051 + $0x8] sm:$0xff]
        %v2054 = vld [vmem:[%s2051 + $0x10] sm:$0xff]
        %v2055 = vld [vmem:[%s2051 + $0x18] sm:$0xff]
        %s2056 = scalar_lea.vmem %s8, 16
        %v2057 = vld [vmem:[%s2056] sm:$0xff]
        %v2058 = vld [vmem:[%s2056 + $0x8] sm:$0x1]
        %s2059 = scalar_lea.vmem %s6, 32
        %v2060 = vld [vmem:[%s2059] sm:$0xff]
        %v2061 = vld [vmem:[%s2059 + $0x8] sm:$0xff]
        %v2062 = vld [vmem:[%s2059 + $0x10] sm:$0xff]
        %v2063 = vld [vmem:[%s2059 + $0x18] sm:$0xff]
        %s2064 = scalar_lea.vmem %s7, 64
        %v2065 = vld [vmem:[%s2064] sm:$0xff]
        %v2066 = vld [vmem:[%s2064 + $0x8] sm:$0xff]
        %v2067 = vld [vmem:[%s2064 + $0x10] sm:$0xff]
        %v2068 = vld [vmem:[%s2064 + $0x18] sm:$0xff]
        %v2069 = vld [vmem:[%s2064 + $0x20] sm:$0xff]
        %v2070 = vld [vmem:[%s2064 + $0x28] sm:$0xff]
        %v2071 = vld [vmem:[%s2064 + $0x30] sm:$0xff]
        %v2072 = vld [vmem:[%s2064 + $0x38] sm:$0xff]
        %s2073 = scalar_lea.vmem %s9, 1
        %v2074 = vld [vmem:[%s2073] sm:$0x1]
        %v2075 = vlaneseq
        %v2076 = vshrl.u32 %v2075, 7
        %v2077 = vsub.s32 0, %v2076
        %v2078 = vrot.slane %v2057, %v2077
        %v2080 = vsel %vm859, %v2035, 0
        %2082 = vmatprep.subr.mxu0 0.0
        %2083 = vmatpush1.msra.mxu0 0.0
        %2084 = vmatprep.subr.mxu0 0.0
        %2085 = vmatpush1.msra.mxu0 0.0
        %2086 = vmatprep.subr.mxu0 0.0
        %2087 = vmatpush1.msra.mxu0 0.0
        %2088 = vmatprep.subr.mxu0 0.0
        %2089 = vmatpush1.msra.mxu0 0.0
        %2090 = vmatprep.subr.mxu0 0.0
        %2091 = vmatpush1.msra.mxu0 0.0
        %2092 = vmatprep.subr.mxu0 0.0
        %2093 = vmatpush1.msra.mxu0 0.0
        %2094 = vmatprep.subr.mxu0 0.0
        %2095 = vmatpush1.msra.mxu0 0.0
        %2096 = vmatprep.subr.mxu0 0.0
        %2097 = vmatpush1.msra.mxu0 0.0
        %2098 = vmatprep.subr.mxu0 0.0
        %2099 = vmatpush1.msra.mxu0 0.0
        %2100 = vmatprep.subr.mxu0 0.0
        %2101 = vmatpush1.msra.mxu0 0.0
        %2102 = vmatprep.subr.mxu0 0.0
        %2103 = vmatpush1.msra.mxu0 0.0
        %2104 = vmatprep.subr.mxu0 0.0
        %2105 = vmatpush1.msra.mxu0 0.0
        %2106 = vmatprep.subr.mxu0 0.0
        %2107 = vmatpush1.msra.mxu0 %v2040
        %2108 = vmatprep.subr.mxu0 0.0
        %2109 = vmatpush1.msra.mxu0 %v2039
        %2110 = vmatprep.subr.mxu0 0.0
        %2111 = vmatpush1.msra.mxu0 %v2038
        %2112 = vmatprep.subr.mxu0 0.0
        %2113 = vmatpush1.msra.mxu0 %v2037
        %2114 = vmatprep.subr.mxu0 0.0
        %2115 = vmatpush2.msra.mxu0 0.0
        %2116 = vmatprep.subr.mxu0 0.0
        %2117 = vmatpush2.msra.mxu0 0.0
        %2118 = vmatprep.subr.mxu0 0.0
        %2119 = vmatpush2.msra.mxu0 0.0
        %2120 = vmatprep.subr.mxu0 0.0
        %2121 = vmatpush2.msra.mxu0 0.0
        %2122 = vmatprep.subr.mxu0 0.0
        %2123 = vmatpush2.msra.mxu0 0.0
        %2124 = vmatprep.subr.mxu0 0.0
        %2125 = vmatpush2.msra.mxu0 0.0
        %2126 = vmatprep.subr.mxu0 0.0
        %2127 = vmatpush2.msra.mxu0 0.0
        %2128 = vmatprep.subr.mxu0 0.0
        %2129 = vmatpush2.msra.mxu0 0.0
        %2130 = vmatprep.subr.mxu0 0.0
        %2131 = vmatpush2.msra.mxu0 0.0
        %2132 = vmatprep.subr.mxu0 0.0
        %2133 = vmatpush2.msra.mxu0 0.0
        %2134 = vmatprep.subr.mxu0 0.0
        %2135 = vmatpush2.msra.mxu0 0.0
        %2136 = vmatprep.subr.mxu0 0.0
        %2137 = vmatpush2.msra.mxu0 0.0
        %2138 = vmatprep.subr.mxu0 0.0
        %2139 = vmatpush2.msra.mxu0 0.0
        %2140 = vmatprep.subr.mxu0 0.0
        %2141 = vmatpush2.msra.mxu0 0.0
        %2142 = vmatprep.subr.mxu0 0.0
        %2143 = vmatpush2.msra.mxu0 0.0
        %2144 = vmatprep.subr.mxu0 0.0
        %2145 = vmatpush2.msra.mxu0 0.0
        %2146 = vmatprep.mubr.f32.mxu0 0.0
        %2147 = vmatmul.mubr.f32.gmra.mxu0 %v2080
        %v2148 = vpop.f32.mrf.mxu0
        %v2149 = vadd.f32 %v2078, %v2148
        %v2150 = vpop.f32.mrf.mxu0
        %2151 = vdwg.mxu0
        %v2152 = vlaneseq
        %v2153 = vshrl.u32 %v2152, 7
        %v2154 = vsub.s32 1, %v2153
        %v2155 = vrot.slane %v2057, %v2154
        %2156 = vmatprep.subr.mxu0 0.0
        %2157 = vmatpush1.msra.mxu0 0.0
        %2158 = vmatprep.subr.mxu0 0.0
        %2159 = vmatpush1.msra.mxu0 0.0
        %2160 = vmatprep.subr.mxu0 0.0
        %2161 = vmatpush1.msra.mxu0 0.0
        %2162 = vmatprep.subr.mxu0 0.0
        %2163 = vmatpush1.msra.mxu0 0.0
        %2164 = vmatprep.subr.mxu0 0.0
        %2165 = vmatpush1.msra.mxu0 0.0
        %2166 = vmatprep.subr.mxu0 0.0
        %2167 = vmatpush1.msra.mxu0 0.0
        %2168 = vmatprep.subr.mxu0 0.0
        %2169 = vmatpush1.msra.mxu0 0.0
        %2170 = vmatprep.subr.mxu0 0.0
        %2171 = vmatpush1.msra.mxu0 0.0
        %2172 = vmatprep.subr.mxu0 0.0
        %2173 = vmatpush1.msra.mxu0 0.0
        %2174 = vmatprep.subr.mxu0 0.0
        %2175 = vmatpush1.msra.mxu0 0.0
        %2176 = vmatprep.subr.mxu0 0.0
        %2177 = vmatpush1.msra.mxu0 0.0
        %2178 = vmatprep.subr.mxu0 0.0
        %2179 = vmatpush1.msra.mxu0 0.0
        %2180 = vmatprep.subr.mxu0 0.0
        %2181 = vmatpush1.msra.mxu0 %v2045
        %2182 = vmatprep.subr.mxu0 0.0
        %2183 = vmatpush1.msra.mxu0 %v2044
        %2184 = vmatprep.subr.mxu0 0.0
        %2185 = vmatpush1.msra.mxu0 %v2043
        %2186 = vmatprep.subr.mxu0 0.0
        %2187 = vmatpush1.msra.mxu0 %v2042
        %2188 = vmatprep.subr.mxu0 0.0
        %2189 = vmatpush2.msra.mxu0 0.0
        %2190 = vmatprep.subr.mxu0 0.0
        %2191 = vmatpush2.msra.mxu0 0.0
        %2192 = vmatprep.subr.mxu0 0.0
        %2193 = vmatpush2.msra.mxu0 0.0
        %2194 = vmatprep.subr.mxu0 0.0
        %2195 = vmatpush2.msra.mxu0 0.0
        %2196 = vmatprep.subr.mxu0 0.0
        %2197 = vmatpush2.msra.mxu0 0.0
        %2198 = vmatprep.subr.mxu0 0.0
        %2199 = vmatpush2.msra.mxu0 0.0
        %2200 = vmatprep.subr.mxu0 0.0
        %2201 = vmatpush2.msra.mxu0 0.0
        %2202 = vmatprep.subr.mxu0 0.0
        %2203 = vmatpush2.msra.mxu0 0.0
        %2204 = vmatprep.subr.mxu0 0.0
        %2205 = vmatpush2.msra.mxu0 0.0
        %2206 = vmatprep.subr.mxu0 0.0
        %2207 = vmatpush2.msra.mxu0 0.0
        %2208 = vmatprep.subr.mxu0 0.0
        %2209 = vmatpush2.msra.mxu0 0.0
        %2210 = vmatprep.subr.mxu0 0.0
        %2211 = vmatpush2.msra.mxu0 0.0
        %2212 = vmatprep.subr.mxu0 0.0
        %2213 = vmatpush2.msra.mxu0 0.0
        %2214 = vmatprep.subr.mxu0 0.0
        %2215 = vmatpush2.msra.mxu0 0.0
        %2216 = vmatprep.subr.mxu0 0.0
        %2217 = vmatpush2.msra.mxu0 0.0
        %2218 = vmatprep.subr.mxu0 0.0
        %2219 = vmatpush2.msra.mxu0 0.0
        %2220 = vmatprep.mubr.f32.mxu0 0.0
        %2221 = vmatmul.mubr.f32.gmra.mxu0 %v2080
        %v2222 = vpop.f32.mrf.mxu0
        %v2223 = vadd.f32 %v2155, %v2222
        %v2224 = vpop.f32.mrf.mxu0
        %2225 = vdwg.mxu0
        %v2226 = vlaneseq
        %v2227 = vshrl.u32 %v2226, 7
        %v2228 = vsub.s32 2, %v2227
        %v2229 = vrot.slane %v2057, %v2228
        %2230 = vmatprep.subr.mxu0 0.0
        %2231 = vmatpush1.msra.mxu0 0.0
        %2232 = vmatprep.subr.mxu0 0.0
        %2233 = vmatpush1.msra.mxu0 0.0
        %2234 = vmatprep.subr.mxu0 0.0
        %2235 = vmatpush1.msra.mxu0 0.0
        %2236 = vmatprep.subr.mxu0 0.0
        %2237 = vmatpush1.msra.mxu0 0.0
        %2238 = vmatprep.subr.mxu0 0.0
        %2239 = vmatpush1.msra.mxu0 0.0
        %2240 = vmatprep.subr.mxu0 0.0
        %2241 = vmatpush1.msra.mxu0 0.0
        %2242 = vmatprep.subr.mxu0 0.0
        %2243 = vmatpush1.msra.mxu0 0.0
        %2244 = vmatprep.subr.mxu0 0.0
        %2245 = vmatpush1.msra.mxu0 0.0
        %2246 = vmatprep.subr.mxu0 0.0
        %2247 = vmatpush1.msra.mxu0 0.0
        %2248 = vmatprep.subr.mxu0 0.0
        %2249 = vmatpush1.msra.mxu0 0.0
        %2250 = vmatprep.subr.mxu0 0.0
        %2251 = vmatpush1.msra.mxu0 0.0
        %2252 = vmatprep.subr.mxu0 0.0
        %2253 = vmatpush1.msra.mxu0 0.0
        %2254 = vmatprep.subr.mxu0 0.0
        %2255 = vmatpush1.msra.mxu0 %v2050
        %2256 = vmatprep.subr.mxu0 0.0
        %2257 = vmatpush1.msra.mxu0 %v2049
        %2258 = vmatprep.subr.mxu0 0.0
        %2259 = vmatpush1.msra.mxu0 %v2048
        %2260 = vmatprep.subr.mxu0 0.0
        %2261 = vmatpush1.msra.mxu0 %v2047
        %2262 = vmatprep.subr.mxu0 0.0
        %2263 = vmatpush2.msra.mxu0 0.0
        %2264 = vmatprep.subr.mxu0 0.0
        %2265 = vmatpush2.msra.mxu0 0.0
        %2266 = vmatprep.subr.mxu0 0.0
        %2267 = vmatpush2.msra.mxu0 0.0
        %2268 = vmatprep.subr.mxu0 0.0
        %2269 = vmatpush2.msra.mxu0 0.0
        %2270 = vmatprep.subr.mxu0 0.0
        %2271 = vmatpush2.msra.mxu0 0.0
        %2272 = vmatprep.subr.mxu0 0.0
        %2273 = vmatpush2.msra.mxu0 0.0
        %2274 = vmatprep.subr.mxu0 0.0
        %2275 = vmatpush2.msra.mxu0 0.0
        %2276 = vmatprep.subr.mxu0 0.0
        %2277 = vmatpush2.msra.mxu0 0.0
        %2278 = vmatprep.subr.mxu0 0.0
        %2279 = vmatpush2.msra.mxu0 0.0
        %2280 = vmatprep.subr.mxu0 0.0
        %2281 = vmatpush2.msra.mxu0 0.0
        %2282 = vmatprep.subr.mxu0 0.0
        %2283 = vmatpush2.msra.mxu0 0.0
        %2284 = vmatprep.subr.mxu0 0.0
        %2285 = vmatpush2.msra.mxu0 0.0
        %2286 = vmatprep.subr.mxu0 0.0
        %2287 = vmatpush2.msra.mxu0 0.0
        %2288 = vmatprep.subr.mxu0 0.0
        %2289 = vmatpush2.msra.mxu0 0.0
        %2290 = vmatprep.subr.mxu0 0.0
        %2291 = vmatpush2.msra.mxu0 0.0
        %2292 = vmatprep.subr.mxu0 0.0
        %2293 = vmatpush2.msra.mxu0 0.0
        %2294 = vmatprep.mubr.f32.mxu0 0.0
        %2295 = vmatmul.mubr.f32.gmra.mxu0 %v2080
        %v2296 = vpop.f32.mrf.mxu0
        %v2297 = vadd.f32 %v2229, %v2296
        %v2298 = vpop.f32.mrf.mxu0
        %2299 = vdwg.mxu0
        %2301 = vrot.lane.b32.xlu0 %v2149, 120
        %v2302 = vpop.permute.xlu0 %2301
        %2303 = vrot.lane.b32.xlu0 %v2149, 112
        %v2304 = vpop.permute.xlu0 %2303
        %2305 = vrot.lane.b32.xlu0 %v2149, 104
        %v2306 = vpop.permute.xlu0 %2305
        %2308 = vrot.lane.b32.xlu0 %v2223, 120
        %v2309 = vpop.permute.xlu0 %2308
        %2310 = vrot.lane.b32.xlu0 %v2223, 112
        %v2311 = vpop.permute.xlu0 %2310
        %2312 = vrot.lane.b32.xlu0 %v2223, 104
        %v2313 = vpop.permute.xlu0 %2312
        %2315 = vrot.lane.b32.xlu0 %v2297, 120
        %v2316 = vpop.permute.xlu0 %2315
        %2318 = vrot.lane.b32.xlu0 %v2297, 112
        %v2319 = vpop.permute.xlu0 %2318
        %2321 = vrot.lane.b32.xlu0 %v2297, 104
        %v2322 = vpop.permute.xlu0 %2321
        %v2324 = vsel %vm735, %v2149, 0
        %v2326 = vsel %vm735, %v2223, 0
        %2328 = vmatprep.subr.mxu0 0.0
        %2329 = vmatpush1.xpose.msra.mxu0 0.0
        %2330 = vmatprep.subr.mxu0 0.0
        %2331 = vmatpush1.xpose.msra.mxu0 0.0
        %2332 = vmatprep.subr.mxu0 0.0
        %2333 = vmatpush1.xpose.msra.mxu0 0.0
        %2334 = vmatprep.subr.mxu0 0.0
        %2335 = vmatpush1.xpose.msra.mxu0 0.0
        %2336 = vmatprep.subr.mxu0 0.0
        %2337 = vmatpush1.xpose.msra.mxu0 0.0
        %2338 = vmatprep.subr.mxu0 0.0
        %2339 = vmatpush1.xpose.msra.mxu0 0.0
        %2340 = vmatprep.subr.mxu0 0.0
        %2341 = vmatpush1.xpose.msra.mxu0 0.0
        %2342 = vmatprep.subr.mxu0 0.0
        %2343 = vmatpush1.xpose.msra.mxu0 0.0
        %2344 = vmatprep.subr.mxu0 0.0
        %2345 = vmatpush1.xpose.msra.mxu0 0.0
        %2346 = vmatprep.subr.mxu0 0.0
        %2347 = vmatpush1.xpose.msra.mxu0 0.0
        %2348 = vmatprep.subr.mxu0 0.0
        %2349 = vmatpush1.xpose.msra.mxu0 0.0
        %2350 = vmatprep.subr.mxu0 0.0
        %2351 = vmatpush1.xpose.msra.mxu0 0.0
        %2352 = vmatprep.subr.mxu0 0.0
        %2353 = vmatpush1.xpose.msra.mxu0 0.0
        %2354 = vmatprep.subr.mxu0 0.0
        %2355 = vmatpush1.xpose.msra.mxu0 0.0
        %2356 = vmatprep.subr.mxu0 0.0
        %2357 = vmatpush1.xpose.msra.mxu0 0.0
        %2358 = vmatprep.subr.mxu0 0.0
        %2359 = vmatpush1.xpose.msra.mxu0 %v2326
        %2360 = vmatprep.subr.mxu0 0.0
        %2361 = vmatpush2.xpose.msra.mxu0 0.0
        %2362 = vmatprep.subr.mxu0 0.0
        %2363 = vmatpush2.xpose.msra.mxu0 0.0
        %2364 = vmatprep.subr.mxu0 0.0
        %2365 = vmatpush2.xpose.msra.mxu0 0.0
        %2366 = vmatprep.subr.mxu0 0.0
        %2367 = vmatpush2.xpose.msra.mxu0 0.0
        %2368 = vmatprep.subr.mxu0 0.0
        %2369 = vmatpush2.xpose.msra.mxu0 0.0
        %2370 = vmatprep.subr.mxu0 0.0
        %2371 = vmatpush2.xpose.msra.mxu0 0.0
        %2372 = vmatprep.subr.mxu0 0.0
        %2373 = vmatpush2.xpose.msra.mxu0 0.0
        %2374 = vmatprep.subr.mxu0 0.0
        %2375 = vmatpush2.xpose.msra.mxu0 0.0
        %2376 = vmatprep.subr.mxu0 0.0
        %2377 = vmatpush2.xpose.msra.mxu0 0.0
        %2378 = vmatprep.subr.mxu0 0.0
        %2379 = vmatpush2.xpose.msra.mxu0 0.0
        %2380 = vmatprep.subr.mxu0 0.0
        %2381 = vmatpush2.xpose.msra.mxu0 0.0
        %2382 = vmatprep.subr.mxu0 0.0
        %2383 = vmatpush2.xpose.msra.mxu0 0.0
        %2384 = vmatprep.subr.mxu0 0.0
        %2385 = vmatpush2.xpose.msra.mxu0 0.0
        %2386 = vmatprep.subr.mxu0 0.0
        %2387 = vmatpush2.xpose.msra.mxu0 0.0
        %2388 = vmatprep.subr.mxu0 0.0
        %2389 = vmatpush2.xpose.msra.mxu0 0.0
        %2390 = vmatprep.subr.mxu0 0.0
        %2391 = vmatpush2.xpose.msra.mxu0 0.0
        %2392 = vmatprep.mubr.f32.mxu0 0.0
        %2393 = vmatmul.mubr.f32.gmra.mxu0 %v2324
        %v2394 = vpop.f32.mrf.mxu0
        %v2395 = vadd.f32 0.0, %v2394
        %v2396 = vpop.f32.mrf.mxu0
        %2397 = vdwg.mxu0
        %v2398 = vsel %vm735, %v2302, 0
        %v2400 = vsel %vm735, %v2309, 0
        %2402 = vmatprep.subr.mxu0 0.0
        %2403 = vmatpush1.xpose.msra.mxu0 0.0
        %2404 = vmatprep.subr.mxu0 0.0
        %2405 = vmatpush1.xpose.msra.mxu0 0.0
        %2406 = vmatprep.subr.mxu0 0.0
        %2407 = vmatpush1.xpose.msra.mxu0 0.0
        %2408 = vmatprep.subr.mxu0 0.0
        %2409 = vmatpush1.xpose.msra.mxu0 0.0
        %2410 = vmatprep.subr.mxu0 0.0
        %2411 = vmatpush1.xpose.msra.mxu0 0.0
        %2412 = vmatprep.subr.mxu0 0.0
        %2413 = vmatpush1.xpose.msra.mxu0 0.0
        %2414 = vmatprep.subr.mxu0 0.0
        %2415 = vmatpush1.xpose.msra.mxu0 0.0
        %2416 = vmatprep.subr.mxu0 0.0
        %2417 = vmatpush1.xpose.msra.mxu0 0.0
        %2418 = vmatprep.subr.mxu0 0.0
        %2419 = vmatpush1.xpose.msra.mxu0 0.0
        %2420 = vmatprep.subr.mxu0 0.0
        %2421 = vmatpush1.xpose.msra.mxu0 0.0
        %2422 = vmatprep.subr.mxu0 0.0
        %2423 = vmatpush1.xpose.msra.mxu0 0.0
        %2424 = vmatprep.subr.mxu0 0.0
        %2425 = vmatpush1.xpose.msra.mxu0 0.0
        %2426 = vmatprep.subr.mxu0 0.0
        %2427 = vmatpush1.xpose.msra.mxu0 0.0
        %2428 = vmatprep.subr.mxu0 0.0
        %2429 = vmatpush1.xpose.msra.mxu0 0.0
        %2430 = vmatprep.subr.mxu0 0.0
        %2431 = vmatpush1.xpose.msra.mxu0 0.0
        %2432 = vmatprep.subr.mxu0 0.0
        %2433 = vmatpush1.xpose.msra.mxu0 %v2400
        %2434 = vmatprep.subr.mxu0 0.0
        %2435 = vmatpush2.xpose.msra.mxu0 0.0
        %2436 = vmatprep.subr.mxu0 0.0
        %2437 = vmatpush2.xpose.msra.mxu0 0.0
        %2438 = vmatprep.subr.mxu0 0.0
        %2439 = vmatpush2.xpose.msra.mxu0 0.0
        %2440 = vmatprep.subr.mxu0 0.0
        %2441 = vmatpush2.xpose.msra.mxu0 0.0
        %2442 = vmatprep.subr.mxu0 0.0
        %2443 = vmatpush2.xpose.msra.mxu0 0.0
        %2444 = vmatprep.subr.mxu0 0.0
        %2445 = vmatpush2.xpose.msra.mxu0 0.0
        %2446 = vmatprep.subr.mxu0 0.0
        %2447 = vmatpush2.xpose.msra.mxu0 0.0
        %2448 = vmatprep.subr.mxu0 0.0
        %2449 = vmatpush2.xpose.msra.mxu0 0.0
        %2450 = vmatprep.subr.mxu0 0.0
        %2451 = vmatpush2.xpose.msra.mxu0 0.0
        %2452 = vmatprep.subr.mxu0 0.0
        %2453 = vmatpush2.xpose.msra.mxu0 0.0
        %2454 = vmatprep.subr.mxu0 0.0
        %2455 = vmatpush2.xpose.msra.mxu0 0.0
        %2456 = vmatprep.subr.mxu0 0.0
        %2457 = vmatpush2.xpose.msra.mxu0 0.0
        %2458 = vmatprep.subr.mxu0 0.0
        %2459 = vmatpush2.xpose.msra.mxu0 0.0
        %2460 = vmatprep.subr.mxu0 0.0
        %2461 = vmatpush2.xpose.msra.mxu0 0.0
        %2462 = vmatprep.subr.mxu0 0.0
        %2463 = vmatpush2.xpose.msra.mxu0 0.0
        %2464 = vmatprep.subr.mxu0 0.0
        %2465 = vmatpush2.xpose.msra.mxu0 0.0
        %2466 = vmatprep.mubr.f32.mxu0 0.0
        %2467 = vmatmul.mubr.f32.gmra.mxu0 %v2398
        %v2468 = vpop.f32.mrf.mxu0
        %v2469 = vadd.f32 0.0, %v2468
        %v2470 = vpop.f32.mrf.mxu0
        %2471 = vdwg.mxu0
        %v2472 = vsel %vm735, %v2304, 0
        %v2474 = vsel %vm735, %v2311, 0
        %2476 = vmatprep.subr.mxu0 0.0
        %2477 = vmatpush1.xpose.msra.mxu0 0.0
        %2478 = vmatprep.subr.mxu0 0.0
        %2479 = vmatpush1.xpose.msra.mxu0 0.0
        %2480 = vmatprep.subr.mxu0 0.0
        %2481 = vmatpush1.xpose.msra.mxu0 0.0
        %2482 = vmatprep.subr.mxu0 0.0
        %2483 = vmatpush1.xpose.msra.mxu0 0.0
        %2484 = vmatprep.subr.mxu0 0.0
        %2485 = vmatpush1.xpose.msra.mxu0 0.0
        %2486 = vmatprep.subr.mxu0 0.0
        %2487 = vmatpush1.xpose.msra.mxu0 0.0
        %2488 = vmatprep.subr.mxu0 0.0
        %2489 = vmatpush1.xpose.msra.mxu0 0.0
        %2490 = vmatprep.subr.mxu0 0.0
        %2491 = vmatpush1.xpose.msra.mxu0 0.0
        %2492 = vmatprep.subr.mxu0 0.0
        %2493 = vmatpush1.xpose.msra.mxu0 0.0
        %2494 = vmatprep.subr.mxu0 0.0
        %2495 = vmatpush1.xpose.msra.mxu0 0.0
        %2496 = vmatprep.subr.mxu0 0.0
        %2497 = vmatpush1.xpose.msra.mxu0 0.0
        %2498 = vmatprep.subr.mxu0 0.0
        %2499 = vmatpush1.xpose.msra.mxu0 0.0
        %2500 = vmatprep.subr.mxu0 0.0
        %2501 = vmatpush1.xpose.msra.mxu0 0.0
        %2502 = vmatprep.subr.mxu0 0.0
        %2503 = vmatpush1.xpose.msra.mxu0 0.0
        %2504 = vmatprep.subr.mxu0 0.0
        %2505 = vmatpush1.xpose.msra.mxu0 0.0
        %2506 = vmatprep.subr.mxu0 0.0
        %2507 = vmatpush1.xpose.msra.mxu0 %v2474
        %2508 = vmatprep.subr.mxu0 0.0
        %2509 = vmatpush2.xpose.msra.mxu0 0.0
        %2510 = vmatprep.subr.mxu0 0.0
        %2511 = vmatpush2.xpose.msra.mxu0 0.0
        %2512 = vmatprep.subr.mxu0 0.0
        %2513 = vmatpush2.xpose.msra.mxu0 0.0
        %2514 = vmatprep.subr.mxu0 0.0
        %2515 = vmatpush2.xpose.msra.mxu0 0.0
        %2516 = vmatprep.subr.mxu0 0.0
        %2517 = vmatpush2.xpose.msra.mxu0 0.0
        %2518 = vmatprep.subr.mxu0 0.0
        %2519 = vmatpush2.xpose.msra.mxu0 0.0
        %2520 = vmatprep.subr.mxu0 0.0
        %2521 = vmatpush2.xpose.msra.mxu0 0.0
        %2522 = vmatprep.subr.mxu0 0.0
        %2523 = vmatpush2.xpose.msra.mxu0 0.0
        %2524 = vmatprep.subr.mxu0 0.0
        %2525 = vmatpush2.xpose.msra.mxu0 0.0
        %2526 = vmatprep.subr.mxu0 0.0
        %2527 = vmatpush2.xpose.msra.mxu0 0.0
        %2528 = vmatprep.subr.mxu0 0.0
        %2529 = vmatpush2.xpose.msra.mxu0 0.0
        %2530 = vmatprep.subr.mxu0 0.0
        %2531 = vmatpush2.xpose.msra.mxu0 0.0
        %2532 = vmatprep.subr.mxu0 0.0
        %2533 = vmatpush2.xpose.msra.mxu0 0.0
        %2534 = vmatprep.subr.mxu0 0.0
        %2535 = vmatpush2.xpose.msra.mxu0 0.0
        %2536 = vmatprep.subr.mxu0 0.0
        %2537 = vmatpush2.xpose.msra.mxu0 0.0
        %2538 = vmatprep.subr.mxu0 0.0
        %2539 = vmatpush2.xpose.msra.mxu0 0.0
        %2540 = vmatprep.mubr.f32.mxu0 0.0
        %2541 = vmatmul.mubr.f32.gmra.mxu0 %v2472
        %v2542 = vpop.f32.mrf.mxu0
        %v2543 = vadd.f32 0.0, %v2542
        %v2544 = vpop.f32.mrf.mxu0
        %2545 = vdwg.mxu0
        %v2546 = vsel %vm735, %v2306, 0
        %v2548 = vsel %vm735, %v2313, 0
        %2550 = vmatprep.subr.mxu0 0.0
        %2551 = vmatpush1.xpose.msra.mxu0 0.0
        %2552 = vmatprep.subr.mxu0 0.0
        %2553 = vmatpush1.xpose.msra.mxu0 0.0
        %2554 = vmatprep.subr.mxu0 0.0
        %2555 = vmatpush1.xpose.msra.mxu0 0.0
        %2556 = vmatprep.subr.mxu0 0.0
        %2557 = vmatpush1.xpose.msra.mxu0 0.0
        %2558 = vmatprep.subr.mxu0 0.0
        %2559 = vmatpush1.xpose.msra.mxu0 0.0
        %2560 = vmatprep.subr.mxu0 0.0
        %2561 = vmatpush1.xpose.msra.mxu0 0.0
        %2562 = vmatprep.subr.mxu0 0.0
        %2563 = vmatpush1.xpose.msra.mxu0 0.0
        %2564 = vmatprep.subr.mxu0 0.0
        %2565 = vmatpush1.xpose.msra.mxu0 0.0
        %2566 = vmatprep.subr.mxu0 0.0
        %2567 = vmatpush1.xpose.msra.mxu0 0.0
        %2568 = vmatprep.subr.mxu0 0.0
        %2569 = vmatpush1.xpose.msra.mxu0 0.0
        %2570 = vmatprep.subr.mxu0 0.0
        %2571 = vmatpush1.xpose.msra.mxu0 0.0
        %2572 = vmatprep.subr.mxu0 0.0
        %2573 = vmatpush1.xpose.msra.mxu0 0.0
        %2574 = vmatprep.subr.mxu0 0.0
        %2575 = vmatpush1.xpose.msra.mxu0 0.0
        %2576 = vmatprep.subr.mxu0 0.0
        %2577 = vmatpush1.xpose.msra.mxu0 0.0
        %2578 = vmatprep.subr.mxu0 0.0
        %2579 = vmatpush1.xpose.msra.mxu0 0.0
        %2580 = vmatprep.subr.mxu0 0.0
        %2581 = vmatpush1.xpose.msra.mxu0 %v2548
        %2582 = vmatprep.subr.mxu0 0.0
        %2583 = vmatpush2.xpose.msra.mxu0 0.0
        %2584 = vmatprep.subr.mxu0 0.0
        %2585 = vmatpush2.xpose.msra.mxu0 0.0
        %2586 = vmatprep.subr.mxu0 0.0
        %2587 = vmatpush2.xpose.msra.mxu0 0.0
        %2588 = vmatprep.subr.mxu0 0.0
        %2589 = vmatpush2.xpose.msra.mxu0 0.0
        %2590 = vmatprep.subr.mxu0 0.0
        %2591 = vmatpush2.xpose.msra.mxu0 0.0
        %2592 = vmatprep.subr.mxu0 0.0
        %2593 = vmatpush2.xpose.msra.mxu0 0.0
        %2594 = vmatprep.subr.mxu0 0.0
        %2595 = vmatpush2.xpose.msra.mxu0 0.0
        %2596 = vmatprep.subr.mxu0 0.0
        %2597 = vmatpush2.xpose.msra.mxu0 0.0
        %2598 = vmatprep.subr.mxu0 0.0
        %2599 = vmatpush2.xpose.msra.mxu0 0.0
        %2600 = vmatprep.subr.mxu0 0.0
        %2601 = vmatpush2.xpose.msra.mxu0 0.0
        %2602 = vmatprep.subr.mxu0 0.0
        %2603 = vmatpush2.xpose.msra.mxu0 0.0
        %2604 = vmatprep.subr.mxu0 0.0
        %2605 = vmatpush2.xpose.msra.mxu0 0.0
        %2606 = vmatprep.subr.mxu0 0.0
        %2607 = vmatpush2.xpose.msra.mxu0 0.0
        %2608 = vmatprep.subr.mxu0 0.0
        %2609 = vmatpush2.xpose.msra.mxu0 0.0
        %2610 = vmatprep.subr.mxu0 0.0
        %2611 = vmatpush2.xpose.msra.mxu0 0.0
        %2612 = vmatprep.subr.mxu0 0.0
        %2613 = vmatpush2.xpose.msra.mxu0 0.0
        %2614 = vmatprep.mubr.f32.mxu0 0.0
        %2615 = vmatmul.mubr.f32.gmra.mxu0 %v2546
        %v2616 = vpop.f32.mrf.mxu0
        %v2617 = vadd.f32 0.0, %v2616
        %v2618 = vpop.f32.mrf.mxu0
        %2619 = vdwg.mxu0
        %v2620 = vsel %vm735, %v2395, -inf
        %2621 = vmax.xlane.f32.xlu0 %v2620
        %v2622 = vpop.xlane.xlu0 %2621
        %v2623 = vsel %vm735, %v2469, -inf
        %2624 = vmax.xlane.f32.xlu0 %v2623
        %v2625 = vpop.xlane.xlu0 %2624
        %v2626 = vsel %vm735, %v2543, -inf
        %2627 = vmax.xlane.f32.xlu0 %v2626
        %v2628 = vpop.xlane.xlu0 %2627
        %v2629 = vsel %vm735, %v2617, -inf
        %2630 = vmax.xlane.f32.xlu0 %v2629
        %v2631 = vpop.xlane.xlu0 %2630
        %v2632 = vsub.f32 %v2395, %v2622
        %v2633 = vsub.f32 %v2469, %v2625
        %v2634 = vsub.f32 %v2543, %v2628
        %v2635 = vsub.f32 %v2617, %v2631
        %v2636 = vmul.f32 %v2632, 1.442695
        %v2637 = vpow.pop %v2636
        %v2638 = vmul.f32 %v2633, 1.442695
        %v2639 = vpow.pop %v2638
        %v2640 = vmul.f32 %v2634, 1.442695
        %v2641 = vpow.pop %v2640
        %v2642 = vmul.f32 %v2635, 1.442695
        %v2643 = vpow.pop %v2642
        %v2644 = vsel %vm735, %v2637, 0.0
        %2645 = vadd.xlane.f32.xlu0 %v2644
        %v2646 = vpop.xlane.xlu0 %2645
        %v2647 = vsel %vm735, %v2639, 0.0
        %2648 = vadd.xlane.f32.xlu0 %v2647
        %v2649 = vpop.xlane.xlu0 %2648
        %v2650 = vsel %vm735, %v2641, 0.0
        %2651 = vadd.xlane.f32.xlu0 %v2650
        %v2652 = vpop.xlane.xlu0 %2651
        %v2653 = vsel %vm735, %v2643, 0.0
        %2654 = vadd.xlane.f32.xlu0 %v2653
        %v2655 = vpop.xlane.xlu0 %2654
        %v2656 = vrcp.pop %v2646
        %v2657 = vrcp.pop %v2649
        %v2658 = vrcp.pop %v2652
        %v2659 = vrcp.pop %v2655
        %v2660 = vmul.f32 %v2637, %v2656
        %v2661 = vmul.f32 %v2639, %v2657
        %v2662 = vmul.f32 %v2641, %v2658
        %v2663 = vmul.f32 %v2643, %v2659
        %v2665 = vsel %vm735, %v2660, 0
        %2667 = vmatprep.subr.mxu0 0.0
        %2668 = vmatpush1.msra.mxu0 0.0
        %2669 = vmatprep.subr.mxu0 0.0
        %2670 = vmatpush1.msra.mxu0 0.0
        %2671 = vmatprep.subr.mxu0 0.0
        %2672 = vmatpush1.msra.mxu0 0.0
        %2673 = vmatprep.subr.mxu0 0.0
        %2674 = vmatpush1.msra.mxu0 0.0
        %2675 = vmatprep.subr.mxu0 0.0
        %2676 = vmatpush1.msra.mxu0 0.0
        %2677 = vmatprep.subr.mxu0 0.0
        %2678 = vmatpush1.msra.mxu0 0.0
        %2679 = vmatprep.subr.mxu0 0.0
        %2680 = vmatpush1.msra.mxu0 0.0
        %2681 = vmatprep.subr.mxu0 0.0
        %2682 = vmatpush1.msra.mxu0 0.0
        %2683 = vmatprep.subr.mxu0 0.0
        %2684 = vmatpush1.msra.mxu0 0.0
        %2685 = vmatprep.subr.mxu0 0.0
        %2686 = vmatpush1.msra.mxu0 0.0
        %2687 = vmatprep.subr.mxu0 0.0
        %2688 = vmatpush1.msra.mxu0 0.0
        %2689 = vmatprep.subr.mxu0 0.0
        %2690 = vmatpush1.msra.mxu0 0.0
        %2691 = vmatprep.subr.mxu0 0.0
        %2692 = vmatpush1.msra.mxu0 0.0
        %2693 = vmatprep.subr.mxu0 0.0
        %2694 = vmatpush1.msra.mxu0 0.0
        %2695 = vmatprep.subr.mxu0 0.0
        %2696 = vmatpush1.msra.mxu0 0.0
        %2697 = vmatprep.subr.mxu0 0.0
        %2698 = vmatpush1.msra.mxu0 %v2297
        %2699 = vmatprep.subr.mxu0 0.0
        %2700 = vmatpush2.msra.mxu0 0.0
        %2701 = vmatprep.subr.mxu0 0.0
        %2702 = vmatpush2.msra.mxu0 0.0
        %2703 = vmatprep.subr.mxu0 0.0
        %2704 = vmatpush2.msra.mxu0 0.0
        %2705 = vmatprep.subr.mxu0 0.0
        %2706 = vmatpush2.msra.mxu0 0.0
        %2707 = vmatprep.subr.mxu0 0.0
        %2708 = vmatpush2.msra.mxu0 0.0
        %2709 = vmatprep.subr.mxu0 0.0
        %2710 = vmatpush2.msra.mxu0 0.0
        %2711 = vmatprep.subr.mxu0 0.0
        %2712 = vmatpush2.msra.mxu0 0.0
        %2713 = vmatprep.subr.mxu0 0.0
        %2714 = vmatpush2.msra.mxu0 0.0
        %2715 = vmatprep.subr.mxu0 0.0
        %2716 = vmatpush2.msra.mxu0 0.0
        %2717 = vmatprep.subr.mxu0 0.0
        %2718 = vmatpush2.msra.mxu0 0.0
        %2719 = vmatprep.subr.mxu0 0.0
        %2720 = vmatpush2.msra.mxu0 0.0
        %2721 = vmatprep.subr.mxu0 0.0
        %2722 = vmatpush2.msra.mxu0 0.0
        %2723 = vmatprep.subr.mxu0 0.0
        %2724 = vmatpush2.msra.mxu0 0.0
        %2725 = vmatprep.subr.mxu0 0.0
        %2726 = vmatpush2.msra.mxu0 0.0
        %2727 = vmatprep.subr.mxu0 0.0
        %2728 = vmatpush2.msra.mxu0 0.0
        %2729 = vmatprep.subr.mxu0 0.0
        %2730 = vmatpush2.msra.mxu0 0.0
        %2731 = vmatprep.mubr.f32.mxu0 0.0
        %2732 = vmatmul.mubr.f32.gmra.mxu0 %v2665
        %v2733 = vpop.f32.mrf.mxu0
        %v2734 = vadd.f32 0.0, %v2733
        %v2735 = vpop.f32.mrf.mxu0
        %2736 = vdwg.mxu0
        %v2738 = vsel %vm735, %v2661, 0
        %2740 = vmatprep.subr.mxu0 0.0
        %2741 = vmatpush1.msra.mxu0 0.0
        %2742 = vmatprep.subr.mxu0 0.0
        %2743 = vmatpush1.msra.mxu0 0.0
        %2744 = vmatprep.subr.mxu0 0.0
        %2745 = vmatpush1.msra.mxu0 0.0
        %2746 = vmatprep.subr.mxu0 0.0
        %2747 = vmatpush1.msra.mxu0 0.0
        %2748 = vmatprep.subr.mxu0 0.0
        %2749 = vmatpush1.msra.mxu0 0.0
        %2750 = vmatprep.subr.mxu0 0.0
        %2751 = vmatpush1.msra.mxu0 0.0
        %2752 = vmatprep.subr.mxu0 0.0
        %2753 = vmatpush1.msra.mxu0 0.0
        %2754 = vmatprep.subr.mxu0 0.0
        %2755 = vmatpush1.msra.mxu0 0.0
        %2756 = vmatprep.subr.mxu0 0.0
        %2757 = vmatpush1.msra.mxu0 0.0
        %2758 = vmatprep.subr.mxu0 0.0
        %2759 = vmatpush1.msra.mxu0 0.0
        %2760 = vmatprep.subr.mxu0 0.0
        %2761 = vmatpush1.msra.mxu0 0.0
        %2762 = vmatprep.subr.mxu0 0.0
        %2763 = vmatpush1.msra.mxu0 0.0
        %2764 = vmatprep.subr.mxu0 0.0
        %2765 = vmatpush1.msra.mxu0 0.0
        %2766 = vmatprep.subr.mxu0 0.0
        %2767 = vmatpush1.msra.mxu0 0.0
        %2768 = vmatprep.subr.mxu0 0.0
        %2769 = vmatpush1.msra.mxu0 0.0
        %2770 = vmatprep.subr.mxu0 0.0
        %2771 = vmatpush1.msra.mxu0 %v2316
        %2772 = vmatprep.subr.mxu0 0.0
        %2773 = vmatpush2.msra.mxu0 0.0
        %2774 = vmatprep.subr.mxu0 0.0
        %2775 = vmatpush2.msra.mxu0 0.0
        %2776 = vmatprep.subr.mxu0 0.0
        %2777 = vmatpush2.msra.mxu0 0.0
        %2778 = vmatprep.subr.mxu0 0.0
        %2779 = vmatpush2.msra.mxu0 0.0
        %2780 = vmatprep.subr.mxu0 0.0
        %2781 = vmatpush2.msra.mxu0 0.0
        %2782 = vmatprep.subr.mxu0 0.0
        %2783 = vmatpush2.msra.mxu0 0.0
        %2784 = vmatprep.subr.mxu0 0.0
        %2785 = vmatpush2.msra.mxu0 0.0
        %2786 = vmatprep.subr.mxu0 0.0
        %2787 = vmatpush2.msra.mxu0 0.0
        %2788 = vmatprep.subr.mxu0 0.0
        %2789 = vmatpush2.msra.mxu0 0.0
        %2790 = vmatprep.subr.mxu0 0.0
        %2791 = vmatpush2.msra.mxu0 0.0
        %2792 = vmatprep.subr.mxu0 0.0
        %2793 = vmatpush2.msra.mxu0 0.0
        %2794 = vmatprep.subr.mxu0 0.0
        %2795 = vmatpush2.msra.mxu0 0.0
        %2796 = vmatprep.subr.mxu0 0.0
        %2797 = vmatpush2.msra.mxu0 0.0
        %2798 = vmatprep.subr.mxu0 0.0
        %2799 = vmatpush2.msra.mxu0 0.0
        %2800 = vmatprep.subr.mxu0 0.0
        %2801 = vmatpush2.msra.mxu0 0.0
        %2802 = vmatprep.subr.mxu0 0.0
        %2803 = vmatpush2.msra.mxu0 0.0
        %2804 = vmatprep.mubr.f32.mxu0 0.0
        %2805 = vmatmul.mubr.f32.gmra.mxu0 %v2738
        %v2806 = vpop.f32.mrf.mxu0
        %v2807 = vadd.f32 0.0, %v2806
        %v2808 = vpop.f32.mrf.mxu0
        %2809 = vdwg.mxu0
        %v2811 = vsel %vm735, %v2662, 0
        %2813 = vmatprep.subr.mxu0 0.0
        %2814 = vmatpush1.msra.mxu0 0.0
        %2815 = vmatprep.subr.mxu0 0.0
        %2816 = vmatpush1.msra.mxu0 0.0
        %2817 = vmatprep.subr.mxu0 0.0
        %2818 = vmatpush1.msra.mxu0 0.0
        %2819 = vmatprep.subr.mxu0 0.0
        %2820 = vmatpush1.msra.mxu0 0.0
        %2821 = vmatprep.subr.mxu0 0.0
        %2822 = vmatpush1.msra.mxu0 0.0
        %2823 = vmatprep.subr.mxu0 0.0
        %2824 = vmatpush1.msra.mxu0 0.0
        %2825 = vmatprep.subr.mxu0 0.0
        %2826 = vmatpush1.msra.mxu0 0.0
        %2827 = vmatprep.subr.mxu0 0.0
        %2828 = vmatpush1.msra.mxu0 0.0
        %2829 = vmatprep.subr.mxu0 0.0
        %2830 = vmatpush1.msra.mxu0 0.0
        %2831 = vmatprep.subr.mxu0 0.0
        %2832 = vmatpush1.msra.mxu0 0.0
        %2833 = vmatprep.subr.mxu0 0.0
        %2834 = vmatpush1.msra.mxu0 0.0
        %2835 = vmatprep.subr.mxu0 0.0
        %2836 = vmatpush1.msra.mxu0 0.0
        %2837 = vmatprep.subr.mxu0 0.0
        %2838 = vmatpush1.msra.mxu0 0.0
        %2839 = vmatprep.subr.mxu0 0.0
        %2840 = vmatpush1.msra.mxu0 0.0
        %2841 = vmatprep.subr.mxu0 0.0
        %2842 = vmatpush1.msra.mxu0 0.0
        %2843 = vmatprep.subr.mxu0 0.0
        %2844 = vmatpush1.msra.mxu0 %v2319
        %2845 = vmatprep.subr.mxu0 0.0
        %2846 = vmatpush2.msra.mxu0 0.0
        %2847 = vmatprep.subr.mxu0 0.0
        %2848 = vmatpush2.msra.mxu0 0.0
        %2849 = vmatprep.subr.mxu0 0.0
        %2850 = vmatpush2.msra.mxu0 0.0
        %2851 = vmatprep.subr.mxu0 0.0
        %2852 = vmatpush2.msra.mxu0 0.0
        %2853 = vmatprep.subr.mxu0 0.0
        %2854 = vmatpush2.msra.mxu0 0.0
        %2855 = vmatprep.subr.mxu0 0.0
        %2856 = vmatpush2.msra.mxu0 0.0
        %2857 = vmatprep.subr.mxu0 0.0
        %2858 = vmatpush2.msra.mxu0 0.0
        %2859 = vmatprep.subr.mxu0 0.0
        %2860 = vmatpush2.msra.mxu0 0.0
        %2861 = vmatprep.subr.mxu0 0.0
        %2862 = vmatpush2.msra.mxu0 0.0
        %2863 = vmatprep.subr.mxu0 0.0
        %2864 = vmatpush2.msra.mxu0 0.0
        %2865 = vmatprep.subr.mxu0 0.0
        %2866 = vmatpush2.msra.mxu0 0.0
        %2867 = vmatprep.subr.mxu0 0.0
        %2868 = vmatpush2.msra.mxu0 0.0
        %2869 = vmatprep.subr.mxu0 0.0
        %2870 = vmatpush2.msra.mxu0 0.0
        %2871 = vmatprep.subr.mxu0 0.0
        %2872 = vmatpush2.msra.mxu0 0.0
        %2873 = vmatprep.subr.mxu0 0.0
        %2874 = vmatpush2.msra.mxu0 0.0
        %2875 = vmatprep.subr.mxu0 0.0
        %2876 = vmatpush2.msra.mxu0 0.0
        %2877 = vmatprep.mubr.f32.mxu0 0.0
        %2878 = vmatmul.mubr.f32.gmra.mxu0 %v2811
        %v2879 = vpop.f32.mrf.mxu0
        %v2880 = vadd.f32 0.0, %v2879
        %v2881 = vpop.f32.mrf.mxu0
        %2882 = vdwg.mxu0
        %v2884 = vsel %vm735, %v2663, 0
        %2886 = vmatprep.subr.mxu0 0.0
        %2887 = vmatpush1.msra.mxu0 0.0
        %2888 = vmatprep.subr.mxu0 0.0
        %2889 = vmatpush1.msra.mxu0 0.0
        %2890 = vmatprep.subr.mxu0 0.0
        %2891 = vmatpush1.msra.mxu0 0.0
        %2892 = vmatprep.subr.mxu0 0.0
        %2893 = vmatpush1.msra.mxu0 0.0
        %2894 = vmatprep.subr.mxu0 0.0
        %2895 = vmatpush1.msra.mxu0 0.0
        %2896 = vmatprep.subr.mxu0 0.0
        %2897 = vmatpush1.msra.mxu0 0.0
        %2898 = vmatprep.subr.mxu0 0.0
        %2899 = vmatpush1.msra.mxu0 0.0
        %2900 = vmatprep.subr.mxu0 0.0
        %2901 = vmatpush1.msra.mxu0 0.0
        %2902 = vmatprep.subr.mxu0 0.0
        %2903 = vmatpush1.msra.mxu0 0.0
        %2904 = vmatprep.subr.mxu0 0.0
        %2905 = vmatpush1.msra.mxu0 0.0
        %2906 = vmatprep.subr.mxu0 0.0
        %2907 = vmatpush1.msra.mxu0 0.0
        %2908 = vmatprep.subr.mxu0 0.0
        %2909 = vmatpush1.msra.mxu0 0.0
        %2910 = vmatprep.subr.mxu0 0.0
        %2911 = vmatpush1.msra.mxu0 0.0
        %2912 = vmatprep.subr.mxu0 0.0
        %2913 = vmatpush1.msra.mxu0 0.0
        %2914 = vmatprep.subr.mxu0 0.0
        %2915 = vmatpush1.msra.mxu0 0.0
        %2916 = vmatprep.subr.mxu0 0.0
        %2917 = vmatpush1.msra.mxu0 %v2322
        %2918 = vmatprep.subr.mxu0 0.0
        %2919 = vmatpush2.msra.mxu0 0.0
        %2920 = vmatprep.subr.mxu0 0.0
        %2921 = vmatpush2.msra.mxu0 0.0
        %2922 = vmatprep.subr.mxu0 0.0
        %2923 = vmatpush2.msra.mxu0 0.0
        %2924 = vmatprep.subr.mxu0 0.0
        %2925 = vmatpush2.msra.mxu0 0.0
        %2926 = vmatprep.subr.mxu0 0.0
        %2927 = vmatpush2.msra.mxu0 0.0
        %2928 = vmatprep.subr.mxu0 0.0
        %2929 = vmatpush2.msra.mxu0 0.0
        %2930 = vmatprep.subr.mxu0 0.0
        %2931 = vmatpush2.msra.mxu0 0.0
        %2932 = vmatprep.subr.mxu0 0.0
        %2933 = vmatpush2.msra.mxu0 0.0
        %2934 = vmatprep.subr.mxu0 0.0
        %2935 = vmatpush2.msra.mxu0 0.0
        %2936 = vmatprep.subr.mxu0 0.0
        %2937 = vmatpush2.msra.mxu0 0.0
        %2938 = vmatprep.subr.mxu0 0.0
        %2939 = vmatpush2.msra.mxu0 0.0
        %2940 = vmatprep.subr.mxu0 0.0
        %2941 = vmatpush2.msra.mxu0 0.0
        %2942 = vmatprep.subr.mxu0 0.0
        %2943 = vmatpush2.msra.mxu0 0.0
        %2944 = vmatprep.subr.mxu0 0.0
        %2945 = vmatpush2.msra.mxu0 0.0
        %2946 = vmatprep.subr.mxu0 0.0
        %2947 = vmatpush2.msra.mxu0 0.0
        %2948 = vmatprep.subr.mxu0 0.0
        %2949 = vmatpush2.msra.mxu0 0.0
        %2950 = vmatprep.mubr.f32.mxu0 0.0
        %2951 = vmatmul.mubr.f32.gmra.mxu0 %v2884
        %v2952 = vpop.f32.mrf.mxu0
        %v2953 = vadd.f32 0.0, %v2952
        %v2954 = vpop.f32.mrf.mxu0
        %2955 = vdwg.mxu0
        %2957 = vrot.lane.b32.xlu0 %v2807, 8
        %v2958 = vpop.permute.xlu0 %2957
        %2961 = vrot.lane.b32.xlu0 %v2880, 16
        %v2962 = vpop.permute.xlu0 %2961
        %2965 = vrot.lane.b32.xlu0 %v2953, 24
        %v2966 = vpop.permute.xlu0 %2965
        %v2968 = vsel %vm735, %v2734, %v2958
        %v2969 = vsel %vm471, %v2968, %v2962
        %v2970 = vsel %vm1751, %v2969, %v2966
        %v2971 = vlaneseq
        %v2972 = vshrl.u32 %v2971, 7
        %v2973 = vsub.s32 3, %v2972
        %v2974 = vrot.slane %v2057, %v2973
        %v2976 = vsel %vm859, %v2970, 0
        %2978 = vmatprep.subr.mxu0 0.0
        %2979 = vmatpush1.msra.mxu0 0.0
        %2980 = vmatprep.subr.mxu0 0.0
        %2981 = vmatpush1.msra.mxu0 0.0
        %2982 = vmatprep.subr.mxu0 0.0
        %2983 = vmatpush1.msra.mxu0 0.0
        %2984 = vmatprep.subr.mxu0 0.0
        %2985 = vmatpush1.msra.mxu0 0.0
        %2986 = vmatprep.subr.mxu0 0.0
        %2987 = vmatpush1.msra.mxu0 0.0
        %2988 = vmatprep.subr.mxu0 0.0
        %2989 = vmatpush1.msra.mxu0 0.0
        %2990 = vmatprep.subr.mxu0 0.0
        %2991 = vmatpush1.msra.mxu0 0.0
        %2992 = vmatprep.subr.mxu0 0.0
        %2993 = vmatpush1.msra.mxu0 0.0
        %2994 = vmatprep.subr.mxu0 0.0
        %2995 = vmatpush1.msra.mxu0 0.0
        %2996 = vmatprep.subr.mxu0 0.0
        %2997 = vmatpush1.msra.mxu0 0.0
        %2998 = vmatprep.subr.mxu0 0.0
        %2999 = vmatpush1.msra.mxu0 0.0
        %3000 = vmatprep.subr.mxu0 0.0
        %3001 = vmatpush1.msra.mxu0 0.0
        %3002 = vmatprep.subr.mxu0 0.0
        %3003 = vmatpush1.msra.mxu0 %v2055
        %3004 = vmatprep.subr.mxu0 0.0
        %3005 = vmatpush1.msra.mxu0 %v2054
        %3006 = vmatprep.subr.mxu0 0.0
        %3007 = vmatpush1.msra.mxu0 %v2053
        %3008 = vmatprep.subr.mxu0 0.0
        %3009 = vmatpush1.msra.mxu0 %v2052
        %3010 = vmatprep.subr.mxu0 0.0
        %3011 = vmatpush2.msra.mxu0 0.0
        %3012 = vmatprep.subr.mxu0 0.0
        %3013 = vmatpush2.msra.mxu0 0.0
        %3014 = vmatprep.subr.mxu0 0.0
        %3015 = vmatpush2.msra.mxu0 0.0
        %3016 = vmatprep.subr.mxu0 0.0
        %3017 = vmatpush2.msra.mxu0 0.0
        %3018 = vmatprep.subr.mxu0 0.0
        %3019 = vmatpush2.msra.mxu0 0.0
        %3020 = vmatprep.subr.mxu0 0.0
        %3021 = vmatpush2.msra.mxu0 0.0
        %3022 = vmatprep.subr.mxu0 0.0
        %3023 = vmatpush2.msra.mxu0 0.0
        %3024 = vmatprep.subr.mxu0 0.0
        %3025 = vmatpush2.msra.mxu0 0.0
        %3026 = vmatprep.subr.mxu0 0.0
        %3027 = vmatpush2.msra.mxu0 0.0
        %3028 = vmatprep.subr.mxu0 0.0
        %3029 = vmatpush2.msra.mxu0 0.0
        %3030 = vmatprep.subr.mxu0 0.0
        %3031 = vmatpush2.msra.mxu0 0.0
        %3032 = vmatprep.subr.mxu0 0.0
        %3033 = vmatpush2.msra.mxu0 0.0
        %3034 = vmatprep.subr.mxu0 0.0
        %3035 = vmatpush2.msra.mxu0 0.0
        %3036 = vmatprep.subr.mxu0 0.0
        %3037 = vmatpush2.msra.mxu0 0.0
        %3038 = vmatprep.subr.mxu0 0.0
        %3039 = vmatpush2.msra.mxu0 0.0
        %3040 = vmatprep.subr.mxu0 0.0
        %3041 = vmatpush2.msra.mxu0 0.0
        %3042 = vmatprep.mubr.f32.mxu0 0.0
        %3043 = vmatmul.mubr.f32.gmra.mxu0 %v2976
        %v3044 = vpop.f32.mrf.mxu0
        %v3045 = vadd.f32 %v2974, %v3044
        %v3046 = vpop.f32.mrf.mxu0
        %3047 = vdwg.mxu0
        %v3048 = vadd.f32 %v2035, %v3045
        %v3049 = vsel %vm859, %v3048, 0.0
        %3050 = vadd.xlane.f32.xlu0 %v3049
        %v3051 = vpop.xlane.xlu0 %3050
        %v3052 = vmul.f32 %v3051, %v1834
        %v3053 = vsub.f32 %v3048, %v3052
        %v3054 = vmul.f32 %v3053, %v3053
        %v3055 = vsel %vm859, %v3054, 0.0
        %3056 = vadd.xlane.f32.xlu0 %v3055
        %v3057 = vpop.xlane.xlu0 %3056
        %v3058 = vmul.f32 %v3057, %v1834
        %v3059 = vadd.f32 %v3058, 1e-05
        %v3060 = vrsqrt.pop %v3059
        %v3061 = vmul.f32 %v3053, %v3060
        %v3062 = vlaneseq
        %v3063 = vshrl.u32 %v3062, 7
        %v3064 = vsub.s32 4, %v3063
        %v3065 = vrot.slane %v2057, %v3064
        %v3066 = vmul.f32 %v3061, %v3065
        %v3067 = vlaneseq
        %v3068 = vshrl.u32 %v3067, 7
        %v3069 = vsub.s32 5, %v3068
        %v3070 = vrot.slane %v2057, %v3069
        %v3071 = vadd.f32 %v3066, %v3070
        %v3073 = vlaneseq
        %v3074 = vshrl.u32 %v3073, 7
        %v3075 = vsub.s32 0, %v3074
        %v3076 = vrot.slane %v2074, %v3075
        %v3079 = vsel %vm859, %v3071, 0
        %3081 = vmatprep.subr.mxu0 0.0
        %3082 = vmatpush1.msra.mxu0 0.0
        %3083 = vmatprep.subr.mxu0 0.0
        %3084 = vmatpush1.msra.mxu0 0.0
        %3085 = vmatprep.subr.mxu0 0.0
        %3086 = vmatpush1.msra.mxu0 0.0
        %3087 = vmatprep.subr.mxu0 0.0
        %3088 = vmatpush1.msra.mxu0 0.0
        %3089 = vmatprep.subr.mxu0 0.0
        %3090 = vmatpush1.msra.mxu0 0.0
        %3091 = vmatprep.subr.mxu0 0.0
        %3092 = vmatpush1.msra.mxu0 0.0
        %3093 = vmatprep.subr.mxu0 0.0
        %3094 = vmatpush1.msra.mxu0 0.0
        %3095 = vmatprep.subr.mxu0 0.0
        %3096 = vmatpush1.msra.mxu0 0.0
        %3097 = vmatprep.subr.mxu0 0.0
        %3098 = vmatpush1.msra.mxu0 0.0
        %3099 = vmatprep.subr.mxu0 0.0
        %3100 = vmatpush1.msra.mxu0 0.0
        %3101 = vmatprep.subr.mxu0 0.0
        %3102 = vmatpush1.msra.mxu0 0.0
        %3103 = vmatprep.subr.mxu0 0.0
        %3104 = vmatpush1.msra.mxu0 0.0
        %3105 = vmatprep.subr.mxu0 0.0
        %3106 = vmatpush1.msra.mxu0 %v2063
        %3107 = vmatprep.subr.mxu0 0.0
        %3108 = vmatpush1.msra.mxu0 %v2062
        %3109 = vmatprep.subr.mxu0 0.0
        %3110 = vmatpush1.msra.mxu0 %v2061
        %3111 = vmatprep.subr.mxu0 0.0
        %3112 = vmatpush1.msra.mxu0 %v2060
        %3113 = vmatprep.subr.mxu0 0.0
        %3114 = vmatpush2.msra.mxu0 0.0
        %3115 = vmatprep.subr.mxu0 0.0
        %3116 = vmatpush2.msra.mxu0 0.0
        %3117 = vmatprep.subr.mxu0 0.0
        %3118 = vmatpush2.msra.mxu0 0.0
        %3119 = vmatprep.subr.mxu0 0.0
        %3120 = vmatpush2.msra.mxu0 0.0
        %3121 = vmatprep.subr.mxu0 0.0
        %3122 = vmatpush2.msra.mxu0 0.0
        %3123 = vmatprep.subr.mxu0 0.0
        %3124 = vmatpush2.msra.mxu0 0.0
        %3125 = vmatprep.subr.mxu0 0.0
        %3126 = vmatpush2.msra.mxu0 0.0
        %3127 = vmatprep.subr.mxu0 0.0
        %3128 = vmatpush2.msra.mxu0 0.0
        %3129 = vmatprep.subr.mxu0 0.0
        %3130 = vmatpush2.msra.mxu0 0.0
        %3131 = vmatprep.subr.mxu0 0.0
        %3132 = vmatpush2.msra.mxu0 0.0
        %3133 = vmatprep.subr.mxu0 0.0
        %3134 = vmatpush2.msra.mxu0 0.0
        %3135 = vmatprep.subr.mxu0 0.0
        %3136 = vmatpush2.msra.mxu0 0.0
        %3137 = vmatprep.subr.mxu0 0.0
        %3138 = vmatpush2.msra.mxu0 0.0
        %3139 = vmatprep.subr.mxu0 0.0
        %3140 = vmatpush2.msra.mxu0 0.0
        %3141 = vmatprep.subr.mxu0 0.0
        %3142 = vmatpush2.msra.mxu0 0.0
        %3143 = vmatprep.subr.mxu0 0.0
        %3144 = vmatpush2.msra.mxu0 0.0
        %3145 = vmatprep.mubr.f32.mxu0 0.0
        %3146 = vmatmul.mubr.f32.gmra.mxu0 %v3079
        %v3147 = vpop.f32.mrf.mxu0
        %v3148 = vadd.f32 %v3076, %v3147
        %v3149 = vpop.f32.mrf.mxu0
        %3150 = vdwg.mxu0
        %v3151 = vmax.f32 %v3148, 0.0
        %v3152 = vlaneseq
        %v3153 = vshrl.u32 %v3152, 7
        %v3154 = vsub.s32 6, %v3153
        %v3155 = vrot.slane %v2057, %v3154
        %v3157 = vsel %vm637, %v3151, 0
        %3159 = vmatprep.subr.mxu0 0.0
        %3160 = vmatpush1.msra.mxu0 0.0
        %3161 = vmatprep.subr.mxu0 0.0
        %3162 = vmatpush1.msra.mxu0 0.0
        %3163 = vmatprep.subr.mxu0 0.0
        %3164 = vmatpush1.msra.mxu0 0.0
        %3165 = vmatprep.subr.mxu0 0.0
        %3166 = vmatpush1.msra.mxu0 0.0
        %3167 = vmatprep.subr.mxu0 0.0
        %3168 = vmatpush1.msra.mxu0 0.0
        %3169 = vmatprep.subr.mxu0 0.0
        %3170 = vmatpush1.msra.mxu0 0.0
        %3171 = vmatprep.subr.mxu0 0.0
        %3172 = vmatpush1.msra.mxu0 0.0
        %3173 = vmatprep.subr.mxu0 0.0
        %3174 = vmatpush1.msra.mxu0 0.0
        %3175 = vmatprep.subr.mxu0 0.0
        %3176 = vmatpush1.msra.mxu0 %v2072
        %3177 = vmatprep.subr.mxu0 0.0
        %3178 = vmatpush1.msra.mxu0 %v2071
        %3179 = vmatprep.subr.mxu0 0.0
        %3180 = vmatpush1.msra.mxu0 %v2070
        %3181 = vmatprep.subr.mxu0 0.0
        %3182 = vmatpush1.msra.mxu0 %v2069
        %3183 = vmatprep.subr.mxu0 0.0
        %3184 = vmatpush1.msra.mxu0 %v2068
        %3185 = vmatprep.subr.mxu0 0.0
        %3186 = vmatpush1.msra.mxu0 %v2067
        %3187 = vmatprep.subr.mxu0 0.0
        %3188 = vmatpush1.msra.mxu0 %v2066
        %3189 = vmatprep.subr.mxu0 0.0
        %3190 = vmatpush1.msra.mxu0 %v2065
        %3191 = vmatprep.subr.mxu0 0.0
        %3192 = vmatpush2.msra.mxu0 0.0
        %3193 = vmatprep.subr.mxu0 0.0
        %3194 = vmatpush2.msra.mxu0 0.0
        %3195 = vmatprep.subr.mxu0 0.0
        %3196 = vmatpush2.msra.mxu0 0.0
        %3197 = vmatprep.subr.mxu0 0.0
        %3198 = vmatpush2.msra.mxu0 0.0
        %3199 = vmatprep.subr.mxu0 0.0
        %3200 = vmatpush2.msra.mxu0 0.0
        %3201 = vmatprep.subr.mxu0 0.0
        %3202 = vmatpush2.msra.mxu0 0.0
        %3203 = vmatprep.subr.mxu0 0.0
        %3204 = vmatpush2.msra.mxu0 0.0
        %3205 = vmatprep.subr.mxu0 0.0
        %3206 = vmatpush2.msra.mxu0 0.0
        %3207 = vmatprep.subr.mxu0 0.0
        %3208 = vmatpush2.msra.mxu0 0.0
        %3209 = vmatprep.subr.mxu0 0.0
        %3210 = vmatpush2.msra.mxu0 0.0
        %3211 = vmatprep.subr.mxu0 0.0
        %3212 = vmatpush2.msra.mxu0 0.0
        %3213 = vmatprep.subr.mxu0 0.0
        %3214 = vmatpush2.msra.mxu0 0.0
        %3215 = vmatprep.subr.mxu0 0.0
        %3216 = vmatpush2.msra.mxu0 0.0
        %3217 = vmatprep.subr.mxu0 0.0
        %3218 = vmatpush2.msra.mxu0 0.0
        %3219 = vmatprep.subr.mxu0 0.0
        %3220 = vmatpush2.msra.mxu0 0.0
        %3221 = vmatprep.subr.mxu0 0.0
        %3222 = vmatpush2.msra.mxu0 0.0
        %3223 = vmatprep.mubr.f32.mxu0 0.0
        %3224 = vmatmul.mubr.f32.gmra.mxu0 %v3157
        %v3225 = vpop.f32.mrf.mxu0
        %v3226 = vadd.f32 %v3155, %v3225
        %v3227 = vpop.f32.mrf.mxu0
        %3228 = vdwg.mxu0
        %v3229 = vadd.f32 %v3071, %v3226
        %v3230 = vsel %vm859, %v3229, 0.0
        %3231 = vadd.xlane.f32.xlu0 %v3230
        %v3232 = vpop.xlane.xlu0 %3231
        %v3233 = vmul.f32 %v3232, %v1834
        %v3234 = vsub.f32 %v3229, %v3233
        %v3235 = vmul.f32 %v3234, %v3234
        %v3236 = vsel %vm859, %v3235, 0.0
        %3237 = vadd.xlane.f32.xlu0 %v3236
        %v3238 = vpop.xlane.xlu0 %3237
        %v3239 = vmul.f32 %v3238, %v1834
        %v3240 = vadd.f32 %v3239, 1e-05
        %v3241 = vrsqrt.pop %v3240
        %v3242 = vmul.f32 %v3234, %v3241
        %v3243 = vlaneseq
        %v3244 = vshrl.u32 %v3243, 7
        %v3245 = vsub.s32 7, %v3244
        %v3246 = vrot.slane %v2057, %v3245
        %v3247 = vmul.f32 %v3242, %v3246
        %v3248 = vlaneseq
        %v3249 = vshrl.u32 %v3248, 7
        %v3250 = vsub.s32 0, %v3249
        %v3251 = vrot.slane %v2058, %v3250
        %v3252 = vadd.f32 %v3247, %v3251
        %v3253 = vld [vmem:[%s10] sm:$0x1]
        %v3254 = vld [vmem:[#allocation2] sm:$0x1]
        %3256 = vset.pattern.permute.xlu0 0
        %3257 = vperm.xlu0 %3256, %v3254
        %v3258 = vpop.permute.xlu0 %3257
        %v3260 = vlaneseq
        %v3261 = vshrl.u32 %v3260, 7
        %v3262 = vsub.s32 0, %v3261
        %v3263 = vrot.slane %v3258, %v3262
        %v3265 = vsel %vm859, %v3253, 0
        %v3268 = vsel %vm859, %v3252, 0
        %3270 = vmatprep.subr.mxu0 0.0
        %3271 = vmatpush1.xpose.msra.mxu0 0.0
        %3272 = vmatprep.subr.mxu0 0.0
        %3273 = vmatpush1.xpose.msra.mxu0 0.0
        %3274 = vmatprep.subr.mxu0 0.0
        %3275 = vmatpush1.xpose.msra.mxu0 0.0
        %3276 = vmatprep.subr.mxu0 0.0
        %3277 = vmatpush1.xpose.msra.mxu0 0.0
        %3278 = vmatprep.subr.mxu0 0.0
        %3279 = vmatpush1.xpose.msra.mxu0 0.0
        %3280 = vmatprep.subr.mxu0 0.0
        %3281 = vmatpush1.xpose.msra.mxu0 0.0
        %3282 = vmatprep.subr.mxu0 0.0
        %3283 = vmatpush1.xpose.msra.mxu0 0.0
        %3284 = vmatprep.subr.mxu0 0.0
        %3285 = vmatpush1.xpose.msra.mxu0 0.0
        %3286 = vmatprep.subr.mxu0 0.0
        %3287 = vmatpush1.xpose.msra.mxu0 0.0
        %3288 = vmatprep.subr.mxu0 0.0
        %3289 = vmatpush1.xpose.msra.mxu0 0.0
        %3290 = vmatprep.subr.mxu0 0.0
        %3291 = vmatpush1.xpose.msra.mxu0 0.0
        %3292 = vmatprep.subr.mxu0 0.0
        %3293 = vmatpush1.xpose.msra.mxu0 0.0
        %3294 = vmatprep.subr.mxu0 0.0
        %3295 = vmatpush1.xpose.msra.mxu0 0.0
        %3296 = vmatprep.subr.mxu0 0.0
        %3297 = vmatpush1.xpose.msra.mxu0 0.0
        %3298 = vmatprep.subr.mxu0 0.0
        %3299 = vmatpush1.xpose.msra.mxu0 0.0
        %3300 = vmatprep.subr.mxu0 0.0
        %3301 = vmatpush1.xpose.msra.mxu0 %v3268
        %3302 = vmatprep.subr.mxu0 0.0
        %3303 = vmatpush2.xpose.msra.mxu0 0.0
        %3304 = vmatprep.subr.mxu0 0.0
        %3305 = vmatpush2.xpose.msra.mxu0 0.0
        %3306 = vmatprep.subr.mxu0 0.0
        %3307 = vmatpush2.xpose.msra.mxu0 0.0
        %3308 = vmatprep.subr.mxu0 0.0
        %3309 = vmatpush2.xpose.msra.mxu0 0.0
        %3310 = vmatprep.subr.mxu0 0.0
        %3311 = vmatpush2.xpose.msra.mxu0 0.0
        %3312 = vmatprep.subr.mxu0 0.0
        %3313 = vmatpush2.xpose.msra.mxu0 0.0
        %3314 = vmatprep.subr.mxu0 0.0
        %3315 = vmatpush2.xpose.msra.mxu0 0.0
        %3316 = vmatprep.subr.mxu0 0.0
        %3317 = vmatpush2.xpose.msra.mxu0 0.0
        %3318 = vmatprep.subr.mxu0 0.0
        %3319 = vmatpush2.xpose.msra.mxu0 0.0
        %3320 = vmatprep.subr.mxu0 0.0
        %3321 = vmatpush2.xpose.msra.mxu0 0.0
        %3322 = vmatprep.subr.mxu0 0.0
        %3323 = vmatpush2.xpose.msra.mxu0 0.0
        %3324 = vmatprep.subr.mxu0 0.0
        %3325 = vmatpush2.xpose.msra.mxu0 0.0
        %3326 = vmatprep.subr.mxu0 0.0
        %3327 = vmatpush2.xpose.msra.mxu0 0.0
        %3328 = vmatprep.subr.mxu0 0.0
        %3329 = vmatpush2.xpose.msra.mxu0 0.0
        %3330 = vmatprep.subr.mxu0 0.0
        %3331 = vmatpush2.xpose.msra.mxu0 0.0
        %3332 = vmatprep.subr.mxu0 0.0
        %3333 = vmatpush2.xpose.msra.mxu0 0.0
        %3334 = vmatprep.mubr.f32.mxu0 0.0
        %3335 = vmatmul.mubr.f32.gmra.mxu0 %v3265
        %v3336 = vpop.f32.mrf.mxu0
        %v3337 = vadd.f32 %v3263, %v3336
        %v3338 = vpop.f32.mrf.mxu0
        %3339 = vdwg.mxu0
        %vm3340 = vcmask 57344
        %v3341 = vsel %vm3340, %v3337, -inf
        %3342 = vmax.xlane.f32.xlu0 %v3341
        %v3343 = vpop.xlane.xlu0 %3342
        %v3344 = vsub.f32 %v3337, %v3343
        %v3345 = vmul.f32 %v3344, 1.442695
        %v3346 = vpow.pop %v3345
        %v3347 = vsel %vm3340, %v3346, 0.0
        %3348 = vadd.xlane.f32.xlu0 %v3347
        %v3349 = vpop.xlane.xlu0 %3348
        %v3350 = vrcp.pop %v3349
        %v3351 = vmul.f32 %v3346, %v3350
        %3352 = vst.msk [vmem:[%s407] sm:$0x1] %vm3340, %v3351
        %s3353 = sand.u32 %s293, 1
        %s3354 = scalar_lea.sflag [#allocation4], %s3353
        %s3355 = sand.u32 %s293, 1
        %s3356 = scalar_lea.vmem [#allocation3], %s3355
        // Predicated region
        $region69: #{tpu_custom_call.1} parent=67 // pred_check
          %p3357 = pneg %p303
        $region70: #{tpu_custom_call.1} parent=67 // pred_check_branch
          %3359 = sbr.rel (%p3357) target = $region72
        $region71: #{tpu_custom_call.1} parent=67 // pred_region
          %s3361 = ssub.s32 16, 16
          %3362 = vsyncadd %s3354, %s3361
          %s3363 = smul.addr %s28, 16
          %s3364 = scalar_lea.hbm %s12, %s3363
          %s3366 = sshll.u32 %s3356, 4
          %s3367 = int_to_ptr.vmem [resolvable:$true] %s3366
          %3369 = dma.vmem_to_hbm [thread:$0]  %s3367, 16, %s3364, %s3354
        $region72: #{tpu_custom_call.1} parent=67 // pred_fallthru
          _
      $region68: #{tpu_custom_call.1} parent=5 // pred_fallthru
        _
      %p3370 = scmp.le.s32.totalorder 2, %s23
      // Predicated region
      $region73: #{tpu_custom_call.1} parent=5 // pred_check
        %p3371 = pneg %p3370
      $region74: #{tpu_custom_call.1} parent=5 // pred_check_branch
        %3373 = sbr.rel (%p3371) target = $region76
      $region75: #{tpu_custom_call.1} parent=5 // pred_region
        %s3374 = ssub.s32 %s23, 2
        // Predicated region
        $region77: #{tpu_custom_call.1} parent=75 // pred_check
          %p3375 = pneg %p309
        $region78: #{tpu_custom_call.1} parent=75 // pred_check_branch
          %3377 = sbr.rel (%p3375) target = $region80
        $region79: #{tpu_custom_call.1} parent=75 // pred_region
          %s3378 = sand.u32 %s294, 1
          %s3379 = scalar_lea.sflag [#allocation4], %s3378
          %s3380 = sand.u32 %s294, 1
          %s3381 = scalar_lea.vmem [#allocation3], %s3380
          %3382 = dma.done %s3379, 16
        $region80: #{tpu_custom_call.1} parent=75 // pred_fallthru
          _
      $region76: #{tpu_custom_call.1} parent=5 // pred_fallthru
        _
    $region6: #{tpu_custom_call.1} parent=1 // loop_footer
      %s27 = sadd.s32 1, %s23
    $region7: #{tpu_custom_call.1} parent=1 // loop_footer_branch
      %22 = sbr.rel target = $region3
    $region8: #{tpu_custom_call.1} parent=1 // loop_exit
      _
    %3383 = vsyncpa [#allocation4], 1
    %s3384 = scalar_lea.sflag [#allocation4], 1
    %3385 = vsyncpa %s3384, 1

</llo_original>
